<compile_context>
chip_gen: v7x
topology: tpu7x:2x2x1
jax: 0.10.0
libtpu: 0.0.40
codegen_flags: <defaults>
</compile_context>

<pallas_src>
import functools

import jax
import jax.numpy as jnp
from jax import lax
from jax.experimental import pallas as pl
from jax.experimental.pallas import tpu as pltpu

BN_EPS = 1e-5


# ------------------------------- Pallas kernels ----------------------------- #
def _conv1_kernel(xph_ref, w1_ref, *rest, nb, stride, ho, wo, proj):
    """Pass 1: conv1 (3x3, stride s) [+ 1x1 projection conv] as one
    K-concatenated MXU dot per image, plus per-grid-step partial BN
    statistics (sum, sum of squares).

    Conv biases are dropped: training-mode BatchNorm subtracts the batch mean,
    which cancels a per-channel bias exactly.
    """
    if proj:
        wsc_ref, y1_ref, ysc_ref, st_ref, taps_ref = rest
    else:
        y1_ref, st_ref, taps_ref = rest
    ss = stride * stride
    m = ho * wo
    cin = xph_ref.shape[-1]
    cout = y1_ref.shape[1]

    s1 = jnp.zeros((1, cout), jnp.float32)
    q1 = jnp.zeros((1, cout), jnp.float32)
    ssc = jnp.zeros((1, cout), jnp.float32)
    qsc = jnp.zeros((1, cout), jnp.float32)

    for i in range(nb):                          # nb is small (1-2 typically)
        # Assemble the 9 shifted windows into one (ho, wo, 9*cin) bf16 operand
        # with pure slice copies (no per-tap reshape, no f32 round-trip).
        for kh in range(3):
            for kw in range(3):
                p = (kh % stride) * stride + (kw % stride)
                dh, dw = kh // stride, kw // stride
                t = kh * 3 + kw
                taps_ref[:, :, t * cin:(t + 1) * cin] = (
                    xph_ref[i * ss + p, dh:dh + ho, dw:dw + wo, :])
        # Leading-dim collapse only (lane dim 9*cin untouched).
        a_op = taps_ref[...].reshape(m, 9 * cin)
        acc = jnp.dot(a_op, w1_ref[...], preferred_element_type=jnp.float32)
        s1 = s1 + jnp.sum(acc, axis=0, keepdims=True)
        q1 = q1 + jnp.sum(acc * acc, axis=0, keepdims=True)
        # Transpose on the XLU so the HBM store is lane-dense (cout, m).
        y1_ref[i] = jnp.transpose(acc).astype(y1_ref.dtype)
        if proj:
            # Centre tap (kh=kw=1) == the strided 1x1-conv input.
            center = a_op[:, 4 * cin:5 * cin]
            accs = jnp.dot(center, wsc_ref[...],
                           preferred_element_type=jnp.float32)
            ssc = ssc + jnp.sum(accs, axis=0, keepdims=True)
            qsc = qsc + jnp.sum(accs * accs, axis=0, keepdims=True)
            ysc_ref[i] = jnp.transpose(accs).astype(ysc_ref.dtype)

    st_ref[0, 0:1, :] = s1
    st_ref[0, 1:2, :] = q1
    if proj:
        st_ref[0, 2:3, :] = ssc
        st_ref[0, 3:4, :] = qsc


def _conv2_kernel(y1_ref, w2_ref, sc1_ref, sh1_ref, y2_ref, st_ref,
                  pad_ref, taps_ref, *, nb, ho, wo):
    """Pass 2: BN1 (folded scale/shift) + ReLU fused with conv2 (3x3 stride 1).

    o1 = relu(bn1(y1)) only ever lives in a bf16 VMEM halo scratch (never
    written to HBM); conv2 reads its 9 taps from that scratch and does a
    single K=9*cout dot per image. Emits partial BN2 statistics.
    """
    m = ho * wo
    cout = y2_ref.shape[1]
    sc1 = sc1_ref[...]                           # (cout, 1) f32
    sh1 = sh1_ref[...]

    # Keep the 1-px halo border zero. Only the border is re-zeroed (interior
    # is fully rewritten per image below); done every step so it stays correct
    # under "parallel" grid scheduling on both v7x TensorCores.
    zrow = jnp.zeros((1, wo + 2, cout), pad_ref.dtype)
    zcol = jnp.zeros((ho + 2, 1, cout), pad_ref.dtype)
    pad_ref[0:1, :, :] = zrow
    pad_ref[ho + 1:ho + 2, :, :] = zrow
    pad_ref[:, 0:1, :] = zcol
    pad_ref[:, wo + 1:wo + 2, :] = zcol

    s2 = jnp.zeros((1, cout), jnp.float32)
    q2 = jnp.zeros((1, cout), jnp.float32)

    for i in range(nb):
        # BN1 + ReLU in f32, one bf16 cast per image into the halo scratch.
        o1 = jnp.maximum(y1_ref[i].astype(jnp.float32) * sc1 + sh1, 0.0)
        o1_sp = jnp.transpose(o1).reshape(ho, wo, cout)     # (m,cout)->(ho,wo,cout)
        pad_ref[1:ho + 1, 1:wo + 1, :] = o1_sp.astype(pad_ref.dtype)
        for kh in range(3):
            for kw in range(3):
                t = kh * 3 + kw
                taps_ref[:, :, t * cout:(t + 1) * cout] = (
                    pad_ref[kh:kh + ho, kw:kw + wo, :])
        a_op = taps_ref[...].reshape(m, 9 * cout)
        acc = jnp.dot(a_op, w2_ref[...], preferred_element_type=jnp.float32)
        s2 = s2 + jnp.sum(acc, axis=0, keepdims=True)
        q2 = q2 + jnp.sum(acc * acc, axis=0, keepdims=True)
        y2_ref[i] = jnp.transpose(acc).astype(y2_ref.dtype)

    st_ref[0, 0:1, :] = s2
    st_ref[0, 1:2, :] = q2


def _finalize_proj_kernel(y2_ref, ysc_ref, sc2_ref, sh2_ref, scs_ref, shs_ref,
                          o_ref):
    """Pass 3 (projection shortcut): BN2 + BNsc (folded) + add + final ReLU."""
    cout = o_ref.shape[1]
    sc2 = sc2_ref[...].reshape(1, cout, 1)
    sh2 = sh2_ref[...].reshape(1, cout, 1)
    scs = scs_ref[...].reshape(1, cout, 1)
    shs = shs_ref[...].reshape(1, cout, 1)
    main = y2_ref[...].astype(jnp.float32) * sc2 + sh2
    sc = ysc_ref[...].astype(jnp.float32) * scs + shs
    o_ref[...] = jnp.maximum(main + sc, 0.0).astype(o_ref.dtype)


def _finalize_id_kernel(y2_ref, xs_ref, sc2_ref, sh2_ref, o_ref):
    """Pass 3 (identity shortcut): BN2 (folded) + x + final ReLU."""
    cout = o_ref.shape[1]
    sc2 = sc2_ref[...].reshape(1, cout, 1)
    sh2 = sh2_ref[...].reshape(1, cout, 1)
    main = y2_ref[...].astype(jnp.float32) * sc2 + sh2
    o_ref[...] = jnp.maximum(main + xs_ref[...].astype(jnp.float32),
                             0.0).astype(o_ref.dtype)


# --------------------------------- JAX glue --------------------------------- #
def _pick_block_n(n, max_nb):
    """Images per grid step.  Keep >= 2 grid steps so ("parallel",) can shard
    across both v7x TensorCores; cap at max_nb (sized well inside the 64 MiB
    v7x VMEM at CIFAR shapes, so no explicit vmem_limit_bytes is needed)."""
    if n < 2:
        return 1
    for d in (32, 16, 8, 4, 2, 1):
        if d <= max_nb and n % d == 0 and n // d >= 2:
            return d
    return 1


def _phase_decompose(x_nchw, stride, ho, wo):
    """Pad (zero, 1px) and split the input into stride*stride unit-stride
    phase planes in channels-last layout, so every 3x3 tap is a static,
    unit-stride window slice inside the kernel.  Total bytes == padded input
    (no 9x im2col blow-up).  Returns (N*stride^2, hneed, wneed, C)."""
    n, c, h, w = x_nchw.shape
    hneed = ho + (2 // stride)       # stride 1: ho+2, stride 2: ho+1
    wneed = wo + (2 // stride)
    hp, wp = stride * hneed, stride * wneed
    xh = jnp.transpose(x_nchw, (0, 2, 3, 1))                 # NCHW -> NHWC
    xp = jnp.pad(xh, ((0, 0), (1, hp - h - 1), (1, wp - w - 1), (0, 0)))
    phases = [xp[:, ph::stride, pw::stride, :]
              for ph in range(stride) for pw in range(stride)]
    ph_arr = jnp.stack(phases, axis=1)           # (N, s*s, hneed, wneed, C)
    return ph_arr.reshape(n * stride * stride, hneed, wneed, c)


def _bn_fold(s, sq, count, gamma, beta):
    """Fold training-mode BN into a single per-channel scale/shift, shaped
    (cout, 1) to broadcast over the channels-first (cout, m) tiles."""
    mean = s / count
    var = sq / count - mean * mean
    scale = gamma * lax.rsqrt(var + BN_EPS)
    shift = beta - mean * scale
    return (scale.reshape(-1, 1).astype(jnp.float32),
            shift.reshape(-1, 1).astype(jnp.float32))


def cifar_residual_block(x_nchw, params, stride, block_n=8):
    x = x_nchw.astype(jnp.float32)               # NCHW, kept channels-first
    n, cin, h, w = x.shape
    cout = params["w1"].shape[-1]
    ho = (h - 1) // stride + 1
    wo = (w - 1) // stride + 1
    m = ho * wo
    nb = _pick_block_n(n, block_n)
    steps = n // nb
    ss = stride * stride
    hneed = ho + (2 // stride)
    wneed = wo + (2 // stride)
    proj = (stride != 1) or (cin != cout)

    cparams = pltpu.CompilerParams(dimension_semantics=("parallel",))

    # bf16 MXU operands; all accumulation and BN statistics stay in f32.
    xph = _phase_decompose(x, stride, ho, wo).astype(jnp.bfloat16)
    w1m = params["w1"].reshape(9 * cin, cout).astype(jnp.bfloat16)
    w2m = params["w2"].reshape(9 * cout, cout).astype(jnp.bfloat16)

    # ---- pass 1: conv1 (+ projection conv), partial BN statistics ----------
    k1 = functools.partial(_conv1_kernel, nb=nb, stride=stride, ho=ho, wo=wo,
                           proj=proj)
    in_specs = [
        pl.BlockSpec((nb * ss, hneed, wneed, cin), lambda i: (i, 0, 0, 0)),
        pl.BlockSpec((9 * cin, cout), lambda i: (0, 0)),
    ]
    inputs = [xph, w1m]
    out_shape = [jax.ShapeDtypeStruct((n, cout, m), jnp.bfloat16)]
    out_specs = [pl.BlockSpec((nb, cout, m), lambda i: (i, 0, 0))]
    nstat = 2
    if proj:
        wscm = params["wsc"].reshape(cin, cout).astype(jnp.bfloat16)
        in_specs.append(pl.BlockSpec((cin, cout), lambda i: (0, 0)))
        inputs.append(wscm)
        out_shape.append(jax.ShapeDtypeStruct((n, cout, m), jnp.bfloat16))
        out_specs.append(pl.BlockSpec((nb, cout, m), lambda i: (i, 0, 0)))
        nstat = 4
    out_shape.append(jax.ShapeDtypeStruct((steps, nstat, cout), jnp.float32))
    out_specs.append(pl.BlockSpec((1, nstat, cout), lambda i: (i, 0, 0)))

    res1 = pl.pallas_call(
        k1, grid=(steps,),
        in_specs=in_specs,
        out_shape=tuple(out_shape), out_specs=tuple(out_specs),
        scratch_shapes=[pltpu.VMEM((ho, wo, 9 * cin), jnp.bfloat16)],
        compiler_params=cparams,
    )(*inputs)
    if proj:
        y1, ysc, st1 = res1
    else:
        y1, st1 = res1

    st1 = jnp.sum(st1, axis=0)                   # tiny per-step partial reduce
    count = float(n * m)
    scale1, shift1 = _bn_fold(st1[0], st1[1], count, params["g1"], params["be1"])
    if proj:
        scalesc, shiftsc = _bn_fold(st1[2], st1[3], count,
                                    params["gsc"], params["besc"])

    # ---- pass 2: BN1 + ReLU fused into conv2 (o1 stays in VMEM) ------------
    k2 = functools.partial(_conv2_kernel, nb=nb, ho=ho, wo=wo)
    y2, st2 = pl.pallas_call(
        k2, grid=(steps,),
        in_specs=[
            pl.BlockSpec((nb, cout, m), lambda i: (i, 0, 0)),
            pl.BlockSpec((9 * cout, cout), lambda i: (0, 0)),
            pl.BlockSpec((cout, 1), lambda i: (0, 0)),
            pl.BlockSpec((cout, 1), lambda i: (0, 0)),
        ],
        out_shape=(jax.ShapeDtypeStruct((n, cout, m), jnp.bfloat16),
                   jax.ShapeDtypeStruct((steps, 2, cout), jnp.float32)),
        out_specs=(pl.BlockSpec((nb, cout, m), lambda i: (i, 0, 0)),
                   pl.BlockSpec((1, 2, cout), lambda i: (i, 0, 0))),
        scratch_shapes=[pltpu.VMEM((ho + 2, wo + 2, cout), jnp.bfloat16),
                        pltpu.VMEM((ho, wo, 9 * cout), jnp.bfloat16)],
        compiler_params=cparams,
    )(y1, w2m, scale1, shift1)

    st2 = jnp.sum(st2, axis=0)
    scale2, shift2 = _bn_fold(st2[0], st2[1], count, params["g2"], params["be2"])

    # ---- pass 3: BN2, shortcut, residual add, final ReLU --------------------
    vec_spec = pl.BlockSpec((cout, 1), lambda i: (0, 0))
    img_spec = pl.BlockSpec((nb, cout, m), lambda i: (i, 0, 0))
    if proj:
        out_flat = pl.pallas_call(
            _finalize_proj_kernel, grid=(steps,),
            in_specs=[img_spec, img_spec, vec_spec, vec_spec, vec_spec, vec_spec],
            out_shape=jax.ShapeDtypeStruct((n, cout, m), jnp.float32),
            out_specs=img_spec,
            compiler_params=cparams,
        )(y2, ysc, scale2, shift2, scalesc, shiftsc)
    else:
        xs = x.reshape(n, cout, m)   # identity shortcut: free NCHW flatten
        out_flat = pl.pallas_call(
            _finalize_id_kernel, grid=(steps,),
            in_specs=[img_spec, img_spec, vec_spec, vec_spec],
            out_shape=jax.ShapeDtypeStruct((n, cout, m), jnp.float32),
            out_specs=img_spec,
            compiler_params=cparams,
        )(y2, xs, scale2, shift2)

    return out_flat.reshape(n, cout, ho, wo)     # already NCHW; free reshape


# ------------------------ deterministic parameter init ---------------------- #
def init_params(key, cin, cout, stride):
    ks = jax.random.split(key, 6)
    params = {
        "w1": jax.random.normal(ks[0], (3, 3, cin, cout), jnp.float32) * 0.1,  # HWIO
        "b1": jax.random.normal(ks[1], (cout,), jnp.float32) * 0.05,
        "g1": jnp.ones((cout,), jnp.float32),
        "be1": jnp.zeros((cout,), jnp.float32),
        "w2": jax.random.normal(ks[2], (3, 3, cout, cout), jnp.float32) * 0.1,
        "b2": jax.random.normal(ks[3], (cout,), jnp.float32) * 0.05,
        "g2": jnp.ones((cout,), jnp.float32),
        "be2": jnp.zeros((cout,), jnp.float32),
    }
    if stride != 1 or cin != cout:
        params["wsc"] = jax.random.normal(ks[4], (1, 1, cin, cout), jnp.float32) * 0.1
        params["bsc"] = jax.random.normal(ks[5], (cout,), jnp.float32) * 0.05
        params["gsc"] = jnp.ones((cout,), jnp.float32)
        params["besc"] = jnp.zeros((cout,), jnp.float32)
    return params


# ------------------------------ pure-JAX reference --------------------------- #
def reference_block(x_nchw, params, stride):
    x = jnp.transpose(x_nchw, (0, 2, 3, 1)).astype(jnp.float32)
    hi = lax.Precision.HIGHEST

    def conv(v, wgt, b, s, pad):
        y = lax.conv_general_dilated(v, wgt, (s, s), pad,
                                     dimension_numbers=("NHWC", "HWIO", "NHWC"),
                                     precision=hi)
        return y + b

    def bn(y, g, be):
        mean = jnp.mean(y, axis=(0, 1, 2), keepdims=True)
        var = jnp.mean((y - mean) ** 2, axis=(0, 1, 2), keepdims=True)
        return (y - mean) * lax.rsqrt(var + BN_EPS) * g + be

    o = jax.nn.relu(bn(conv(x, params["w1"], params["b1"], stride, ((1, 1), (1, 1))),
                       params["g1"], params["be1"]))
    o = bn(conv(o, params["w2"], params["b2"], 1, ((1, 1), (1, 1))),
           params["g2"], params["be2"])
    if "wsc" in params:
        sc = bn(conv(x, params["wsc"], params["bsc"], stride, ((0, 0), (0, 0))),
                params["gsc"], params["besc"])
    else:
        sc = x
    return jnp.transpose(jax.nn.relu(o + sc), (0, 3, 1, 2))


if __name__ == "__main__":
    key = jax.random.PRNGKey(0)
    kx1, kp1, kx2, kp2 = jax.random.split(key, 4)

    fwd = jax.jit(cifar_residual_block, static_argnames=("stride", "block_n"))

    # CIFARResidualBlock(in=4, out=8, stride=2): projection-shortcut path.
    n, cin, cout, h, w, stride = 2, 4, 8, 16, 16, 2
    x = jax.random.normal(kx1, (n, cin, h, w), jnp.float32)
    params = init_params(kp1, cin, cout, stride)
    out = jax.block_until_ready(fwd(x, params, stride=stride))
    assert out.shape == (n, cout, h // stride, w // stride), out.shape
    assert bool(jnp.all(jnp.isfinite(out)))
    ref = reference_block(x, params, stride)
    err = float(jnp.max(jnp.abs(out - ref)))
    assert bool(jnp.allclose(out, ref, atol=5e-2, rtol=5e-2)), err

    # CIFARResidualBlock(in=8, out=8, stride=1): identity-shortcut path.
    n2, c2, h2, w2, stride2 = 2, 8, 16, 16, 1
    x2 = jax.random.normal(kx2, (n2, c2, h2, w2), jnp.float32)
    params2 = init_params(kp2, c2, c2, stride2)
    out2 = jax.block_until_ready(fwd(x2, params2, stride=stride2))
    assert out2.shape == (n2, c2, h2, w2), out2.shape
    ref2 = reference_block(x2, params2, stride2)
    err2 = float(jnp.max(jnp.abs(out2 - ref2)))
    assert bool(jnp.allclose(out2, ref2, atol=5e-2, rtol=5e-2)), err2

    print("KERNEL_OK")
</pallas_src>

<mosaic_0001>
module attributes {stable_mosaic.version = 11 : i64} {
  func.func @_conv1_kernel(%arg0: i32, %arg1: memref<4x9x9x4xbf16, #tpu.memory_space<vmem>>, %arg2: memref<36x8xbf16, #tpu.memory_space<vmem>>, %arg3: memref<4x8xbf16, #tpu.memory_space<vmem>>, %arg4: memref<1x8x64xbf16, #tpu.memory_space<vmem>>, %arg5: memref<1x8x64xbf16, #tpu.memory_space<vmem>>, %arg6: memref<1x4x8xf32, #tpu.memory_space<vmem>>, %arg7: memref<8x8x36xbf16, #tpu.memory_space<vmem>>) attributes {dimension_semantics = [#tpu.dimension_semantics<parallel>], iteration_bounds = array<i64: 2>, scalar_prefetch = 0 : i64, scratch_operands = 1 : i64, tpu.core_type = #tpu.core_type<tc>, window_params = [{transform_indices = @transform_0, window_bounds = array<i64: 4, 9, 9, 4>}, {pipeline_mode = #tpu.pipeline_mode<synchronous>, transform_indices = @transform_1, window_bounds = array<i64: 36, 8>}, {pipeline_mode = #tpu.pipeline_mode<synchronous>, transform_indices = @transform_2, window_bounds = array<i64: 4, 8>}, {transform_indices = @transform_3, window_bounds = array<i64: 1, 8, 64>}, {transform_indices = @transform_4, window_bounds = array<i64: 1, 8, 64>}, {transform_indices = @transform_5, window_bounds = array<i64: 1, 4, 8>}]} {
    %cst = arith.constant 0.000000e+00 : f32
    %0 = vector.broadcast %cst : f32 to vector<1x8xf32>
    %cst_0 = arith.constant 0.000000e+00 : f32
    %1 = vector.broadcast %cst_0 : f32 to vector<1x8xf32>
    %cst_1 = arith.constant 0.000000e+00 : f32
    %2 = vector.broadcast %cst_1 : f32 to vector<1x8xf32>
    %cst_2 = arith.constant 0.000000e+00 : f32
    %3 = vector.broadcast %cst_2 : f32 to vector<1x8xf32>
    %c0 = arith.constant 0 : index
    %c0_3 = arith.constant 0 : index
    %c0_4 = arith.constant 0 : index
    %c0_5 = arith.constant 0 : index
    %4 = vector.load %arg1[%c0, %c0_3, %c0_4, %c0_5] : memref<4x9x9x4xbf16, #tpu.memory_space<vmem>>, vector<1x8x8x4xbf16>
    %5 = vector.shape_cast %4 : vector<1x8x8x4xbf16> to vector<8x8x4xbf16>
    %c0_6 = arith.constant 0 : index
    %c0_7 = arith.constant 0 : index
    %c0_8 = arith.constant 0 : index
    %6 = vector.load %arg7[%c0_6, %c0_7, %c0_8] : memref<8x8x36xbf16, #tpu.memory_space<vmem>>, vector<8x8x4xbf16>
    tpu.vector_store %arg7[%c0_6, %c0_7, %c0_8], %5 {strides = array<i32>} : memref<8x8x36xbf16, #tpu.memory_space<vmem>>, vector<8x8x4xbf16>,
    %c1 = arith.constant 1 : index
    %c0_9 = arith.constant 0 : index
    %c0_10 = arith.constant 0 : index
    %c0_11 = arith.constant 0 : index
    %7 = vector.load %arg1[%c1, %c0_9, %c0_10, %c0_11] : memref<4x9x9x4xbf16, #tpu.memory_space<vmem>>, vector<1x8x8x4xbf16>
    %8 = vector.shape_cast %7 : vector<1x8x8x4xbf16> to vector<8x8x4xbf16>
    %c0_12 = arith.constant 0 : index
    %c0_13 = arith.constant 0 : index
    %c4 = arith.constant 4 : index
    %9 = vector.load %arg7[%c0_12, %c0_13, %c4] : memref<8x8x36xbf16, #tpu.memory_space<vmem>>, vector<8x8x4xbf16>
    tpu.vector_store %arg7[%c0_12, %c0_13, %c4], %8 {strides = array<i32>} : memref<8x8x36xbf16, #tpu.memory_space<vmem>>, vector<8x8x4xbf16>,
    %c0_14 = arith.constant 0 : index
    %c0_15 = arith.constant 0 : index
    %c1_16 = arith.constant 1 : index
    %c0_17 = arith.constant 0 : index
    %10 = vector.load %arg1[%c0_14, %c0_15, %c1_16, %c0_17] : memref<4x9x9x4xbf16, #tpu.memory_space<vmem>>, vector<1x8x8x4xbf16>
    %11 = vector.shape_cast %10 : vector<1x8x8x4xbf16> to vector<8x8x4xbf16>
    %c0_18 = arith.constant 0 : index
    %c0_19 = arith.constant 0 : index
    %c8 = arith.constant 8 : index
    %12 = vector.load %arg7[%c0_18, %c0_19, %c8] : memref<8x8x36xbf16, #tpu.memory_space<vmem>>, vector<8x8x4xbf16>
    tpu.vector_store %arg7[%c0_18, %c0_19, %c8], %11 {strides = array<i32>} : memref<8x8x36xbf16, #tpu.memory_space<vmem>>, vector<8x8x4xbf16>,
    %c2 = arith.constant 2 : index
    %c0_20 = arith.constant 0 : index
    %c0_21 = arith.constant 0 : index
    %c0_22 = arith.constant 0 : index
    %13 = vector.load %arg1[%c2, %c0_20, %c0_21, %c0_22] : memref<4x9x9x4xbf16, #tpu.memory_space<vmem>>, vector<1x8x8x4xbf16>
    %14 = vector.shape_cast %13 : vector<1x8x8x4xbf16> to vector<8x8x4xbf16>
    %c0_23 = arith.constant 0 : index
    %c0_24 = arith.constant 0 : index
    %c12 = arith.constant 12 : index
    %15 = vector.load %arg7[%c0_23, %c0_24, %c12] : memref<8x8x36xbf16, #tpu.memory_space<vmem>>, vector<8x8x4xbf16>
    tpu.vector_store %arg7[%c0_23, %c0_24, %c12], %14 {strides = array<i32>} : memref<8x8x36xbf16, #tpu.memory_space<vmem>>, vector<8x8x4xbf16>,
    %c3 = arith.constant 3 : index
    %c0_25 = arith.constant 0 : index
    %c0_26 = arith.constant 0 : index
    %c0_27 = arith.constant 0 : index
    %16 = vector.load %arg1[%c3, %c0_25, %c0_26, %c0_27] : memref<4x9x9x4xbf16, #tpu.memory_space<vmem>>, vector<1x8x8x4xbf16>
    %17 = vector.shape_cast %16 : vector<1x8x8x4xbf16> to vector<8x8x4xbf16>
    %c0_28 = arith.constant 0 : index
    %c0_29 = arith.constant 0 : index
    %c16 = arith.constant 16 : index
    %18 = vector.load %arg7[%c0_28, %c0_29, %c16] : memref<8x8x36xbf16, #tpu.memory_space<vmem>>, vector<8x8x4xbf16>
    tpu.vector_store %arg7[%c0_28, %c0_29, %c16], %17 {strides = array<i32>} : memref<8x8x36xbf16, #tpu.memory_space<vmem>>, vector<8x8x4xbf16>,
    %c2_30 = arith.constant 2 : index
    %c0_31 = arith.constant 0 : index
    %c1_32 = arith.constant 1 : index
    %c0_33 = arith.constant 0 : index
    %19 = vector.load %arg1[%c2_30, %c0_31, %c1_32, %c0_33] : memref<4x9x9x4xbf16, #tpu.memory_space<vmem>>, vector<1x8x8x4xbf16>
    %20 = vector.shape_cast %19 : vector<1x8x8x4xbf16> to vector<8x8x4xbf16>
    %c0_34 = arith.constant 0 : index
    %c0_35 = arith.constant 0 : index
    %c20 = arith.constant 20 : index
    %21 = vector.load %arg7[%c0_34, %c0_35, %c20] : memref<8x8x36xbf16, #tpu.memory_space<vmem>>, vector<8x8x4xbf16>
    tpu.vector_store %arg7[%c0_34, %c0_35, %c20], %20 {strides = array<i32>} : memref<8x8x36xbf16, #tpu.memory_space<vmem>>, vector<8x8x4xbf16>,
    %c0_36 = arith.constant 0 : index
    %c1_37 = arith.constant 1 : index
    %c0_38 = arith.constant 0 : index
    %c0_39 = arith.constant 0 : index
    %22 = vector.load %arg1[%c0_36, %c1_37, %c0_38, %c0_39] : memref<4x9x9x4xbf16, #tpu.memory_space<vmem>>, vector<1x8x8x4xbf16>
    %23 = vector.shape_cast %22 : vector<1x8x8x4xbf16> to vector<8x8x4xbf16>
    %c0_40 = arith.constant 0 : index
    %c0_41 = arith.constant 0 : index
    %c24 = arith.constant 24 : index
    %24 = vector.load %arg7[%c0_40, %c0_41, %c24] : memref<8x8x36xbf16, #tpu.memory_space<vmem>>, vector<8x8x4xbf16>
    tpu.vector_store %arg7[%c0_40, %c0_41, %c24], %23 {strides = array<i32>} : memref<8x8x36xbf16, #tpu.memory_space<vmem>>, vector<8x8x4xbf16>,
    %c1_42 = arith.constant 1 : index
    %c1_43 = arith.constant 1 : index
    %c0_44 = arith.constant 0 : index
    %c0_45 = arith.constant 0 : index
    %25 = vector.load %arg1[%c1_42, %c1_43, %c0_44, %c0_45] : memref<4x9x9x4xbf16, #tpu.memory_space<vmem>>, vector<1x8x8x4xbf16>
    %26 = vector.shape_cast %25 : vector<1x8x8x4xbf16> to vector<8x8x4xbf16>
    %c0_46 = arith.constant 0 : index
    %c0_47 = arith.constant 0 : index
    %c28 = arith.constant 28 : index
    %27 = vector.load %arg7[%c0_46, %c0_47, %c28] : memref<8x8x36xbf16, #tpu.memory_space<vmem>>, vector<8x8x4xbf16>
    tpu.vector_store %arg7[%c0_46, %c0_47, %c28], %26 {strides = array<i32>} : memref<8x8x36xbf16, #tpu.memory_space<vmem>>, vector<8x8x4xbf16>,
    %c0_48 = arith.constant 0 : index
    %c1_49 = arith.constant 1 : index
    %c1_50 = arith.constant 1 : index
    %c0_51 = arith.constant 0 : index
    %28 = vector.load %arg1[%c0_48, %c1_49, %c1_50, %c0_51] : memref<4x9x9x4xbf16, #tpu.memory_space<vmem>>, vector<1x8x8x4xbf16>
    %29 = vector.shape_cast %28 : vector<1x8x8x4xbf16> to vector<8x8x4xbf16>
    %c0_52 = arith.constant 0 : index
    %c0_53 = arith.constant 0 : index
    %c32 = arith.constant 32 : index
    %30 = vector.load %arg7[%c0_52, %c0_53, %c32] : memref<8x8x36xbf16, #tpu.memory_space<vmem>>, vector<8x8x4xbf16>
    tpu.vector_store %arg7[%c0_52, %c0_53, %c32], %29 {strides = array<i32>} : memref<8x8x36xbf16, #tpu.memory_space<vmem>>, vector<8x8x4xbf16>,
    %c0_54 = arith.constant 0 : index
    %c0_55 = arith.constant 0 : index
    %c0_56 = arith.constant 0 : index
    %31 = vector.load %arg7[%c0_54, %c0_55, %c0_56] : memref<8x8x36xbf16, #tpu.memory_space<vmem>>, vector<8x8x36xbf16>
    %32 = vector.shape_cast %31 : vector<8x8x36xbf16> to vector<64x36xbf16>
    %c0_57 = arith.constant 0 : index
    %c0_58 = arith.constant 0 : index
    %33 = vector.load %arg2[%c0_57, %c0_58] : memref<36x8xbf16, #tpu.memory_space<vmem>>, vector<36x8xbf16>
    %cst_59 = arith.constant dense<0.000000e+00> : vector<64x8xf32>
    %34 = tpu.matmul %32, %33, %cst_59 {dimension_numbers = #tpu.dot_dimension_numbers<[1], [0], [0], [1], [0, 0, 1, 1], [], []>} : vector<64x36xbf16>, vector<36x8xbf16>, vector<64x8xf32> -> vector<64x8xf32>
    %cst_60 = arith.constant dense<0.000000e+00> : vector<8xf32>
    %35 = vector.multi_reduction <add>, %34, %cst_60 [0] : vector<64x8xf32> to vector<8xf32>
    %36 = vector.shape_cast %35 : vector<8xf32> to vector<1x8xf32>
    %37 = arith.addf %0, %36 : vector<1x8xf32>
    %38 = arith.mulf %34, %34 : vector<64x8xf32>
    %cst_61 = arith.constant dense<0.000000e+00> : vector<8xf32>
    %39 = vector.multi_reduction <add>, %38, %cst_61 [0] : vector<64x8xf32> to vector<8xf32>
    %40 = vector.shape_cast %39 : vector<8xf32> to vector<1x8xf32>
    %41 = arith.addf %1, %40 : vector<1x8xf32>
    %42 = tpu.transpose %34, [1, 0] : vector<64x8xf32> -> vector<8x64xf32>
    %43 = arith.truncf %42 : vector<8x64xf32> to vector<8x64xbf16>
    %c0_62 = arith.constant 0 : index
    %c0_63 = arith.constant 0 : index
    %c0_64 = arith.constant 0 : index
    %44 = vector.load %arg4[%c0_62, %c0_63, %c0_64] : memref<1x8x64xbf16, #tpu.memory_space<vmem>>, vector<1x8x64xbf16>
    %45 = vector.shape_cast %44 : vector<1x8x64xbf16> to vector<8x64xbf16>
    %46 = vector.shape_cast %43 : vector<8x64xbf16> to vector<1x8x64xbf16>
    tpu.vector_store %arg4[%c0_62, %c0_63, %c0_64], %46 {strides = array<i32>} : memref<1x8x64xbf16, #tpu.memory_space<vmem>>, vector<1x8x64xbf16>,
    %47 = vector.extract_strided_slice %32 {offsets = [0, 16], sizes = [64, 4], strides = [1, 1]} : vector<64x36xbf16> to vector<64x4xbf16>
    %c0_65 = arith.constant 0 : index
    %c0_66 = arith.constant 0 : index
    %48 = vector.load %arg3[%c0_65, %c0_66] : memref<4x8xbf16, #tpu.memory_space<vmem>>, vector<4x8xbf16>
    %cst_67 = arith.constant dense<0.000000e+00> : vector<64x8xf32>
    %49 = tpu.matmul %47, %48, %cst_67 {dimension_numbers = #tpu.dot_dimension_numbers<[1], [0], [0], [1], [0, 0, 1, 1], [], []>} : vector<64x4xbf16>, vector<4x8xbf16>, vector<64x8xf32> -> vector<64x8xf32>
    %cst_68 = arith.constant dense<0.000000e+00> : vector<8xf32>
    %50 = vector.multi_reduction <add>, %49, %cst_68 [0] : vector<64x8xf32> to vector<8xf32>
    %51 = vector.shape_cast %50 : vector<8xf32> to vector<1x8xf32>
    %52 = arith.addf %2, %51 : vector<1x8xf32>
    %53 = arith.mulf %49, %49 : vector<64x8xf32>
    %cst_69 = arith.constant dense<0.000000e+00> : vector<8xf32>
    %54 = vector.multi_reduction <add>, %53, %cst_69 [0] : vector<64x8xf32> to vector<8xf32>
    %55 = vector.shape_cast %54 : vector<8xf32> to vector<1x8xf32>
    %56 = arith.addf %3, %55 : vector<1x8xf32>
    %57 = tpu.transpose %49, [1, 0] : vector<64x8xf32> -> vector<8x64xf32>
    %58 = arith.truncf %57 : vector<8x64xf32> to vector<8x64xbf16>
    %c0_70 = arith.constant 0 : index
    %c0_71 = arith.constant 0 : index
    %c0_72 = arith.constant 0 : index
    %59 = vector.load %arg5[%c0_70, %c0_71, %c0_72] : memref<1x8x64xbf16, #tpu.memory_space<vmem>>, vector<1x8x64xbf16>
    %60 = vector.shape_cast %59 : vector<1x8x64xbf16> to vector<8x64xbf16>
    %61 = vector.shape_cast %58 : vector<8x64xbf16> to vector<1x8x64xbf16>
    tpu.vector_store %arg5[%c0_70, %c0_71, %c0_72], %61 {strides = array<i32>} : memref<1x8x64xbf16, #tpu.memory_space<vmem>>, vector<1x8x64xbf16>,
    %c0_73 = arith.constant 0 : index
    %c0_74 = arith.constant 0 : index
    %c0_75 = arith.constant 0 : index
    %62 = vector.load %arg6[%c0_73, %c0_74, %c0_75] : memref<1x4x8xf32, #tpu.memory_space<vmem>>, vector<1x1x8xf32>
    %63 = vector.shape_cast %62 : vector<1x1x8xf32> to vector<1x8xf32>
    %64 = vector.shape_cast %37 : vector<1x8xf32> to vector<1x1x8xf32>
    tpu.vector_store %arg6[%c0_73, %c0_74, %c0_75], %64 {strides = array<i32>} : memref<1x4x8xf32, #tpu.memory_space<vmem>>, vector<1x1x8xf32>,
    %c0_76 = arith.constant 0 : index
    %c1_77 = arith.constant 1 : index
    %c0_78 = arith.constant 0 : index
    %65 = vector.load %arg6[%c0_76, %c1_77, %c0_78] : memref<1x4x8xf32, #tpu.memory_space<vmem>>, vector<1x1x8xf32>
    %66 = vector.shape_cast %65 : vector<1x1x8xf32> to vector<1x8xf32>
    %67 = vector.shape_cast %41 : vector<1x8xf32> to vector<1x1x8xf32>
    tpu.vector_store %arg6[%c0_76, %c1_77, %c0_78], %67 {strides = array<i32>} : memref<1x4x8xf32, #tpu.memory_space<vmem>>, vector<1x1x8xf32>,
    %c0_79 = arith.constant 0 : index
    %c2_80 = arith.constant 2 : index
    %c0_81 = arith.constant 0 : index
    %68 = vector.load %arg6[%c0_79, %c2_80, %c0_81] : memref<1x4x8xf32, #tpu.memory_space<vmem>>, vector<1x1x8xf32>
    %69 = vector.shape_cast %68 : vector<1x1x8xf32> to vector<1x8xf32>
    %70 = vector.shape_cast %52 : vector<1x8xf32> to vector<1x1x8xf32>
    tpu.vector_store %arg6[%c0_79, %c2_80, %c0_81], %70 {strides = array<i32>} : memref<1x4x8xf32, #tpu.memory_space<vmem>>, vector<1x1x8xf32>,
    %c0_82 = arith.constant 0 : index
    %c3_83 = arith.constant 3 : index
    %c0_84 = arith.constant 0 : index
    %71 = vector.load %arg6[%c0_82, %c3_83, %c0_84] : memref<1x4x8xf32, #tpu.memory_space<vmem>>, vector<1x1x8xf32>
    %72 = vector.shape_cast %71 : vector<1x1x8xf32> to vector<1x8xf32>
    %73 = vector.shape_cast %56 : vector<1x8xf32> to vector<1x1x8xf32>
    tpu.vector_store %arg6[%c0_82, %c3_83, %c0_84], %73 {strides = array<i32>} : memref<1x4x8xf32, #tpu.memory_space<vmem>>, vector<1x1x8xf32>,
    return
  }
  func.func @transform_0(%arg0: i32) -> (i32, i32, i32, i32) {
    %c0_i32 = arith.constant 0 : i32
    %c0_i32_0 = arith.constant 0 : i32
    %c0_i32_1 = arith.constant 0 : i32
    %c0_i32_2 = arith.constant 0 : i32
    return %arg0, %c0_i32, %c0_i32_0, %c0_i32_1 : i32, i32, i32, i32
  }
  func.func @transform_1(%arg0: i32) -> (i32, i32) {
    %c0_i32 = arith.constant 0 : i32
    %c0_i32_0 = arith.constant 0 : i32
    %c0_i32_1 = arith.constant 0 : i32
    return %c0_i32, %c0_i32_0 : i32, i32
  }
  func.func @transform_2(%arg0: i32) -> (i32, i32) {
    %c0_i32 = arith.constant 0 : i32
    %c0_i32_0 = arith.constant 0 : i32
    %c0_i32_1 = arith.constant 0 : i32
    return %c0_i32, %c0_i32_0 : i32, i32
  }
  func.func @transform_3(%arg0: i32) -> (i32, i32, i32) {
    %c0_i32 = arith.constant 0 : i32
    %c0_i32_0 = arith.constant 0 : i32
    %c0_i32_1 = arith.constant 0 : i32
    return %arg0, %c0_i32, %c0_i32_0 : i32, i32, i32
  }
  func.func @transform_4(%arg0: i32) -> (i32, i32, i32) {
    %c0_i32 = arith.constant 0 : i32
    %c0_i32_0 = arith.constant 0 : i32
    %c0_i32_1 = arith.constant 0 : i32
    return %arg0, %c0_i32, %c0_i32_0 : i32, i32, i32
  }
  func.func @transform_5(%arg0: i32) -> (i32, i32, i32) {
    %c0_i32 = arith.constant 0 : i32
    %c0_i32_0 = arith.constant 0 : i32
    %c0_i32_1 = arith.constant 0 : i32
    return %arg0, %c0_i32, %c0_i32_0 : i32, i32, i32
  }
}

module attributes {stable_mosaic.version = 11 : i64} {
  func.func @_conv2_kernel(%arg0: i32, %arg1: memref<1x8x64xbf16, #tpu.memory_space<vmem>>, %arg2: memref<72x8xbf16, #tpu.memory_space<vmem>>, %arg3: memref<8x1xf32, #tpu.memory_space<vmem>>, %arg4: memref<8x1xf32, #tpu.memory_space<vmem>>, %arg5: memref<1x8x64xbf16, #tpu.memory_space<vmem>>, %arg6: memref<1x2x8xf32, #tpu.memory_space<vmem>>, %arg7: memref<10x10x8xbf16, #tpu.memory_space<vmem>>, %arg8: memref<8x8x72xbf16, #tpu.memory_space<vmem>>) attributes {dimension_semantics = [#tpu.dimension_semantics<parallel>], iteration_bounds = array<i64: 2>, scalar_prefetch = 0 : i64, scratch_operands = 2 : i64, tpu.core_type = #tpu.core_type<tc>, window_params = [{transform_indices = @transform_0, window_bounds = array<i64: 1, 8, 64>}, {pipeline_mode = #tpu.pipeline_mode<synchronous>, transform_indices = @transform_1, window_bounds = array<i64: 72, 8>}, {pipeline_mode = #tpu.pipeline_mode<synchronous>, transform_indices = @transform_2, window_bounds = array<i64: 8, 1>}, {pipeline_mode = #tpu.pipeline_mode<synchronous>, transform_indices = @transform_3, window_bounds = array<i64: 8, 1>}, {transform_indices = @transform_4, window_bounds = array<i64: 1, 8, 64>}, {transform_indices = @transform_5, window_bounds = array<i64: 1, 2, 8>}]} {
    %c0 = arith.constant 0 : index
    %c0_0 = arith.constant 0 : index
    %0 = vector.load %arg3[%c0, %c0_0] : memref<8x1xf32, #tpu.memory_space<vmem>>, vector<8x1xf32>
    %c0_1 = arith.constant 0 : index
    %c0_2 = arith.constant 0 : index
    %1 = vector.load %arg4[%c0_1, %c0_2] : memref<8x1xf32, #tpu.memory_space<vmem>>, vector<8x1xf32>
    %cst = arith.constant 0.000000e+00 : bf16
    %2 = vector.broadcast %cst : bf16 to vector<1x10x8xbf16>
    %cst_3 = arith.constant 0.000000e+00 : bf16
    %3 = vector.broadcast %cst_3 : bf16 to vector<10x1x8xbf16>
    %c0_4 = arith.constant 0 : index
    %c0_5 = arith.constant 0 : index
    %c0_6 = arith.constant 0 : index
    %4 = vector.load %arg7[%c0_4, %c0_5, %c0_6] : memref<10x10x8xbf16, #tpu.memory_space<vmem>>, vector<1x10x8xbf16>
    tpu.vector_store %arg7[%c0_4, %c0_5, %c0_6], %2 {strides = array<i32>} : memref<10x10x8xbf16, #tpu.memory_space<vmem>>, vector<1x10x8xbf16>,
    %c9 = arith.constant 9 : index
    %c0_7 = arith.constant 0 : index
    %c0_8 = arith.constant 0 : index
    %5 = vector.load %arg7[%c9, %c0_7, %c0_8] : memref<10x10x8xbf16, #tpu.memory_space<vmem>>, vector<1x10x8xbf16>
    tpu.vector_store %arg7[%c9, %c0_7, %c0_8], %2 {strides = array<i32>} : memref<10x10x8xbf16, #tpu.memory_space<vmem>>, vector<1x10x8xbf16>,
    %c0_9 = arith.constant 0 : index
    %c0_10 = arith.constant 0 : index
    %c0_11 = arith.constant 0 : index
    %6 = vector.load %arg7[%c0_9, %c0_10, %c0_11] : memref<10x10x8xbf16, #tpu.memory_space<vmem>>, vector<10x1x8xbf16>
    tpu.vector_store %arg7[%c0_9, %c0_10, %c0_11], %3 {strides = array<i32>} : memref<10x10x8xbf16, #tpu.memory_space<vmem>>, vector<10x1x8xbf16>,
    %c0_12 = arith.constant 0 : index
    %c9_13 = arith.constant 9 : index
    %c0_14 = arith.constant 0 : index
    %7 = vector.load %arg7[%c0_12, %c9_13, %c0_14] : memref<10x10x8xbf16, #tpu.memory_space<vmem>>, vector<10x1x8xbf16>
    tpu.vector_store %arg7[%c0_12, %c9_13, %c0_14], %3 {strides = array<i32>} : memref<10x10x8xbf16, #tpu.memory_space<vmem>>, vector<10x1x8xbf16>,
    %cst_15 = arith.constant 0.000000e+00 : f32
    %8 = vector.broadcast %cst_15 : f32 to vector<1x8xf32>
    %cst_16 = arith.constant 0.000000e+00 : f32
    %9 = vector.broadcast %cst_16 : f32 to vector<1x8xf32>
    %c0_17 = arith.constant 0 : index
    %c0_18 = arith.constant 0 : index
    %c0_19 = arith.constant 0 : index
    %10 = vector.load %arg1[%c0_17, %c0_18, %c0_19] : memref<1x8x64xbf16, #tpu.memory_space<vmem>>, vector<1x8x64xbf16>
    %11 = vector.shape_cast %10 : vector<1x8x64xbf16> to vector<8x64xbf16>
    %12 = arith.extf %11 : vector<8x64xbf16> to vector<8x64xf32>
    %13 = vector.broadcast %0 : vector<8x1xf32> to vector<8x64xf32>
    %14 = arith.mulf %12, %13 : vector<8x64xf32>
    %15 = vector.broadcast %1 : vector<8x1xf32> to vector<8x64xf32>
    %16 = arith.addf %14, %15 : vector<8x64xf32>
    %cst_20 = arith.constant 0.000000e+00 : f32
    %17 = vector.broadcast %cst_20 : f32 to vector<8x64xf32>
    %18 = arith.maximumf %16, %17 : vector<8x64xf32>
    %19 = tpu.transpose %18, [1, 0] : vector<8x64xf32> -> vector<64x8xf32>
    %20 = vector.shape_cast %19 : vector<64x8xf32> to vector<8x8x8xf32>
    %21 = arith.truncf %20 : vector<8x8x8xf32> to vector<8x8x8xbf16>
    %c1 = arith.constant 1 : index
    %c1_21 = arith.constant 1 : index
    %c0_22 = arith.constant 0 : index
    %22 = vector.load %arg7[%c1, %c1_21, %c0_22] : memref<10x10x8xbf16, #tpu.memory_space<vmem>>, vector<8x8x8xbf16>
    tpu.vector_store %arg7[%c1, %c1_21, %c0_22], %21 {strides = array<i32>} : memref<10x10x8xbf16, #tpu.memory_space<vmem>>, vector<8x8x8xbf16>,
    %c0_23 = arith.constant 0 : index
    %c0_24 = arith.constant 0 : index
    %c0_25 = arith.constant 0 : index
    %23 = vector.load %arg7[%c0_23, %c0_24, %c0_25] : memref<10x10x8xbf16, #tpu.memory_space<vmem>>, vector<8x8x8xbf16>
    %c0_26 = arith.constant 0 : index
    %c0_27 = arith.constant 0 : index
    %c0_28 = arith.constant 0 : index
    %24 = vector.load %arg8[%c0_26, %c0_27, %c0_28] : memref<8x8x72xbf16, #tpu.memory_space<vmem>>, vector<8x8x8xbf16>
    tpu.vector_store %arg8[%c0_26, %c0_27, %c0_28], %23 {strides = array<i32>} : memref<8x8x72xbf16, #tpu.memory_space<vmem>>, vector<8x8x8xbf16>,
    %c0_29 = arith.constant 0 : index
    %c1_30 = arith.constant 1 : index
    %c0_31 = arith.constant 0 : index
    %25 = vector.load %arg7[%c0_29, %c1_30, %c0_31] : memref<10x10x8xbf16, #tpu.memory_space<vmem>>, vector<8x8x8xbf16>
    %c0_32 = arith.constant 0 : index
    %c0_33 = arith.constant 0 : index
    %c8 = arith.constant 8 : index
    %26 = vector.load %arg8[%c0_32, %c0_33, %c8] : memref<8x8x72xbf16, #tpu.memory_space<vmem>>, vector<8x8x8xbf16>
    tpu.vector_store %arg8[%c0_32, %c0_33, %c8], %25 {strides = array<i32>} : memref<8x8x72xbf16, #tpu.memory_space<vmem>>, vector<8x8x8xbf16>,
    %c0_34 = arith.constant 0 : index
    %c2 = arith.constant 2 : index
    %c0_35 = arith.constant 0 : index
    %27 = vector.load %arg7[%c0_34, %c2, %c0_35] : memref<10x10x8xbf16, #tpu.memory_space<vmem>>, vector<8x8x8xbf16>
    %c0_36 = arith.constant 0 : index
    %c0_37 = arith.constant 0 : index
    %c16 = arith.constant 16 : index
    %28 = vector.load %arg8[%c0_36, %c0_37, %c16] : memref<8x8x72xbf16, #tpu.memory_space<vmem>>, vector<8x8x8xbf16>
    tpu.vector_store %arg8[%c0_36, %c0_37, %c16], %27 {strides = array<i32>} : memref<8x8x72xbf16, #tpu.memory_space<vmem>>, vector<8x8x8xbf16>,
    %c1_38 = arith.constant 1 : index
    %c0_39 = arith.constant 0 : index
    %c0_40 = arith.constant 0 : index
    %29 = vector.load %arg7[%c1_38, %c0_39, %c0_40] : memref<10x10x8xbf16, #tpu.memory_space<vmem>>, vector<8x8x8xbf16>
    %c0_41 = arith.constant 0 : index
    %c0_42 = arith.constant 0 : index
    %c24 = arith.constant 24 : index
    %30 = vector.load %arg8[%c0_41, %c0_42, %c24] : memref<8x8x72xbf16, #tpu.memory_space<vmem>>, vector<8x8x8xbf16>
    tpu.vector_store %arg8[%c0_41, %c0_42, %c24], %29 {strides = array<i32>} : memref<8x8x72xbf16, #tpu.memory_space<vmem>>, vector<8x8x8xbf16>,
    %c1_43 = arith.constant 1 : index
    %c1_44 = arith.constant 1 : index
    %c0_45 = arith.constant 0 : index
    %31 = vector.load %arg7[%c1_43, %c1_44, %c0_45] : memref<10x10x8xbf16, #tpu.memory_space<vmem>>, vector<8x8x8xbf16>
    %c0_46 = arith.constant 0 : index
    %c0_47 = arith.constant 0 : index
    %c32 = arith.constant 32 : index
    %32 = vector.load %arg8[%c0_46, %c0_47, %c32] : memref<8x8x72xbf16, #tpu.memory_space<vmem>>, vector<8x8x8xbf16>
    tpu.vector_store %arg8[%c0_46, %c0_47, %c32], %31 {strides = array<i32>} : memref<8x8x72xbf16, #tpu.memory_space<vmem>>, vector<8x8x8xbf16>,
    %c1_48 = arith.constant 1 : index
    %c2_49 = arith.constant 2 : index
    %c0_50 = arith.constant 0 : index
    %33 = vector.load %arg7[%c1_48, %c2_49, %c0_50] : memref<10x10x8xbf16, #tpu.memory_space<vmem>>, vector<8x8x8xbf16>
    %c0_51 = arith.constant 0 : index
    %c0_52 = arith.constant 0 : index
    %c40 = arith.constant 40 : index
    %34 = vector.load %arg8[%c0_51, %c0_52, %c40] : memref<8x8x72xbf16, #tpu.memory_space<vmem>>, vector<8x8x8xbf16>
    tpu.vector_store %arg8[%c0_51, %c0_52, %c40], %33 {strides = array<i32>} : memref<8x8x72xbf16, #tpu.memory_space<vmem>>, vector<8x8x8xbf16>,
    %c2_53 = arith.constant 2 : index
    %c0_54 = arith.constant 0 : index
    %c0_55 = arith.constant 0 : index
    %35 = vector.load %arg7[%c2_53, %c0_54, %c0_55] : memref<10x10x8xbf16, #tpu.memory_space<vmem>>, vector<8x8x8xbf16>
    %c0_56 = arith.constant 0 : index
    %c0_57 = arith.constant 0 : index
    %c48 = arith.constant 48 : index
    %36 = vector.load %arg8[%c0_56, %c0_57, %c48] : memref<8x8x72xbf16, #tpu.memory_space<vmem>>, vector<8x8x8xbf16>
    tpu.vector_store %arg8[%c0_56, %c0_57, %c48], %35 {strides = array<i32>} : memref<8x8x72xbf16, #tpu.memory_space<vmem>>, vector<8x8x8xbf16>,
    %c2_58 = arith.constant 2 : index
    %c1_59 = arith.constant 1 : index
    %c0_60 = arith.constant 0 : index
    %37 = vector.load %arg7[%c2_58, %c1_59, %c0_60] : memref<10x10x8xbf16, #tpu.memory_space<vmem>>, vector<8x8x8xbf16>
    %c0_61 = arith.constant 0 : index
    %c0_62 = arith.constant 0 : index
    %c56 = arith.constant 56 : index
    %38 = vector.load %arg8[%c0_61, %c0_62, %c56] : memref<8x8x72xbf16, #tpu.memory_space<vmem>>, vector<8x8x8xbf16>
    tpu.vector_store %arg8[%c0_61, %c0_62, %c56], %37 {strides = array<i32>} : memref<8x8x72xbf16, #tpu.memory_space<vmem>>, vector<8x8x8xbf16>,
    %c2_63 = arith.constant 2 : index
    %c2_64 = arith.constant 2 : index
    %c0_65 = arith.constant 0 : index
    %39 = vector.load %arg7[%c2_63, %c2_64, %c0_65] : memref<10x10x8xbf16, #tpu.memory_space<vmem>>, vector<8x8x8xbf16>
    %c0_66 = arith.constant 0 : index
    %c0_67 = arith.constant 0 : index
    %c64 = arith.constant 64 : index
    %40 = vector.load %arg8[%c0_66, %c0_67, %c64] : memref<8x8x72xbf16, #tpu.memory_space<vmem>>, vector<8x8x8xbf16>
    tpu.vector_store %arg8[%c0_66, %c0_67, %c64], %39 {strides = array<i32>} : memref<8x8x72xbf16, #tpu.memory_space<vmem>>, vector<8x8x8xbf16>,
    %c0_68 = arith.constant 0 : index
    %c0_69 = arith.constant 0 : index
    %c0_70 = arith.constant 0 : index
    %41 = vector.load %arg8[%c0_68, %c0_69, %c0_70] : memref<8x8x72xbf16, #tpu.memory_space<vmem>>, vector<8x8x72xbf16>
    %42 = vector.shape_cast %41 : vector<8x8x72xbf16> to vector<64x72xbf16>
    %c0_71 = arith.constant 0 : index
    %c0_72 = arith.constant 0 : index
    %43 = vector.load %arg2[%c0_71, %c0_72] : memref<72x8xbf16, #tpu.memory_space<vmem>>, vector<72x8xbf16>
    %cst_73 = arith.constant dense<0.000000e+00> : vector<64x8xf32>
    %44 = tpu.matmul %42, %43, %cst_73 {dimension_numbers = #tpu.dot_dimension_numbers<[1], [0], [0], [1], [0, 0, 1, 1], [], []>} : vector<64x72xbf16>, vector<72x8xbf16>, vector<64x8xf32> -> vector<64x8xf32>
    %cst_74 = arith.constant dense<0.000000e+00> : vector<8xf32>
    %45 = vector.multi_reduction <add>, %44, %cst_74 [0] : vector<64x8xf32> to vector<8xf32>
    %46 = vector.shape_cast %45 : vector<8xf32> to vector<1x8xf32>
    %47 = arith.addf %8, %46 : vector<1x8xf32>
    %48 = arith.mulf %44, %44 : vector<64x8xf32>
    %cst_75 = arith.constant dense<0.000000e+00> : vector<8xf32>
    %49 = vector.multi_reduction <add>, %48, %cst_75 [0] : vector<64x8xf32> to vector<8xf32>
    %50 = vector.shape_cast %49 : vector<8xf32> to vector<1x8xf32>
    %51 = arith.addf %9, %50 : vector<1x8xf32>
    %52 = tpu.transpose %44, [1, 0] : vector<64x8xf32> -> vector<8x64xf32>
    %53 = arith.truncf %52 : vector<8x64xf32> to vector<8x64xbf16>
    %c0_76 = arith.constant 0 : index
    %c0_77 = arith.constant 0 : index
    %c0_78 = arith.constant 0 : index
    %54 = vector.load %arg5[%c0_76, %c0_77, %c0_78] : memref<1x8x64xbf16, #tpu.memory_space<vmem>>, vector<1x8x64xbf16>
    %55 = vector.shape_cast %54 : vector<1x8x64xbf16> to vector<8x64xbf16>
    %56 = vector.shape_cast %53 : vector<8x64xbf16> to vector<1x8x64xbf16>
    tpu.vector_store %arg5[%c0_76, %c0_77, %c0_78], %56 {strides = array<i32>} : memref<1x8x64xbf16, #tpu.memory_space<vmem>>, vector<1x8x64xbf16>,
    %c0_79 = arith.constant 0 : index
    %c0_80 = arith.constant 0 : index
    %c0_81 = arith.constant 0 : index
    %57 = vector.load %arg6[%c0_79, %c0_80, %c0_81] : memref<1x2x8xf32, #tpu.memory_space<vmem>>, vector<1x1x8xf32>
    %58 = vector.shape_cast %57 : vector<1x1x8xf32> to vector<1x8xf32>
    %59 = vector.shape_cast %47 : vector<1x8xf32> to vector<1x1x8xf32>
    tpu.vector_store %arg6[%c0_79, %c0_80, %c0_81], %59 {strides = array<i32>} : memref<1x2x8xf32, #tpu.memory_space<vmem>>, vector<1x1x8xf32>,
    %c0_82 = arith.constant 0 : index
    %c1_83 = arith.constant 1 : index
    %c0_84 = arith.constant 0 : index
    %60 = vector.load %arg6[%c0_82, %c1_83, %c0_84] : memref<1x2x8xf32, #tpu.memory_space<vmem>>, vector<1x1x8xf32>
    %61 = vector.shape_cast %60 : vector<1x1x8xf32> to vector<1x8xf32>
    %62 = vector.shape_cast %51 : vector<1x8xf32> to vector<1x1x8xf32>
    tpu.vector_store %arg6[%c0_82, %c1_83, %c0_84], %62 {strides = array<i32>} : memref<1x2x8xf32, #tpu.memory_space<vmem>>, vector<1x1x8xf32>,
    return
  }
  func.func @transform_0(%arg0: i32) -> (i32, i32, i32) {
    %c0_i32 = arith.constant 0 : i32
    %c0_i32_0 = arith.constant 0 : i32
    %c0_i32_1 = arith.constant 0 : i32
    return %arg0, %c0_i32, %c0_i32_0 : i32, i32, i32
  }
  func.func @transform_1(%arg0: i32) -> (i32, i32) {
    %c0_i32 = arith.constant 0 : i32
    %c0_i32_0 = arith.constant 0 : i32
    %c0_i32_1 = arith.constant 0 : i32
    return %c0_i32, %c0_i32_0 : i32, i32
  }
  func.func @transform_2(%arg0: i32) -> (i32, i32) {
    %c0_i32 = arith.constant 0 : i32
    %c0_i32_0 = arith.constant 0 : i32
    %c0_i32_1 = arith.constant 0 : i32
    return %c0_i32, %c0_i32_0 : i32, i32
  }
  func.func @transform_3(%arg0: i32) -> (i32, i32) {
    %c0_i32 = arith.constant 0 : i32
    %c0_i32_0 = arith.constant 0 : i32
    %c0_i32_1 = arith.constant 0 : i32
    return %c0_i32, %c0_i32_0 : i32, i32
  }
  func.func @transform_4(%arg0: i32) -> (i32, i32, i32) {
    %c0_i32 = arith.constant 0 : i32
    %c0_i32_0 = arith.constant 0 : i32
    %c0_i32_1 = arith.constant 0 : i32
    return %arg0, %c0_i32, %c0_i32_0 : i32, i32, i32
  }
  func.func @transform_5(%arg0: i32) -> (i32, i32, i32) {
    %c0_i32 = arith.constant 0 : i32
    %c0_i32_0 = arith.constant 0 : i32
    %c0_i32_1 = arith.constant 0 : i32
    return %arg0, %c0_i32, %c0_i32_0 : i32, i32, i32
  }
}

module attributes {stable_mosaic.version = 11 : i64} {
  func.func @_finalize_proj_kernel(%arg0: i32, %arg1: memref<1x8x64xbf16, #tpu.memory_space<vmem>>, %arg2: memref<1x8x64xbf16, #tpu.memory_space<vmem>>, %arg3: memref<8x1xf32, #tpu.memory_space<vmem>>, %arg4: memref<8x1xf32, #tpu.memory_space<vmem>>, %arg5: memref<8x1xf32, #tpu.memory_space<vmem>>, %arg6: memref<8x1xf32, #tpu.memory_space<vmem>>, %arg7: memref<1x8x64xf32, #tpu.memory_space<vmem>>) attributes {dimension_semantics = [#tpu.dimension_semantics<parallel>], iteration_bounds = array<i64: 2>, scalar_prefetch = 0 : i64, scratch_operands = 0 : i64, tpu.core_type = #tpu.core_type<tc>, window_params = [{transform_indices = @transform_0, window_bounds = array<i64: 1, 8, 64>}, {transform_indices = @transform_1, window_bounds = array<i64: 1, 8, 64>}, {pipeline_mode = #tpu.pipeline_mode<synchronous>, transform_indices = @transform_2, window_bounds = array<i64: 8, 1>}, {pipeline_mode = #tpu.pipeline_mode<synchronous>, transform_indices = @transform_3, window_bounds = array<i64: 8, 1>}, {pipeline_mode = #tpu.pipeline_mode<synchronous>, transform_indices = @transform_4, window_bounds = array<i64: 8, 1>}, {pipeline_mode = #tpu.pipeline_mode<synchronous>, transform_indices = @transform_5, window_bounds = array<i64: 8, 1>}, {transform_indices = @transform_6, window_bounds = array<i64: 1, 8, 64>}]} {
    %c0 = arith.constant 0 : index
    %c0_0 = arith.constant 0 : index
    %0 = vector.load %arg3[%c0, %c0_0] : memref<8x1xf32, #tpu.memory_space<vmem>>, vector<8x1xf32>
    %1 = vector.shape_cast %0 : vector<8x1xf32> to vector<1x8x1xf32>
    %c0_1 = arith.constant 0 : index
    %c0_2 = arith.constant 0 : index
    %2 = vector.load %arg4[%c0_1, %c0_2] : memref<8x1xf32, #tpu.memory_space<vmem>>, vector<8x1xf32>
    %3 = vector.shape_cast %2 : vector<8x1xf32> to vector<1x8x1xf32>
    %c0_3 = arith.constant 0 : index
    %c0_4 = arith.constant 0 : index
    %4 = vector.load %arg5[%c0_3, %c0_4] : memref<8x1xf32, #tpu.memory_space<vmem>>, vector<8x1xf32>
    %5 = vector.shape_cast %4 : vector<8x1xf32> to vector<1x8x1xf32>
    %c0_5 = arith.constant 0 : index
    %c0_6 = arith.constant 0 : index
    %6 = vector.load %arg6[%c0_5, %c0_6] : memref<8x1xf32, #tpu.memory_space<vmem>>, vector<8x1xf32>
    %7 = vector.shape_cast %6 : vector<8x1xf32> to vector<1x8x1xf32>
    %c0_7 = arith.constant 0 : index
    %c0_8 = arith.constant 0 : index
    %c0_9 = arith.constant 0 : index
    %8 = vector.load %arg1[%c0_7, %c0_8, %c0_9] : memref<1x8x64xbf16, #tpu.memory_space<vmem>>, vector<1x8x64xbf16>
    %9 = arith.extf %8 : vector<1x8x64xbf16> to vector<1x8x64xf32>
    %10 = vector.broadcast %1 : vector<1x8x1xf32> to vector<1x8x64xf32>
    %11 = arith.mulf %9, %10 : vector<1x8x64xf32>
    %12 = vector.broadcast %3 : vector<1x8x1xf32> to vector<1x8x64xf32>
    %13 = arith.addf %11, %12 : vector<1x8x64xf32>
    %c0_10 = arith.constant 0 : index
    %c0_11 = arith.constant 0 : index
    %c0_12 = arith.constant 0 : index
    %14 = vector.load %arg2[%c0_10, %c0_11, %c0_12] : memref<1x8x64xbf16, #tpu.memory_space<vmem>>, vector<1x8x64xbf16>
    %15 = arith.extf %14 : vector<1x8x64xbf16> to vector<1x8x64xf32>
    %16 = vector.broadcast %5 : vector<1x8x1xf32> to vector<1x8x64xf32>
    %17 = arith.mulf %15, %16 : vector<1x8x64xf32>
    %18 = vector.broadcast %7 : vector<1x8x1xf32> to vector<1x8x64xf32>
    %19 = arith.addf %17, %18 : vector<1x8x64xf32>
    %20 = arith.addf %13, %19 : vector<1x8x64xf32>
    %cst = arith.constant 0.000000e+00 : f32
    %21 = vector.broadcast %cst : f32 to vector<1x8x64xf32>
    %22 = arith.maximumf %20, %21 : vector<1x8x64xf32>
    %c0_13 = arith.constant 0 : index
    %c0_14 = arith.constant 0 : index
    %c0_15 = arith.constant 0 : index
    %23 = vector.load %arg7[%c0_13, %c0_14, %c0_15] : memref<1x8x64xf32, #tpu.memory_space<vmem>>, vector<1x8x64xf32>
    tpu.vector_store %arg7[%c0_13, %c0_14, %c0_15], %22 {strides = array<i32>} : memref<1x8x64xf32, #tpu.memory_space<vmem>>, vector<1x8x64xf32>,
    return
  }
  func.func @transform_0(%arg0: i32) -> (i32, i32, i32) {
    %c0_i32 = arith.constant 0 : i32
    %c0_i32_0 = arith.constant 0 : i32
    %c0_i32_1 = arith.constant 0 : i32
    return %arg0, %c0_i32, %c0_i32_0 : i32, i32, i32
  }
  func.func @transform_1(%arg0: i32) -> (i32, i32, i32) {
    %c0_i32 = arith.constant 0 : i32
    %c0_i32_0 = arith.constant 0 : i32
    %c0_i32_1 = arith.constant 0 : i32
    return %arg0, %c0_i32, %c0_i32_0 : i32, i32, i32
  }
  func.func @transform_2(%arg0: i32) -> (i32, i32) {
    %c0_i32 = arith.constant 0 : i32
    %c0_i32_0 = arith.constant 0 : i32
    %c0_i32_1 = arith.constant 0 : i32
    return %c0_i32, %c0_i32_0 : i32, i32
  }
  func.func @transform_3(%arg0: i32) -> (i32, i32) {
    %c0_i32 = arith.constant 0 : i32
    %c0_i32_0 = arith.constant 0 : i32
    %c0_i32_1 = arith.constant 0 : i32
    return %c0_i32, %c0_i32_0 : i32, i32
  }
  func.func @transform_4(%arg0: i32) -> (i32, i32) {
    %c0_i32 = arith.constant 0 : i32
    %c0_i32_0 = arith.constant 0 : i32
    %c0_i32_1 = arith.constant 0 : i32
    return %c0_i32, %c0_i32_0 : i32, i32
  }
  func.func @transform_5(%arg0: i32) -> (i32, i32) {
    %c0_i32 = arith.constant 0 : i32
    %c0_i32_0 = arith.constant 0 : i32
    %c0_i32_1 = arith.constant 0 : i32
    return %c0_i32, %c0_i32_0 : i32, i32
  }
  func.func @transform_6(%arg0: i32) -> (i32, i32, i32) {
    %c0_i32 = arith.constant 0 : i32
    %c0_i32_0 = arith.constant 0 : i32
    %c0_i32_1 = arith.constant 0 : i32
    return %arg0, %c0_i32, %c0_i32_0 : i32, i32, i32
  }
}

</mosaic_0001>

<llo_original>
// kernel: cifar_residual_block.5
$region0: #{cifar_residual_block.5}
  #allocation0 [shape = 'u32[]', space=smem, size = 0x4, offset = 0x4, fixed_abs, tag = 'smem constant byte address 0x4 - core index']
  #allocation1 [shape = 'u32[144,128]{1,0:T(1,128)}', space=vmem, size = 0x12000, scoped, tag = 'internal scratch']
  %s0 = inlined_call_operand.vmem [shape: bf16[2,8,64], index: 0, kind: input, shape index: {}]
  %s1 = inlined_call_operand.vmem [shape: bf16[2,8,64], index: 1, kind: input, shape index: {}]
  %s2 = inlined_call_operand.vmem [shape: f32[8,1], index: 2, kind: input, shape index: {}]
  %s3 = inlined_call_operand.vmem [shape: f32[8,1], index: 3, kind: input, shape index: {}]
  %s4 = inlined_call_operand.vmem [shape: f32[8,1], index: 4, kind: input, shape index: {}]
  %s5 = inlined_call_operand.vmem [shape: f32[8,1], index: 5, kind: input, shape index: {}]
  %s6 = inlined_call_operand.vmem [shape: f32[2,8,64], index: 6, kind: output, shape index: {}]
  %s7 = sld [smem:[#allocation0]]
  $region57: #{cifar_residual_block.5} parent=0
    _
  %s9 = ssub.s32 1, %s7
  %s10 = scalar_select 0, %s9, %s7
  loop: start=0, step=1, limit=4
  $region2: #{cifar_residual_block.5} parent=0 // loop_pre_header
    _
  $region3: #{cifar_residual_block.5} parent=0 // loop_header
    %s12 = sphi 0, %s16
    %p13 = scmp.ge.s32.totalorder %s12, 4
    %s22 = sphi 0, %s24
    %s25 = sphi 0, %s22
    %s26 = sphi 0, %s25
    %s42 = sphi 0, %s26
    %s48 = sphi 0, %s50
    %s51 = sphi 0, %s48
    %s52 = sphi 0, %s51
    %s68 = sphi 0, %s52
    %s72 = sphi 0, %s72
    %s74 = sphi 0, %s72
    %s75 = sphi 0, %s74
    %s89 = sphi 0, %s75
    %s93 = sphi 0, %s93
    %s95 = sphi 0, %s93
    %s96 = sphi 0, %s95
    %s110 = sphi 0, %s96
    %s114 = sphi 0, %s114
    %s116 = sphi 0, %s114
    %s117 = sphi 0, %s116
    %s131 = sphi 0, %s117
    %s135 = sphi 0, %s135
    %s137 = sphi 0, %s135
    %s138 = sphi 0, %s137
    %s152 = sphi 0, %s138
    %s158 = sphi 0, %s160
    %s161 = sphi 0, %s158
    %s162 = sphi 0, %s161
    %s178 = sphi 0, %s162
  $region4: #{cifar_residual_block.5} parent=0 // loop_header_branch
    %15 = sbr.rel (%p13) target = $region8
  $region5: #{cifar_residual_block.5} parent=0 // loop_body
    %s17 = ssub.s32 %s12, 1
    %s18 = ssub.s32 %s12, 2
    %s19 = sadd.s32 %s12, 1
    %s20 = ssub.s32 %s12, %s19
    %p21 = scmp.eq.s32.totalorder %s20, 0
    %s23 = sadd.s32 %s22, 1
    %s24 = scalar_select %p21, %s22, %s23
    %p27 = pneg %p21
    %p28 = scmp.eq.s32.totalorder %s12, 1
    %p29 = por %p27, %p28
    %p30 = scmp.ne.s32.totalorder %s22, %s25
    %p31 = scmp.eq.s32.totalorder %s12, 0
    %p32 = por %p30, %p31
    %p33 = scmp.ne.s32.totalorder %s22, %s25
    %p34 = scmp.eq.s32.totalorder %s17, 1
    %p35 = por %p33, %p34
    %p36 = scmp.ne.s32.totalorder %s25, %s26
    %p37 = scmp.eq.s32.totalorder %s17, 0
    %p38 = por %p36, %p37
    %p39 = scmp.ne.s32.totalorder %s25, %s26
    %p40 = scmp.eq.s32.totalorder %s18, 1
    %p41 = por %p39, %p40
    %p43 = scmp.ne.s32.totalorder %s26, %s42
    %p44 = scmp.eq.s32.totalorder %s18, 0
    %p45 = por %p43, %p44
    %s46 = ssub.s32 %s12, %s19
    %p47 = scmp.eq.s32.totalorder %s46, 0
    %s49 = sadd.s32 %s48, 1
    %s50 = scalar_select %p47, %s48, %s49
    %p53 = pneg %p47
    %p54 = scmp.eq.s32.totalorder %s12, 1
    %p55 = por %p53, %p54
    %p56 = scmp.ne.s32.totalorder %s48, %s51
    %p57 = scmp.eq.s32.totalorder %s12, 0
    %p58 = por %p56, %p57
    %p59 = scmp.ne.s32.totalorder %s48, %s51
    %p60 = scmp.eq.s32.totalorder %s17, 1
    %p61 = por %p59, %p60
    %p62 = scmp.ne.s32.totalorder %s51, %s52
    %p63 = scmp.eq.s32.totalorder %s17, 0
    %p64 = por %p62, %p63
    %p65 = scmp.ne.s32.totalorder %s51, %s52
    %p66 = scmp.eq.s32.totalorder %s18, 1
    %p67 = por %p65, %p66
    %p69 = scmp.ne.s32.totalorder %s52, %s68
    %p70 = scmp.eq.s32.totalorder %s18, 0
    %p71 = por %p69, %p70
    %s73 = sadd.s32 %s72, 1
    %p76 = scmp.eq.s32.totalorder %s12, 1
    %p77 = scmp.ne.s32.totalorder %s72, %s74
    %p78 = scmp.eq.s32.totalorder %s12, 0
    %p79 = por %p77, %p78
    %p80 = scmp.ne.s32.totalorder %s72, %s74
    %p81 = scmp.eq.s32.totalorder %s17, 1
    %p82 = por %p80, %p81
    %p83 = scmp.ne.s32.totalorder %s74, %s75
    %p84 = scmp.eq.s32.totalorder %s17, 0
    %p85 = por %p83, %p84
    %p86 = scmp.ne.s32.totalorder %s74, %s75
    %p87 = scmp.eq.s32.totalorder %s18, 1
    %p88 = por %p86, %p87
    %p90 = scmp.ne.s32.totalorder %s75, %s89
    %p91 = scmp.eq.s32.totalorder %s18, 0
    %p92 = por %p90, %p91
    %s94 = sadd.s32 %s93, 1
    %p97 = scmp.eq.s32.totalorder %s12, 1
    %p98 = scmp.ne.s32.totalorder %s93, %s95
    %p99 = scmp.eq.s32.totalorder %s12, 0
    %p100 = por %p98, %p99
    %p101 = scmp.ne.s32.totalorder %s93, %s95
    %p102 = scmp.eq.s32.totalorder %s17, 1
    %p103 = por %p101, %p102
    %p104 = scmp.ne.s32.totalorder %s95, %s96
    %p105 = scmp.eq.s32.totalorder %s17, 0
    %p106 = por %p104, %p105
    %p107 = scmp.ne.s32.totalorder %s95, %s96
    %p108 = scmp.eq.s32.totalorder %s18, 1
    %p109 = por %p107, %p108
    %p111 = scmp.ne.s32.totalorder %s96, %s110
    %p112 = scmp.eq.s32.totalorder %s18, 0
    %p113 = por %p111, %p112
    %s115 = sadd.s32 %s114, 1
    %p118 = scmp.eq.s32.totalorder %s12, 1
    %p119 = scmp.ne.s32.totalorder %s114, %s116
    %p120 = scmp.eq.s32.totalorder %s12, 0
    %p121 = por %p119, %p120
    %p122 = scmp.ne.s32.totalorder %s114, %s116
    %p123 = scmp.eq.s32.totalorder %s17, 1
    %p124 = por %p122, %p123
    %p125 = scmp.ne.s32.totalorder %s116, %s117
    %p126 = scmp.eq.s32.totalorder %s17, 0
    %p127 = por %p125, %p126
    %p128 = scmp.ne.s32.totalorder %s116, %s117
    %p129 = scmp.eq.s32.totalorder %s18, 1
    %p130 = por %p128, %p129
    %p132 = scmp.ne.s32.totalorder %s117, %s131
    %p133 = scmp.eq.s32.totalorder %s18, 0
    %p134 = por %p132, %p133
    %s136 = sadd.s32 %s135, 1
    %p139 = scmp.eq.s32.totalorder %s12, 1
    %p140 = scmp.ne.s32.totalorder %s135, %s137
    %p141 = scmp.eq.s32.totalorder %s12, 0
    %p142 = por %p140, %p141
    %p143 = scmp.ne.s32.totalorder %s135, %s137
    %p144 = scmp.eq.s32.totalorder %s17, 1
    %p145 = por %p143, %p144
    %p146 = scmp.ne.s32.totalorder %s137, %s138
    %p147 = scmp.eq.s32.totalorder %s17, 0
    %p148 = por %p146, %p147
    %p149 = scmp.ne.s32.totalorder %s137, %s138
    %p150 = scmp.eq.s32.totalorder %s18, 1
    %p151 = por %p149, %p150
    %p153 = scmp.ne.s32.totalorder %s138, %s152
    %p154 = scmp.eq.s32.totalorder %s18, 0
    %p155 = por %p153, %p154
    %s156 = ssub.s32 %s12, %s19
    %p157 = scmp.eq.s32.totalorder %s156, 0
    %s159 = sadd.s32 %s158, 1
    %s160 = scalar_select %p157, %s158, %s159
    %p163 = pneg %p157
    %p164 = scmp.eq.s32.totalorder %s12, 1
    %p165 = por %p163, %p164
    %p166 = scmp.ne.s32.totalorder %s158, %s161
    %p167 = scmp.eq.s32.totalorder %s12, 0
    %p168 = por %p166, %p167
    %p169 = scmp.ne.s32.totalorder %s158, %s161
    %p170 = scmp.eq.s32.totalorder %s17, 1
    %p171 = por %p169, %p170
    %p172 = scmp.ne.s32.totalorder %s161, %s162
    %p173 = scmp.eq.s32.totalorder %s17, 0
    %p174 = por %p172, %p173
    %p175 = scmp.ne.s32.totalorder %s161, %s162
    %p176 = scmp.eq.s32.totalorder %s18, 1
    %p177 = por %p175, %p176
    %p179 = scmp.ne.s32.totalorder %s162, %s178
    %p180 = scmp.eq.s32.totalorder %s18, 0
    %p181 = por %p179, %p180
    %p182 = scmp.le.s32.totalorder 1, %s12
    %p183 = scmp.lt.s32.totalorder %s12, 3
    %p184 = pnand %p182, %p183
    %p185 = pneg %p184
    // Predicated region
    $region9: #{cifar_residual_block.5} parent=5 // pred_check
      _
    $region10: #{cifar_residual_block.5} parent=5 // pred_check_branch
      %187 = sbr.rel (%p184) target = $region12
    $region11: #{cifar_residual_block.5} parent=5 // pred_region
      %s188 = ssub.s32 %s12, 1
      // Predicated region
      $region13: #{cifar_residual_block.5} parent=11 // pred_check
        %p189 = pneg %p85
      $region14: #{cifar_residual_block.5} parent=11 // pred_check_branch
        %191 = sbr.rel (%p189) target = $region16
      $region15: #{cifar_residual_block.5} parent=11 // pred_region
        _
      $region16: #{cifar_residual_block.5} parent=11 // pred_fallthru
        _
      // Predicated region
      $region17: #{cifar_residual_block.5} parent=11 // pred_check
        %p192 = pneg %p106
      $region18: #{cifar_residual_block.5} parent=11 // pred_check_branch
        %194 = sbr.rel (%p192) target = $region20
      $region19: #{cifar_residual_block.5} parent=11 // pred_region
        _
      $region20: #{cifar_residual_block.5} parent=11 // pred_fallthru
        _
      // Predicated region
      $region21: #{cifar_residual_block.5} parent=11 // pred_check
        %p195 = pneg %p127
      $region22: #{cifar_residual_block.5} parent=11 // pred_check_branch
        %197 = sbr.rel (%p195) target = $region24
      $region23: #{cifar_residual_block.5} parent=11 // pred_region
        _
      $region24: #{cifar_residual_block.5} parent=11 // pred_fallthru
        _
      // Predicated region
      $region25: #{cifar_residual_block.5} parent=11 // pred_check
        %p198 = pneg %p148
      $region26: #{cifar_residual_block.5} parent=11 // pred_check_branch
        %200 = sbr.rel (%p198) target = $region28
      $region27: #{cifar_residual_block.5} parent=11 // pred_region
        _
      $region28: #{cifar_residual_block.5} parent=11 // pred_fallthru
        _
    $region12: #{cifar_residual_block.5} parent=5 // pred_fallthru
      _
    %p201 = scmp.lt.s32.totalorder %s12, 2
    // Predicated region
    $region29: #{cifar_residual_block.5} parent=5 // pred_check
      %p202 = pneg %p201
    $region30: #{cifar_residual_block.5} parent=5 // pred_check_branch
      %204 = sbr.rel (%p202) target = $region32
    $region31: #{cifar_residual_block.5} parent=5 // pred_region
      // Predicated region
      $region33: #{cifar_residual_block.5} parent=31 // pred_check
        %p205 = pneg %p32
      $region34: #{cifar_residual_block.5} parent=31 // pred_check_branch
        %207 = sbr.rel (%p205) target = $region36
      $region35: #{cifar_residual_block.5} parent=31 // pred_region
        %p208 = scmp.lt.s32.totalorder %s12, 1
        %s209 = scalar_select %p208, %s12, 1
        %s210 = smul.addr %s209, 4
        %s211 = scalar_lea.vmem %s0, %s210
      $region36: #{cifar_residual_block.5} parent=31 // pred_fallthru
        _
      // Predicated region
      $region37: #{cifar_residual_block.5} parent=31 // pred_check
        %p212 = pneg %p58
      $region38: #{cifar_residual_block.5} parent=31 // pred_check_branch
        %214 = sbr.rel (%p212) target = $region40
      $region39: #{cifar_residual_block.5} parent=31 // pred_region
        %p215 = scmp.lt.s32.totalorder %s12, 1
        %s216 = scalar_select %p215, %s12, 1
        %s217 = smul.addr %s216, 4
        %s218 = scalar_lea.vmem %s1, %s217
      $region40: #{cifar_residual_block.5} parent=31 // pred_fallthru
        _
    $region32: #{cifar_residual_block.5} parent=5 // pred_fallthru
      _
    %p219 = scmp.le.s32.totalorder 1, %s12
    %p220 = scmp.lt.s32.totalorder %s12, 3
    %p221 = pnand %p219, %p220
    %p222 = pneg %p221
    // Predicated region
    $region41: #{cifar_residual_block.5} parent=5 // pred_check
      _
    $region42: #{cifar_residual_block.5} parent=5 // pred_check_branch
      %224 = sbr.rel (%p221) target = $region44
    $region43: #{cifar_residual_block.5} parent=5 // pred_region
      %s225 = ssub.s32 %s12, 1
      %p226 = scmp.lt.s32.totalorder %s17, 1
      %s227 = scalar_select %p226, %s17, 1
      %s228 = smul.addr %s227, 4
      %s229 = scalar_lea.vmem %s0, %s228
      %p230 = pneg %p38
      %p231 = pneg %p35
      %p232 = scmp.lt.s32.totalorder %s17, 1
      %s233 = scalar_select %p232, %s17, 1
      %s234 = smul.addr %s233, 4
      %s235 = scalar_lea.vmem %s1, %s234
      %p236 = pneg %p64
      %p237 = pneg %p61
      %p238 = pneg %p85
      %p239 = pneg %p82
      %p240 = pneg %p106
      %p241 = pneg %p103
      %p242 = pneg %p127
      %p243 = pneg %p124
      %p244 = pneg %p148
      %p245 = pneg %p145
      %p246 = pneg %p174
      %p247 = pneg %p171
      %p248 = scmp.lt.s32.totalorder %s17, 1
      %s249 = scalar_select %p248, %s17, 1
      %s250 = smul.addr %s249, 8
      %s251 = scalar_lea.vmem %s6, %s250
      %p252 = scmp.lt.s32.totalorder %s17, 1
      %s253 = scalar_select %p252, %s17, 1
      %s254 = smul.addr %s253, 4
      %s255 = scalar_lea.vmem %s0, %s254
      %p256 = scmp.lt.s32.totalorder %s17, 1
      %s257 = scalar_select %p256, %s17, 1
      %s258 = smul.addr %s257, 4
      %s259 = scalar_lea.vmem %s1, %s258
      %p260 = scmp.lt.s32.totalorder %s17, 1
      %s261 = scalar_select %p260, %s17, 1
      %s262 = smul.addr %s261, 8
      %s263 = scalar_lea.vmem %s6, %s262
      %v264 = vld [vmem:[%s2] sm:$0xff]
      %v265 = vld [vmem:[%s3] sm:$0xff]
      %v266 = vld [vmem:[%s4] sm:$0xff]
      %v267 = vld [vmem:[%s5] sm:$0xff]
      %v268 = vld [vmem:[%s255] sm:$0xf]
      %v269 = vunpack.c.l.bf16 %v268
      %271 = vset.pattern.permute.xlu0 0
      %272 = vperm.xlu0 %271, %v264
      %v273 = vpop.permute.xlu0 %272
      %v275 = vmul.f32 %v269, %v273
      %277 = vset.pattern.permute.xlu0 0
      %278 = vperm.xlu0 %277, %v265
      %v279 = vpop.permute.xlu0 %278
      %v281 = vadd.f32 %v275, %v279
      %v282 = vld [vmem:[%s259] sm:$0xf]
      %v283 = vunpack.c.l.bf16 %v282
      %285 = vset.pattern.permute.xlu0 0
      %286 = vperm.xlu0 %285, %v266
      %v287 = vpop.permute.xlu0 %286
      %v289 = vmul.f32 %v283, %v287
      %291 = vset.pattern.permute.xlu0 0
      %292 = vperm.xlu0 %291, %v267
      %v293 = vpop.permute.xlu0 %292
      %v295 = vadd.f32 %v289, %v293
      %v296 = vadd.f32 %v281, %v295
      %v297 = vmax.f32 %v296, 0.0
      %vm298 = vcmask 523264
      %299 = vst.msk [vmem:[%s263] sm:$0xff] %vm298, %v297
      %p300 = scmp.lt.s32.totalorder %s17, 1
      %s301 = scalar_select %p300, %s17, 1
      %s302 = smul.addr %s301, 8
      %s303 = scalar_lea.vmem %s6, %s302
      // Predicated region
      $region45: #{cifar_residual_block.5} parent=43 // pred_check
        %p304 = pneg %p171
      $region46: #{cifar_residual_block.5} parent=43 // pred_check_branch
        %306 = sbr.rel (%p304) target = $region48
      $region47: #{cifar_residual_block.5} parent=43 // pred_region
        _
      $region48: #{cifar_residual_block.5} parent=43 // pred_fallthru
        _
    $region44: #{cifar_residual_block.5} parent=5 // pred_fallthru
      _
    %p307 = scmp.le.s32.totalorder 2, %s12
    // Predicated region
    $region49: #{cifar_residual_block.5} parent=5 // pred_check
      %p308 = pneg %p307
    $region50: #{cifar_residual_block.5} parent=5 // pred_check_branch
      %310 = sbr.rel (%p308) target = $region52
    $region51: #{cifar_residual_block.5} parent=5 // pred_region
      %s311 = ssub.s32 %s12, 2
      // Predicated region
      $region53: #{cifar_residual_block.5} parent=51 // pred_check
        %p312 = pneg %p177
      $region54: #{cifar_residual_block.5} parent=51 // pred_check_branch
        %314 = sbr.rel (%p312) target = $region56
      $region55: #{cifar_residual_block.5} parent=51 // pred_region
        %p315 = scmp.lt.s32.totalorder %s18, 1
        %s316 = scalar_select %p315, %s18, 1
        %s317 = smul.addr %s316, 8
        %s318 = scalar_lea.vmem %s6, %s317
      $region56: #{cifar_residual_block.5} parent=51 // pred_fallthru
        _
    $region52: #{cifar_residual_block.5} parent=5 // pred_fallthru
      _
  $region6: #{cifar_residual_block.5} parent=0 // loop_footer
    %s16 = sadd.s32 1, %s12
  $region7: #{cifar_residual_block.5} parent=0 // loop_footer_branch
    %11 = sbr.rel target = $region3
  $region8: #{cifar_residual_block.5} parent=0 // loop_exit
    _

// kernel: cifar_residual_block.3
$region0: #{cifar_residual_block.3}
  #allocation0 [shape = 'u32[]', space=smem, size = 0x4, offset = 0x4, fixed_abs, tag = 'smem constant byte address 0x4 - core index']
  #allocation1 [shape = 'u32[144,128]{1,0:T(1,128)}', space=vmem, size = 0x12000, scoped, tag = 'internal scratch']
  #allocation2 [shape = 'bf16[8,8,36]{2,1,0:T(8,128)(2,1)}', space=vmem, size = 0x4000, scoped, tag = 'scratch operand']
  %s0 = inlined_call_operand.vmem [shape: bf16[8,9,9,4], index: 0, kind: input, shape index: {}]
  %s1 = inlined_call_operand.vmem [shape: bf16[36,8], index: 1, kind: input, shape index: {}]
  %s2 = inlined_call_operand.vmem [shape: bf16[4,8], index: 2, kind: input, shape index: {}]
  %s3 = inlined_call_operand.vmem [shape: bf16[2,8,64], index: 3, kind: output, shape index: {0}]
  %s4 = inlined_call_operand.vmem [shape: bf16[2,8,64], index: 4, kind: output, shape index: {1}]
  %s5 = inlined_call_operand.vmem [shape: f32[2,4,8], index: 5, kind: output, shape index: {2}]
  %6 = xla_tuple %s3, %s4, %s5
  %s7 = sld [smem:[#allocation0]]
  $region61: #{cifar_residual_block.3} parent=0
    _
  %s9 = ssub.s32 1, %s7
  %s10 = scalar_select 0, %s9, %s7
  loop: start=0, step=1, limit=4
  $region2: #{cifar_residual_block.3} parent=0 // loop_pre_header
    _
  $region3: #{cifar_residual_block.3} parent=0 // loop_header
    %s12 = sphi 0, %s16
    %p13 = scmp.ge.s32.totalorder %s12, 4
    %s22 = sphi 0, %s24
    %s25 = sphi 0, %s22
    %s26 = sphi 0, %s25
    %s42 = sphi 0, %s26
    %s46 = sphi 0, %s46
    %s48 = sphi 0, %s46
    %s49 = sphi 0, %s48
    %s63 = sphi 0, %s49
    %s67 = sphi 0, %s67
    %s69 = sphi 0, %s67
    %s70 = sphi 0, %s69
    %s84 = sphi 0, %s70
    %s90 = sphi 0, %s92
    %s93 = sphi 0, %s90
    %s94 = sphi 0, %s93
    %s110 = sphi 0, %s94
    %s116 = sphi 0, %s118
    %s119 = sphi 0, %s116
    %s120 = sphi 0, %s119
    %s136 = sphi 0, %s120
    %s142 = sphi 0, %s144
    %s145 = sphi 0, %s142
    %s146 = sphi 0, %s145
    %s162 = sphi 0, %s146
  $region4: #{cifar_residual_block.3} parent=0 // loop_header_branch
    %15 = sbr.rel (%p13) target = $region8
  $region5: #{cifar_residual_block.3} parent=0 // loop_body
    %s17 = ssub.s32 %s12, 1
    %s18 = ssub.s32 %s12, 2
    %s19 = sadd.s32 %s12, 1
    %s20 = ssub.s32 %s12, %s19
    %p21 = scmp.eq.s32.totalorder %s20, 0
    %s23 = sadd.s32 %s22, 1
    %s24 = scalar_select %p21, %s22, %s23
    %p27 = pneg %p21
    %p28 = scmp.eq.s32.totalorder %s12, 1
    %p29 = por %p27, %p28
    %p30 = scmp.ne.s32.totalorder %s22, %s25
    %p31 = scmp.eq.s32.totalorder %s12, 0
    %p32 = por %p30, %p31
    %p33 = scmp.ne.s32.totalorder %s22, %s25
    %p34 = scmp.eq.s32.totalorder %s17, 1
    %p35 = por %p33, %p34
    %p36 = scmp.ne.s32.totalorder %s25, %s26
    %p37 = scmp.eq.s32.totalorder %s17, 0
    %p38 = por %p36, %p37
    %p39 = scmp.ne.s32.totalorder %s25, %s26
    %p40 = scmp.eq.s32.totalorder %s18, 1
    %p41 = por %p39, %p40
    %p43 = scmp.ne.s32.totalorder %s26, %s42
    %p44 = scmp.eq.s32.totalorder %s18, 0
    %p45 = por %p43, %p44
    %s47 = sadd.s32 %s46, 1
    %p50 = scmp.eq.s32.totalorder %s12, 1
    %p51 = scmp.ne.s32.totalorder %s46, %s48
    %p52 = scmp.eq.s32.totalorder %s12, 0
    %p53 = por %p51, %p52
    %p54 = scmp.ne.s32.totalorder %s46, %s48
    %p55 = scmp.eq.s32.totalorder %s17, 1
    %p56 = por %p54, %p55
    %p57 = scmp.ne.s32.totalorder %s48, %s49
    %p58 = scmp.eq.s32.totalorder %s17, 0
    %p59 = por %p57, %p58
    %p60 = scmp.ne.s32.totalorder %s48, %s49
    %p61 = scmp.eq.s32.totalorder %s18, 1
    %p62 = por %p60, %p61
    %p64 = scmp.ne.s32.totalorder %s49, %s63
    %p65 = scmp.eq.s32.totalorder %s18, 0
    %p66 = por %p64, %p65
    %s68 = sadd.s32 %s67, 1
    %p71 = scmp.eq.s32.totalorder %s12, 1
    %p72 = scmp.ne.s32.totalorder %s67, %s69
    %p73 = scmp.eq.s32.totalorder %s12, 0
    %p74 = por %p72, %p73
    %p75 = scmp.ne.s32.totalorder %s67, %s69
    %p76 = scmp.eq.s32.totalorder %s17, 1
    %p77 = por %p75, %p76
    %p78 = scmp.ne.s32.totalorder %s69, %s70
    %p79 = scmp.eq.s32.totalorder %s17, 0
    %p80 = por %p78, %p79
    %p81 = scmp.ne.s32.totalorder %s69, %s70
    %p82 = scmp.eq.s32.totalorder %s18, 1
    %p83 = por %p81, %p82
    %p85 = scmp.ne.s32.totalorder %s70, %s84
    %p86 = scmp.eq.s32.totalorder %s18, 0
    %p87 = por %p85, %p86
    %s88 = ssub.s32 %s12, %s19
    %p89 = scmp.eq.s32.totalorder %s88, 0
    %s91 = sadd.s32 %s90, 1
    %s92 = scalar_select %p89, %s90, %s91
    %p95 = pneg %p89
    %p96 = scmp.eq.s32.totalorder %s12, 1
    %p97 = por %p95, %p96
    %p98 = scmp.ne.s32.totalorder %s90, %s93
    %p99 = scmp.eq.s32.totalorder %s12, 0
    %p100 = por %p98, %p99
    %p101 = scmp.ne.s32.totalorder %s90, %s93
    %p102 = scmp.eq.s32.totalorder %s17, 1
    %p103 = por %p101, %p102
    %p104 = scmp.ne.s32.totalorder %s93, %s94
    %p105 = scmp.eq.s32.totalorder %s17, 0
    %p106 = por %p104, %p105
    %p107 = scmp.ne.s32.totalorder %s93, %s94
    %p108 = scmp.eq.s32.totalorder %s18, 1
    %p109 = por %p107, %p108
    %p111 = scmp.ne.s32.totalorder %s94, %s110
    %p112 = scmp.eq.s32.totalorder %s18, 0
    %p113 = por %p111, %p112
    %s114 = ssub.s32 %s12, %s19
    %p115 = scmp.eq.s32.totalorder %s114, 0
    %s117 = sadd.s32 %s116, 1
    %s118 = scalar_select %p115, %s116, %s117
    %p121 = pneg %p115
    %p122 = scmp.eq.s32.totalorder %s12, 1
    %p123 = por %p121, %p122
    %p124 = scmp.ne.s32.totalorder %s116, %s119
    %p125 = scmp.eq.s32.totalorder %s12, 0
    %p126 = por %p124, %p125
    %p127 = scmp.ne.s32.totalorder %s116, %s119
    %p128 = scmp.eq.s32.totalorder %s17, 1
    %p129 = por %p127, %p128
    %p130 = scmp.ne.s32.totalorder %s119, %s120
    %p131 = scmp.eq.s32.totalorder %s17, 0
    %p132 = por %p130, %p131
    %p133 = scmp.ne.s32.totalorder %s119, %s120
    %p134 = scmp.eq.s32.totalorder %s18, 1
    %p135 = por %p133, %p134
    %p137 = scmp.ne.s32.totalorder %s120, %s136
    %p138 = scmp.eq.s32.totalorder %s18, 0
    %p139 = por %p137, %p138
    %s140 = ssub.s32 %s12, %s19
    %p141 = scmp.eq.s32.totalorder %s140, 0
    %s143 = sadd.s32 %s142, 1
    %s144 = scalar_select %p141, %s142, %s143
    %p147 = pneg %p141
    %p148 = scmp.eq.s32.totalorder %s12, 1
    %p149 = por %p147, %p148
    %p150 = scmp.ne.s32.totalorder %s142, %s145
    %p151 = scmp.eq.s32.totalorder %s12, 0
    %p152 = por %p150, %p151
    %p153 = scmp.ne.s32.totalorder %s142, %s145
    %p154 = scmp.eq.s32.totalorder %s17, 1
    %p155 = por %p153, %p154
    %p156 = scmp.ne.s32.totalorder %s145, %s146
    %p157 = scmp.eq.s32.totalorder %s17, 0
    %p158 = por %p156, %p157
    %p159 = scmp.ne.s32.totalorder %s145, %s146
    %p160 = scmp.eq.s32.totalorder %s18, 1
    %p161 = por %p159, %p160
    %p163 = scmp.ne.s32.totalorder %s146, %s162
    %p164 = scmp.eq.s32.totalorder %s18, 0
    %p165 = por %p163, %p164
    %p166 = scmp.le.s32.totalorder 1, %s12
    %p167 = scmp.lt.s32.totalorder %s12, 3
    %p168 = pnand %p166, %p167
    %p169 = pneg %p168
    // Predicated region
    $region9: #{cifar_residual_block.3} parent=5 // pred_check
      _
    $region10: #{cifar_residual_block.3} parent=5 // pred_check_branch
      %171 = sbr.rel (%p168) target = $region12
    $region11: #{cifar_residual_block.3} parent=5 // pred_region
      %s172 = ssub.s32 %s12, 1
      // Predicated region
      $region13: #{cifar_residual_block.3} parent=11 // pred_check
        %p173 = pneg %p59
      $region14: #{cifar_residual_block.3} parent=11 // pred_check_branch
        %175 = sbr.rel (%p173) target = $region16
      $region15: #{cifar_residual_block.3} parent=11 // pred_region
        _
      $region16: #{cifar_residual_block.3} parent=11 // pred_fallthru
        _
      // Predicated region
      $region17: #{cifar_residual_block.3} parent=11 // pred_check
        %p176 = pneg %p80
      $region18: #{cifar_residual_block.3} parent=11 // pred_check_branch
        %178 = sbr.rel (%p176) target = $region20
      $region19: #{cifar_residual_block.3} parent=11 // pred_region
        _
      $region20: #{cifar_residual_block.3} parent=11 // pred_fallthru
        _
    $region12: #{cifar_residual_block.3} parent=5 // pred_fallthru
      _
    %p179 = scmp.lt.s32.totalorder %s12, 2
    // Predicated region
    $region21: #{cifar_residual_block.3} parent=5 // pred_check
      %p180 = pneg %p179
    $region22: #{cifar_residual_block.3} parent=5 // pred_check_branch
      %182 = sbr.rel (%p180) target = $region24
    $region23: #{cifar_residual_block.3} parent=5 // pred_region
      // Predicated region
      $region25: #{cifar_residual_block.3} parent=23 // pred_check
        %p183 = pneg %p32
      $region26: #{cifar_residual_block.3} parent=23 // pred_check_branch
        %185 = sbr.rel (%p183) target = $region28
      $region27: #{cifar_residual_block.3} parent=23 // pred_region
        %s186 = smul.u32 4, %s12
        %p187 = scmp.lt.s32.totalorder %s186, 7
        %s188 = scalar_select %p187, %s186, 7
        %s189 = smul.addr %s188, 18
        %s190 = smul.addr %s189, 4
        %s191 = scalar_lea.vmem %s0, %s190
        %s192 = smul.u32 4, %s12
      $region28: #{cifar_residual_block.3} parent=23 // pred_fallthru
        _
    $region24: #{cifar_residual_block.3} parent=5 // pred_fallthru
      _
    %p193 = scmp.le.s32.totalorder 1, %s12
    %p194 = scmp.lt.s32.totalorder %s12, 3
    %p195 = pnand %p193, %p194
    %p196 = pneg %p195
    // Predicated region
    $region29: #{cifar_residual_block.3} parent=5 // pred_check
      _
    $region30: #{cifar_residual_block.3} parent=5 // pred_check_branch
      %198 = sbr.rel (%p195) target = $region32
    $region31: #{cifar_residual_block.3} parent=5 // pred_region
      %s199 = ssub.s32 %s12, 1
      %s200 = smul.u32 4, %s17
      %p201 = scmp.lt.s32.totalorder %s200, 7
      %s202 = scalar_select %p201, %s200, 7
      %s203 = smul.addr %s202, 18
      %s204 = smul.addr %s203, 4
      %s205 = scalar_lea.vmem %s0, %s204
      %p206 = pneg %p38
      %p207 = pneg %p35
      %p208 = pneg %p59
      %p209 = pneg %p56
      %p210 = pneg %p80
      %p211 = pneg %p77
      %p212 = pneg %p106
      %p213 = pneg %p103
      %p214 = scmp.lt.s32.totalorder %s17, 1
      %s215 = scalar_select %p214, %s17, 1
      %s216 = smul.addr %s215, 4
      %s217 = scalar_lea.vmem %s3, %s216
      %p218 = pneg %p132
      %p219 = pneg %p129
      %p220 = scmp.lt.s32.totalorder %s17, 1
      %s221 = scalar_select %p220, %s17, 1
      %s222 = smul.addr %s221, 4
      %s223 = scalar_lea.vmem %s4, %s222
      %p224 = pneg %p158
      %p225 = pneg %p155
      %p226 = scmp.lt.s32.totalorder %s17, 1
      %s227 = scalar_select %p226, %s17, 1
      %s228 = smul.addr %s227, 4
      %s229 = scalar_lea.vmem %s5, %s228
      %s230 = smul.u32 4, %s17
      %p231 = scmp.lt.s32.totalorder %s230, 7
      %s232 = scalar_select %p231, %s230, 7
      %s233 = smul.addr %s232, 18
      %s234 = smul.addr %s233, 4
      %s235 = scalar_lea.vmem %s0, %s234
      %s236 = smul.u32 4, %s17
      %p237 = scmp.lt.s32.totalorder %s17, 1
      %s238 = scalar_select %p237, %s17, 1
      %s239 = smul.addr %s238, 4
      %s240 = scalar_lea.vmem %s3, %s239
      %p241 = scmp.lt.s32.totalorder %s17, 1
      %s242 = scalar_select %p241, %s17, 1
      %s243 = smul.addr %s242, 4
      %s244 = scalar_lea.vmem %s4, %s243
      %p245 = scmp.lt.s32.totalorder %s17, 1
      %s246 = scalar_select %p245, %s17, 1
      %s247 = smul.addr %s246, 4
      %s248 = scalar_lea.vmem %s5, %s247
      %v250 = vld [vmem:[%s235] sm:$0xf]
      %v251 = vld [vmem:[%s235 + $0x8] sm:$0xf]
      %v252 = vld [vmem:[%s235 + $0x10] sm:$0xf]
      %v253 = vld [vmem:[%s235 + $0x18] sm:$0xf]
      %v254 = vld [vmem:[%s235 + $0x20] sm:$0xf]
      %v255 = vld [vmem:[%s235 + $0x28] sm:$0xf]
      %v256 = vld [vmem:[%s235 + $0x30] sm:$0xf]
      %v257 = vld [vmem:[%s235 + $0x38] sm:$0xf]
      %vm258 = vcmask 27648
      %259 = vst.msk [vmem:[#allocation2] sm:$0xf] %vm258, %v250
      %260 = vst.msk [vmem:[#allocation2 + $0x4] sm:$0xf] %vm258, %v251
      %261 = vst.msk [vmem:[#allocation2 + $0x8] sm:$0xf] %vm258, %v252
      %262 = vst.msk [vmem:[#allocation2 + $0xc] sm:$0xf] %vm258, %v253
      %263 = vst.msk [vmem:[#allocation2 + $0x10] sm:$0xf] %vm258, %v254
      %264 = vst.msk [vmem:[#allocation2 + $0x14] sm:$0xf] %vm258, %v255
      %265 = vst.msk [vmem:[#allocation2 + $0x18] sm:$0xf] %vm258, %v256
      %266 = vst.msk [vmem:[#allocation2 + $0x1c] sm:$0xf] %vm258, %v257
      %s267 = scalar_lea.vmem %s235, 72
      %v268 = vld [vmem:[%s267] sm:$0xf]
      %v269 = vld [vmem:[%s267 + $0x8] sm:$0xf]
      %v270 = vld [vmem:[%s267 + $0x10] sm:$0xf]
      %v271 = vld [vmem:[%s267 + $0x18] sm:$0xf]
      %v272 = vld [vmem:[%s267 + $0x20] sm:$0xf]
      %v273 = vld [vmem:[%s267 + $0x28] sm:$0xf]
      %v274 = vld [vmem:[%s267 + $0x30] sm:$0xf]
      %v275 = vld [vmem:[%s267 + $0x38] sm:$0xf]
      %284 = vrot.lane.b32.xlu0 %v268, 4
      %v285 = vpop.permute.xlu0 %284
      %286 = vrot.lane.b32.xlu0 %v269, 4
      %v287 = vpop.permute.xlu0 %286
      %288 = vrot.lane.b32.xlu0 %v270, 4
      %v289 = vpop.permute.xlu0 %288
      %290 = vrot.lane.b32.xlu0 %v271, 4
      %v291 = vpop.permute.xlu0 %290
      %292 = vrot.lane.b32.xlu0 %v272, 4
      %v293 = vpop.permute.xlu0 %292
      %294 = vrot.lane.b32.xlu0 %v273, 4
      %v295 = vpop.permute.xlu0 %294
      %296 = vrot.lane.b32.xlu0 %v274, 4
      %v297 = vpop.permute.xlu0 %296
      %298 = vrot.lane.b32.xlu0 %v275, 4
      %v299 = vpop.permute.xlu0 %298
      %vm308 = vcmask 60448
      %309 = vst.msk [vmem:[#allocation2] sm:$0xf] %vm308, %v285
      %310 = vst.msk [vmem:[#allocation2 + $0x4] sm:$0xf] %vm308, %v287
      %311 = vst.msk [vmem:[#allocation2 + $0x8] sm:$0xf] %vm308, %v289
      %312 = vst.msk [vmem:[#allocation2 + $0xc] sm:$0xf] %vm308, %v291
      %313 = vst.msk [vmem:[#allocation2 + $0x10] sm:$0xf] %vm308, %v293
      %314 = vst.msk [vmem:[#allocation2 + $0x14] sm:$0xf] %vm308, %v295
      %315 = vst.msk [vmem:[#allocation2 + $0x18] sm:$0xf] %vm308, %v297
      %316 = vst.msk [vmem:[#allocation2 + $0x1c] sm:$0xf] %vm308, %v299
      %v317 = vld [vmem:[%s235] sm:$0xf]
      %v318 = vld [vmem:[%s235 + $0x4] sm:$0x1]
      %v319 = vld [vmem:[%s235 + $0x8] sm:$0xf]
      %v320 = vld [vmem:[%s235 + $0xc] sm:$0x1]
      %v321 = vld [vmem:[%s235 + $0x10] sm:$0xf]
      %v322 = vld [vmem:[%s235 + $0x14] sm:$0x1]
      %v323 = vld [vmem:[%s235 + $0x18] sm:$0xf]
      %v324 = vld [vmem:[%s235 + $0x1c] sm:$0x1]
      %v325 = vld [vmem:[%s235 + $0x20] sm:$0xf]
      %v326 = vld [vmem:[%s235 + $0x24] sm:$0x1]
      %v327 = vld [vmem:[%s235 + $0x28] sm:$0xf]
      %v328 = vld [vmem:[%s235 + $0x2c] sm:$0x1]
      %v329 = vld [vmem:[%s235 + $0x30] sm:$0xf]
      %v330 = vld [vmem:[%s235 + $0x34] sm:$0x1]
      %v331 = vld [vmem:[%s235 + $0x38] sm:$0xf]
      %v332 = vld [vmem:[%s235 + $0x3c] sm:$0x1]
      %vm333 = vsmask.f32 3328
      %vm334 = vsmask.f32 7440
      %vm335 = vmor %vm333, %vm334
      %v337 = vshrl.u32 %v317, 16
      %v339 = vrot.slane %v337, 4
      %v340 = vshll.u32 %v317, 16
      %v342 = vrot.slane %v340, 5
      %v343 = vor.u32 %v339, %v342
      %v344 = vrot.slane %v343, 4
      %v346 = vshll.u32 %v318, 16
      %v348 = vrot.slane %v346, 5
      %v349 = vsel %vm335, %v344, %v348
      %v351 = vshrl.u32 %v319, 16
      %v353 = vrot.slane %v351, 4
      %v354 = vshll.u32 %v319, 16
      %v356 = vrot.slane %v354, 5
      %v357 = vor.u32 %v353, %v356
      %v358 = vrot.slane %v357, 4
      %v360 = vshll.u32 %v320, 16
      %v362 = vrot.slane %v360, 5
      %v363 = vsel %vm335, %v358, %v362
      %v365 = vshrl.u32 %v321, 16
      %v367 = vrot.slane %v365, 4
      %v368 = vshll.u32 %v321, 16
      %v370 = vrot.slane %v368, 5
      %v371 = vor.u32 %v367, %v370
      %v372 = vrot.slane %v371, 4
      %v374 = vshll.u32 %v322, 16
      %v376 = vrot.slane %v374, 5
      %v377 = vsel %vm335, %v372, %v376
      %v379 = vshrl.u32 %v323, 16
      %v381 = vrot.slane %v379, 4
      %v382 = vshll.u32 %v323, 16
      %v384 = vrot.slane %v382, 5
      %v385 = vor.u32 %v381, %v384
      %v386 = vrot.slane %v385, 4
      %v388 = vshll.u32 %v324, 16
      %v390 = vrot.slane %v388, 5
      %v391 = vsel %vm335, %v386, %v390
      %v393 = vshrl.u32 %v325, 16
      %v395 = vrot.slane %v393, 4
      %v396 = vshll.u32 %v325, 16
      %v398 = vrot.slane %v396, 5
      %v399 = vor.u32 %v395, %v398
      %v400 = vrot.slane %v399, 4
      %v402 = vshll.u32 %v326, 16
      %v404 = vrot.slane %v402, 5
      %v405 = vsel %vm335, %v400, %v404
      %v407 = vshrl.u32 %v327, 16
      %v409 = vrot.slane %v407, 4
      %v410 = vshll.u32 %v327, 16
      %v412 = vrot.slane %v410, 5
      %v413 = vor.u32 %v409, %v412
      %v414 = vrot.slane %v413, 4
      %v416 = vshll.u32 %v328, 16
      %v418 = vrot.slane %v416, 5
      %v419 = vsel %vm335, %v414, %v418
      %v421 = vshrl.u32 %v329, 16
      %v423 = vrot.slane %v421, 4
      %v424 = vshll.u32 %v329, 16
      %v426 = vrot.slane %v424, 5
      %v427 = vor.u32 %v423, %v426
      %v428 = vrot.slane %v427, 4
      %v430 = vshll.u32 %v330, 16
      %v432 = vrot.slane %v430, 5
      %v433 = vsel %vm335, %v428, %v432
      %v435 = vshrl.u32 %v331, 16
      %v437 = vrot.slane %v435, 4
      %v438 = vshll.u32 %v331, 16
      %v440 = vrot.slane %v438, 5
      %v441 = vor.u32 %v437, %v440
      %v442 = vrot.slane %v441, 4
      %v444 = vshll.u32 %v332, 16
      %v446 = vrot.slane %v444, 5
      %v447 = vsel %vm335, %v442, %v446
      %448 = vrot.lane.b32.xlu0 %v349, 8
      %v449 = vpop.permute.xlu0 %448
      %450 = vrot.lane.b32.xlu0 %v363, 8
      %v451 = vpop.permute.xlu0 %450
      %452 = vrot.lane.b32.xlu0 %v377, 8
      %v453 = vpop.permute.xlu0 %452
      %454 = vrot.lane.b32.xlu0 %v391, 8
      %v455 = vpop.permute.xlu0 %454
      %456 = vrot.lane.b32.xlu0 %v405, 8
      %v457 = vpop.permute.xlu0 %456
      %458 = vrot.lane.b32.xlu0 %v419, 8
      %v459 = vpop.permute.xlu0 %458
      %460 = vrot.lane.b32.xlu0 %v433, 8
      %v461 = vpop.permute.xlu0 %460
      %462 = vrot.lane.b32.xlu0 %v447, 8
      %v463 = vpop.permute.xlu0 %462
      %vm472 = vcmask 93248
      %473 = vst.msk [vmem:[#allocation2] sm:$0xf] %vm472, %v449
      %474 = vst.msk [vmem:[#allocation2 + $0x4] sm:$0xf] %vm472, %v451
      %475 = vst.msk [vmem:[#allocation2 + $0x8] sm:$0xf] %vm472, %v453
      %476 = vst.msk [vmem:[#allocation2 + $0xc] sm:$0xf] %vm472, %v455
      %477 = vst.msk [vmem:[#allocation2 + $0x10] sm:$0xf] %vm472, %v457
      %478 = vst.msk [vmem:[#allocation2 + $0x14] sm:$0xf] %vm472, %v459
      %479 = vst.msk [vmem:[#allocation2 + $0x18] sm:$0xf] %vm472, %v461
      %480 = vst.msk [vmem:[#allocation2 + $0x1c] sm:$0xf] %vm472, %v463
      %s481 = scalar_lea.vmem %s235, 144
      %v482 = vld [vmem:[%s481] sm:$0xf]
      %v483 = vld [vmem:[%s481 + $0x8] sm:$0xf]
      %v484 = vld [vmem:[%s481 + $0x10] sm:$0xf]
      %v485 = vld [vmem:[%s481 + $0x18] sm:$0xf]
      %v486 = vld [vmem:[%s481 + $0x20] sm:$0xf]
      %v487 = vld [vmem:[%s481 + $0x28] sm:$0xf]
      %v488 = vld [vmem:[%s481 + $0x30] sm:$0xf]
      %v489 = vld [vmem:[%s481 + $0x38] sm:$0xf]
      %498 = vrot.lane.b32.xlu0 %v482, 12
      %v499 = vpop.permute.xlu0 %498
      %500 = vrot.lane.b32.xlu0 %v483, 12
      %v501 = vpop.permute.xlu0 %500
      %502 = vrot.lane.b32.xlu0 %v484, 12
      %v503 = vpop.permute.xlu0 %502
      %504 = vrot.lane.b32.xlu0 %v485, 12
      %v505 = vpop.permute.xlu0 %504
      %506 = vrot.lane.b32.xlu0 %v486, 12
      %v507 = vpop.permute.xlu0 %506
      %508 = vrot.lane.b32.xlu0 %v487, 12
      %v509 = vpop.permute.xlu0 %508
      %510 = vrot.lane.b32.xlu0 %v488, 12
      %v511 = vpop.permute.xlu0 %510
      %512 = vrot.lane.b32.xlu0 %v489, 12
      %v513 = vpop.permute.xlu0 %512
      %vm522 = vcmask 126048
      %523 = vst.msk [vmem:[#allocation2] sm:$0xf] %vm522, %v499
      %524 = vst.msk [vmem:[#allocation2 + $0x4] sm:$0xf] %vm522, %v501
      %525 = vst.msk [vmem:[#allocation2 + $0x8] sm:$0xf] %vm522, %v503
      %526 = vst.msk [vmem:[#allocation2 + $0xc] sm:$0xf] %vm522, %v505
      %527 = vst.msk [vmem:[#allocation2 + $0x10] sm:$0xf] %vm522, %v507
      %528 = vst.msk [vmem:[#allocation2 + $0x14] sm:$0xf] %vm522, %v509
      %529 = vst.msk [vmem:[#allocation2 + $0x18] sm:$0xf] %vm522, %v511
      %530 = vst.msk [vmem:[#allocation2 + $0x1c] sm:$0xf] %vm522, %v513
      %s531 = scalar_lea.vmem %s235, 216
      %v532 = vld [vmem:[%s531] sm:$0xf]
      %v533 = vld [vmem:[%s531 + $0x8] sm:$0xf]
      %v534 = vld [vmem:[%s531 + $0x10] sm:$0xf]
      %v535 = vld [vmem:[%s531 + $0x18] sm:$0xf]
      %v536 = vld [vmem:[%s531 + $0x20] sm:$0xf]
      %v537 = vld [vmem:[%s531 + $0x28] sm:$0xf]
      %v538 = vld [vmem:[%s531 + $0x30] sm:$0xf]
      %v539 = vld [vmem:[%s531 + $0x38] sm:$0xf]
      %548 = vrot.lane.b32.xlu0 %v532, 16
      %v549 = vpop.permute.xlu0 %548
      %550 = vrot.lane.b32.xlu0 %v533, 16
      %v551 = vpop.permute.xlu0 %550
      %552 = vrot.lane.b32.xlu0 %v534, 16
      %v553 = vpop.permute.xlu0 %552
      %554 = vrot.lane.b32.xlu0 %v535, 16
      %v555 = vpop.permute.xlu0 %554
      %556 = vrot.lane.b32.xlu0 %v536, 16
      %v557 = vpop.permute.xlu0 %556
      %558 = vrot.lane.b32.xlu0 %v537, 16
      %v559 = vpop.permute.xlu0 %558
      %560 = vrot.lane.b32.xlu0 %v538, 16
      %v561 = vpop.permute.xlu0 %560
      %562 = vrot.lane.b32.xlu0 %v539, 16
      %v563 = vpop.permute.xlu0 %562
      %vm572 = vcmask 158848
      %573 = vst.msk [vmem:[#allocation2] sm:$0xf] %vm572, %v549
      %574 = vst.msk [vmem:[#allocation2 + $0x4] sm:$0xf] %vm572, %v551
      %575 = vst.msk [vmem:[#allocation2 + $0x8] sm:$0xf] %vm572, %v553
      %576 = vst.msk [vmem:[#allocation2 + $0xc] sm:$0xf] %vm572, %v555
      %577 = vst.msk [vmem:[#allocation2 + $0x10] sm:$0xf] %vm572, %v557
      %578 = vst.msk [vmem:[#allocation2 + $0x14] sm:$0xf] %vm572, %v559
      %579 = vst.msk [vmem:[#allocation2 + $0x18] sm:$0xf] %vm572, %v561
      %580 = vst.msk [vmem:[#allocation2 + $0x1c] sm:$0xf] %vm572, %v563
      %v581 = vld [vmem:[%s481] sm:$0xf]
      %v582 = vld [vmem:[%s481 + $0x4] sm:$0x1]
      %v583 = vld [vmem:[%s481 + $0x8] sm:$0xf]
      %v584 = vld [vmem:[%s481 + $0xc] sm:$0x1]
      %v585 = vld [vmem:[%s481 + $0x10] sm:$0xf]
      %v586 = vld [vmem:[%s481 + $0x14] sm:$0x1]
      %v587 = vld [vmem:[%s481 + $0x18] sm:$0xf]
      %v588 = vld [vmem:[%s481 + $0x1c] sm:$0x1]
      %v589 = vld [vmem:[%s481 + $0x20] sm:$0xf]
      %v590 = vld [vmem:[%s481 + $0x24] sm:$0x1]
      %v591 = vld [vmem:[%s481 + $0x28] sm:$0xf]
      %v592 = vld [vmem:[%s481 + $0x2c] sm:$0x1]
      %v593 = vld [vmem:[%s481 + $0x30] sm:$0xf]
      %v594 = vld [vmem:[%s481 + $0x34] sm:$0x1]
      %v595 = vld [vmem:[%s481 + $0x38] sm:$0xf]
      %v596 = vld [vmem:[%s481 + $0x3c] sm:$0x1]
      %v598 = vshrl.u32 %v581, 16
      %v600 = vrot.slane %v598, 4
      %v601 = vshll.u32 %v581, 16
      %v603 = vrot.slane %v601, 5
      %v604 = vor.u32 %v600, %v603
      %v605 = vrot.slane %v604, 4
      %v607 = vshll.u32 %v582, 16
      %v609 = vrot.slane %v607, 5
      %v610 = vsel %vm335, %v605, %v609
      %v612 = vshrl.u32 %v583, 16
      %v614 = vrot.slane %v612, 4
      %v615 = vshll.u32 %v583, 16
      %v617 = vrot.slane %v615, 5
      %v618 = vor.u32 %v614, %v617
      %v619 = vrot.slane %v618, 4
      %v621 = vshll.u32 %v584, 16
      %v623 = vrot.slane %v621, 5
      %v624 = vsel %vm335, %v619, %v623
      %v626 = vshrl.u32 %v585, 16
      %v628 = vrot.slane %v626, 4
      %v629 = vshll.u32 %v585, 16
      %v631 = vrot.slane %v629, 5
      %v632 = vor.u32 %v628, %v631
      %v633 = vrot.slane %v632, 4
      %v635 = vshll.u32 %v586, 16
      %v637 = vrot.slane %v635, 5
      %v638 = vsel %vm335, %v633, %v637
      %v640 = vshrl.u32 %v587, 16
      %v642 = vrot.slane %v640, 4
      %v643 = vshll.u32 %v587, 16
      %v645 = vrot.slane %v643, 5
      %v646 = vor.u32 %v642, %v645
      %v647 = vrot.slane %v646, 4
      %v649 = vshll.u32 %v588, 16
      %v651 = vrot.slane %v649, 5
      %v652 = vsel %vm335, %v647, %v651
      %v654 = vshrl.u32 %v589, 16
      %v656 = vrot.slane %v654, 4
      %v657 = vshll.u32 %v589, 16
      %v659 = vrot.slane %v657, 5
      %v660 = vor.u32 %v656, %v659
      %v661 = vrot.slane %v660, 4
      %v663 = vshll.u32 %v590, 16
      %v665 = vrot.slane %v663, 5
      %v666 = vsel %vm335, %v661, %v665
      %v668 = vshrl.u32 %v591, 16
      %v670 = vrot.slane %v668, 4
      %v671 = vshll.u32 %v591, 16
      %v673 = vrot.slane %v671, 5
      %v674 = vor.u32 %v670, %v673
      %v675 = vrot.slane %v674, 4
      %v677 = vshll.u32 %v592, 16
      %v679 = vrot.slane %v677, 5
      %v680 = vsel %vm335, %v675, %v679
      %v682 = vshrl.u32 %v593, 16
      %v684 = vrot.slane %v682, 4
      %v685 = vshll.u32 %v593, 16
      %v687 = vrot.slane %v685, 5
      %v688 = vor.u32 %v684, %v687
      %v689 = vrot.slane %v688, 4
      %v691 = vshll.u32 %v594, 16
      %v693 = vrot.slane %v691, 5
      %v694 = vsel %vm335, %v689, %v693
      %v696 = vshrl.u32 %v595, 16
      %v698 = vrot.slane %v696, 4
      %v699 = vshll.u32 %v595, 16
      %v701 = vrot.slane %v699, 5
      %v702 = vor.u32 %v698, %v701
      %v703 = vrot.slane %v702, 4
      %v705 = vshll.u32 %v596, 16
      %v707 = vrot.slane %v705, 5
      %v708 = vsel %vm335, %v703, %v707
      %709 = vrot.lane.b32.xlu0 %v610, 20
      %v710 = vpop.permute.xlu0 %709
      %711 = vrot.lane.b32.xlu0 %v624, 20
      %v712 = vpop.permute.xlu0 %711
      %713 = vrot.lane.b32.xlu0 %v638, 20
      %v714 = vpop.permute.xlu0 %713
      %715 = vrot.lane.b32.xlu0 %v652, 20
      %v716 = vpop.permute.xlu0 %715
      %717 = vrot.lane.b32.xlu0 %v666, 20
      %v718 = vpop.permute.xlu0 %717
      %719 = vrot.lane.b32.xlu0 %v680, 20
      %v720 = vpop.permute.xlu0 %719
      %721 = vrot.lane.b32.xlu0 %v694, 20
      %v722 = vpop.permute.xlu0 %721
      %723 = vrot.lane.b32.xlu0 %v708, 20
      %v724 = vpop.permute.xlu0 %723
      %vm733 = vcmask 191648
      %734 = vst.msk [vmem:[#allocation2] sm:$0xf] %vm733, %v710
      %735 = vst.msk [vmem:[#allocation2 + $0x4] sm:$0xf] %vm733, %v712
      %736 = vst.msk [vmem:[#allocation2 + $0x8] sm:$0xf] %vm733, %v714
      %737 = vst.msk [vmem:[#allocation2 + $0xc] sm:$0xf] %vm733, %v716
      %738 = vst.msk [vmem:[#allocation2 + $0x10] sm:$0xf] %vm733, %v718
      %739 = vst.msk [vmem:[#allocation2 + $0x14] sm:$0xf] %vm733, %v720
      %740 = vst.msk [vmem:[#allocation2 + $0x18] sm:$0xf] %vm733, %v722
      %741 = vst.msk [vmem:[#allocation2 + $0x1c] sm:$0xf] %vm733, %v724
      %s742 = scalar_lea.vmem %s235, 8
      %v743 = vld [vmem:[%s742] sm:$0xf]
      %v744 = vld [vmem:[%s742 + $0x8] sm:$0xf]
      %v745 = vld [vmem:[%s742 + $0x10] sm:$0xf]
      %v746 = vld [vmem:[%s742 + $0x18] sm:$0xf]
      %v747 = vld [vmem:[%s742 + $0x20] sm:$0xf]
      %v748 = vld [vmem:[%s742 + $0x28] sm:$0xf]
      %v749 = vld [vmem:[%s742 + $0x30] sm:$0xf]
      %v750 = vld [vmem:[%s742 + $0x38] sm:$0xf]
      %759 = vrot.lane.b32.xlu0 %v743, 24
      %v760 = vpop.permute.xlu0 %759
      %761 = vrot.lane.b32.xlu0 %v744, 24
      %v762 = vpop.permute.xlu0 %761
      %763 = vrot.lane.b32.xlu0 %v745, 24
      %v764 = vpop.permute.xlu0 %763
      %765 = vrot.lane.b32.xlu0 %v746, 24
      %v766 = vpop.permute.xlu0 %765
      %767 = vrot.lane.b32.xlu0 %v747, 24
      %v768 = vpop.permute.xlu0 %767
      %769 = vrot.lane.b32.xlu0 %v748, 24
      %v770 = vpop.permute.xlu0 %769
      %771 = vrot.lane.b32.xlu0 %v749, 24
      %v772 = vpop.permute.xlu0 %771
      %773 = vrot.lane.b32.xlu0 %v750, 24
      %v774 = vpop.permute.xlu0 %773
      %vm783 = vcmask 224448
      %784 = vst.msk [vmem:[#allocation2] sm:$0xf] %vm783, %v760
      %785 = vst.msk [vmem:[#allocation2 + $0x4] sm:$0xf] %vm783, %v762
      %786 = vst.msk [vmem:[#allocation2 + $0x8] sm:$0xf] %vm783, %v764
      %787 = vst.msk [vmem:[#allocation2 + $0xc] sm:$0xf] %vm783, %v766
      %788 = vst.msk [vmem:[#allocation2 + $0x10] sm:$0xf] %vm783, %v768
      %789 = vst.msk [vmem:[#allocation2 + $0x14] sm:$0xf] %vm783, %v770
      %790 = vst.msk [vmem:[#allocation2 + $0x18] sm:$0xf] %vm783, %v772
      %791 = vst.msk [vmem:[#allocation2 + $0x1c] sm:$0xf] %vm783, %v774
      %s792 = scalar_lea.vmem %s235, 80
      %v793 = vld [vmem:[%s792] sm:$0xf]
      %v794 = vld [vmem:[%s792 + $0x8] sm:$0xf]
      %v795 = vld [vmem:[%s792 + $0x10] sm:$0xf]
      %v796 = vld [vmem:[%s792 + $0x18] sm:$0xf]
      %v797 = vld [vmem:[%s792 + $0x20] sm:$0xf]
      %v798 = vld [vmem:[%s792 + $0x28] sm:$0xf]
      %v799 = vld [vmem:[%s792 + $0x30] sm:$0xf]
      %v800 = vld [vmem:[%s792 + $0x38] sm:$0xf]
      %809 = vrot.lane.b32.xlu0 %v793, 28
      %v810 = vpop.permute.xlu0 %809
      %811 = vrot.lane.b32.xlu0 %v794, 28
      %v812 = vpop.permute.xlu0 %811
      %813 = vrot.lane.b32.xlu0 %v795, 28
      %v814 = vpop.permute.xlu0 %813
      %815 = vrot.lane.b32.xlu0 %v796, 28
      %v816 = vpop.permute.xlu0 %815
      %817 = vrot.lane.b32.xlu0 %v797, 28
      %v818 = vpop.permute.xlu0 %817
      %819 = vrot.lane.b32.xlu0 %v798, 28
      %v820 = vpop.permute.xlu0 %819
      %821 = vrot.lane.b32.xlu0 %v799, 28
      %v822 = vpop.permute.xlu0 %821
      %823 = vrot.lane.b32.xlu0 %v800, 28
      %v824 = vpop.permute.xlu0 %823
      %vm833 = vcmask 257248
      %834 = vst.msk [vmem:[#allocation2] sm:$0xf] %vm833, %v810
      %835 = vst.msk [vmem:[#allocation2 + $0x4] sm:$0xf] %vm833, %v812
      %836 = vst.msk [vmem:[#allocation2 + $0x8] sm:$0xf] %vm833, %v814
      %837 = vst.msk [vmem:[#allocation2 + $0xc] sm:$0xf] %vm833, %v816
      %838 = vst.msk [vmem:[#allocation2 + $0x10] sm:$0xf] %vm833, %v818
      %839 = vst.msk [vmem:[#allocation2 + $0x14] sm:$0xf] %vm833, %v820
      %840 = vst.msk [vmem:[#allocation2 + $0x18] sm:$0xf] %vm833, %v822
      %841 = vst.msk [vmem:[#allocation2 + $0x1c] sm:$0xf] %vm833, %v824
      %v842 = vld [vmem:[%s742] sm:$0xf]
      %v843 = vld [vmem:[%s742 + $0x4] sm:$0x1]
      %v844 = vld [vmem:[%s742 + $0x8] sm:$0xf]
      %v845 = vld [vmem:[%s742 + $0xc] sm:$0x1]
      %v846 = vld [vmem:[%s742 + $0x10] sm:$0xf]
      %v847 = vld [vmem:[%s742 + $0x14] sm:$0x1]
      %v848 = vld [vmem:[%s742 + $0x18] sm:$0xf]
      %v849 = vld [vmem:[%s742 + $0x1c] sm:$0x1]
      %v850 = vld [vmem:[%s742 + $0x20] sm:$0xf]
      %v851 = vld [vmem:[%s742 + $0x24] sm:$0x1]
      %v852 = vld [vmem:[%s742 + $0x28] sm:$0xf]
      %v853 = vld [vmem:[%s742 + $0x2c] sm:$0x1]
      %v854 = vld [vmem:[%s742 + $0x30] sm:$0xf]
      %v855 = vld [vmem:[%s742 + $0x34] sm:$0x1]
      %v856 = vld [vmem:[%s742 + $0x38] sm:$0xf]
      %v857 = vld [vmem:[%s742 + $0x3c] sm:$0x1]
      %v859 = vshrl.u32 %v842, 16
      %v861 = vrot.slane %v859, 4
      %v862 = vshll.u32 %v842, 16
      %v864 = vrot.slane %v862, 5
      %v865 = vor.u32 %v861, %v864
      %v866 = vrot.slane %v865, 4
      %v868 = vshll.u32 %v843, 16
      %v870 = vrot.slane %v868, 5
      %v871 = vsel %vm335, %v866, %v870
      %v873 = vshrl.u32 %v844, 16
      %v875 = vrot.slane %v873, 4
      %v876 = vshll.u32 %v844, 16
      %v878 = vrot.slane %v876, 5
      %v879 = vor.u32 %v875, %v878
      %v880 = vrot.slane %v879, 4
      %v882 = vshll.u32 %v845, 16
      %v884 = vrot.slane %v882, 5
      %v885 = vsel %vm335, %v880, %v884
      %v887 = vshrl.u32 %v846, 16
      %v889 = vrot.slane %v887, 4
      %v890 = vshll.u32 %v846, 16
      %v892 = vrot.slane %v890, 5
      %v893 = vor.u32 %v889, %v892
      %v894 = vrot.slane %v893, 4
      %v896 = vshll.u32 %v847, 16
      %v898 = vrot.slane %v896, 5
      %v899 = vsel %vm335, %v894, %v898
      %v901 = vshrl.u32 %v848, 16
      %v903 = vrot.slane %v901, 4
      %v904 = vshll.u32 %v848, 16
      %v906 = vrot.slane %v904, 5
      %v907 = vor.u32 %v903, %v906
      %v908 = vrot.slane %v907, 4
      %v910 = vshll.u32 %v849, 16
      %v912 = vrot.slane %v910, 5
      %v913 = vsel %vm335, %v908, %v912
      %v915 = vshrl.u32 %v850, 16
      %v917 = vrot.slane %v915, 4
      %v918 = vshll.u32 %v850, 16
      %v920 = vrot.slane %v918, 5
      %v921 = vor.u32 %v917, %v920
      %v922 = vrot.slane %v921, 4
      %v924 = vshll.u32 %v851, 16
      %v926 = vrot.slane %v924, 5
      %v927 = vsel %vm335, %v922, %v926
      %v929 = vshrl.u32 %v852, 16
      %v931 = vrot.slane %v929, 4
      %v932 = vshll.u32 %v852, 16
      %v934 = vrot.slane %v932, 5
      %v935 = vor.u32 %v931, %v934
      %v936 = vrot.slane %v935, 4
      %v938 = vshll.u32 %v853, 16
      %v940 = vrot.slane %v938, 5
      %v941 = vsel %vm335, %v936, %v940
      %v943 = vshrl.u32 %v854, 16
      %v945 = vrot.slane %v943, 4
      %v946 = vshll.u32 %v854, 16
      %v948 = vrot.slane %v946, 5
      %v949 = vor.u32 %v945, %v948
      %v950 = vrot.slane %v949, 4
      %v952 = vshll.u32 %v855, 16
      %v954 = vrot.slane %v952, 5
      %v955 = vsel %vm335, %v950, %v954
      %v957 = vshrl.u32 %v856, 16
      %v959 = vrot.slane %v957, 4
      %v960 = vshll.u32 %v856, 16
      %v962 = vrot.slane %v960, 5
      %v963 = vor.u32 %v959, %v962
      %v964 = vrot.slane %v963, 4
      %v966 = vshll.u32 %v857, 16
      %v968 = vrot.slane %v966, 5
      %v969 = vsel %vm335, %v964, %v968
      %970 = vrot.lane.b32.xlu0 %v871, 32
      %v971 = vpop.permute.xlu0 %970
      %972 = vrot.lane.b32.xlu0 %v885, 32
      %v973 = vpop.permute.xlu0 %972
      %974 = vrot.lane.b32.xlu0 %v899, 32
      %v975 = vpop.permute.xlu0 %974
      %976 = vrot.lane.b32.xlu0 %v913, 32
      %v977 = vpop.permute.xlu0 %976
      %978 = vrot.lane.b32.xlu0 %v927, 32
      %v979 = vpop.permute.xlu0 %978
      %980 = vrot.lane.b32.xlu0 %v941, 32
      %v981 = vpop.permute.xlu0 %980
      %982 = vrot.lane.b32.xlu0 %v955, 32
      %v983 = vpop.permute.xlu0 %982
      %984 = vrot.lane.b32.xlu0 %v969, 32
      %v985 = vpop.permute.xlu0 %984
      %vm994 = vcmask 290048
      %995 = vst.msk [vmem:[#allocation2] sm:$0xf] %vm994, %v971
      %996 = vst.msk [vmem:[#allocation2 + $0x4] sm:$0xf] %vm994, %v973
      %997 = vst.msk [vmem:[#allocation2 + $0x8] sm:$0xf] %vm994, %v975
      %998 = vst.msk [vmem:[#allocation2 + $0xc] sm:$0xf] %vm994, %v977
      %999 = vst.msk [vmem:[#allocation2 + $0x10] sm:$0xf] %vm994, %v979
      %1000 = vst.msk [vmem:[#allocation2 + $0x14] sm:$0xf] %vm994, %v981
      %1001 = vst.msk [vmem:[#allocation2 + $0x18] sm:$0xf] %vm994, %v983
      %1002 = vst.msk [vmem:[#allocation2 + $0x1c] sm:$0xf] %vm994, %v985
      %v1003 = vld [vmem:[#allocation2] sm:$0xf]
      %v1004 = vld [vmem:[#allocation2 + $0x4] sm:$0xf]
      %v1005 = vld [vmem:[#allocation2 + $0x8] sm:$0xf]
      %v1006 = vld [vmem:[#allocation2 + $0xc] sm:$0xf]
      %v1007 = vld [vmem:[#allocation2 + $0x10] sm:$0xf]
      %v1008 = vld [vmem:[#allocation2 + $0x14] sm:$0xf]
      %v1009 = vld [vmem:[#allocation2 + $0x18] sm:$0xf]
      %v1010 = vld [vmem:[#allocation2 + $0x1c] sm:$0xf]
      %v1011 = vld [vmem:[%s1] sm:$0xf]
      %v1012 = vld [vmem:[%s1 + $0x4] sm:$0xf]
      %v1013 = vld [vmem:[%s1 + $0x8] sm:$0xf]
      %v1014 = vld [vmem:[%s1 + $0xc] sm:$0xf]
      %v1015 = vld [vmem:[%s1 + $0x10] sm:$0x3]
      %v1024 = vunpack.c.l.b16 %v1003
      %v1025 = vunpack.c.l.b16 %v1004
      %v1026 = vunpack.c.l.b16 %v1005
      %v1027 = vunpack.c.l.b16 %v1006
      %v1028 = vunpack.c.l.b16 %v1007
      %v1029 = vunpack.c.l.b16 %v1008
      %v1030 = vunpack.c.l.b16 %v1009
      %v1031 = vunpack.c.l.b16 %v1010
      %v1032 = vpack.c.b16 %v1025, %v1024
      %v1033 = vpack.c.b16 %v1027, %v1026
      %v1034 = vpack.c.b16 %v1029, %v1028
      %v1035 = vpack.c.b16 %v1031, %v1030
      %v1041 = vunpack.c.l.b16 %v1011
      %v1042 = vunpack.c.l.b16 %v1012
      %v1043 = vunpack.c.l.b16 %v1013
      %v1044 = vunpack.c.l.b16 %v1014
      %v1045 = vunpack.c.l.b16 %v1015
      %v1046 = vpack.c.b16 %v1042, %v1041
      %v1047 = vpack.c.b16 %v1044, %v1043
      %v1048 = vpack.c.b16 %v1045, %v1045
      %vm1051 = vcmask 293888
      %v1053 = vsel %vm1051, %v1032, 0
      %v1056 = vsel %vm1051, %v1033, 0
      %v1059 = vsel %vm1051, %v1034, 0
      %v1062 = vsel %vm1051, %v1035, 0
      %vm1064 = vcmask 1041408
      %v1066 = vsel %vm1064, %v1048, 0
      %1068 = vmatprep.subr.bf16.mxu0 0
      %1069 = vmatpush1.bf16.msra.mxu0 %v1046
      %1070 = vmatprep.subr.bf16.mxu0 0
      %1071 = vmatpush1.bf16.msra.mxu0 %v1047
      %1072 = vmatprep.subr.bf16.mxu0 0
      %1073 = vmatpush1.bf16.msra.mxu0 %v1066
      %1074 = vmatprep.subr.bf16.mxu0 0
      %1075 = vmatpush1.bf16.msra.mxu0 0
      %1076 = vmatprep.subr.bf16.mxu0 0
      %1077 = vmatpush1.bf16.msra.mxu0 0
      %1078 = vmatprep.subr.bf16.mxu0 0
      %1079 = vmatpush1.bf16.msra.mxu0 0
      %1080 = vmatprep.subr.bf16.mxu0 0
      %1081 = vmatpush1.bf16.msra.mxu0 0
      %1082 = vmatprep.subr.bf16.mxu0 0
      %1083 = vmatpush1.bf16.msra.mxu0 0
      %1084 = vmatprep.subr.bf16.mxu0 0
      %1085 = vmatpush1.bf16.msra.mxu0 0
      %1086 = vmatprep.subr.bf16.mxu0 0
      %1087 = vmatpush1.bf16.msra.mxu0 0
      %1088 = vmatprep.subr.bf16.mxu0 0
      %1089 = vmatpush1.bf16.msra.mxu0 0
      %1090 = vmatprep.subr.bf16.mxu0 0
      %1091 = vmatpush1.bf16.msra.mxu0 0
      %1092 = vmatprep.subr.bf16.mxu0 0
      %1093 = vmatpush1.bf16.msra.mxu0 0
      %1094 = vmatprep.subr.bf16.mxu0 0
      %1095 = vmatpush1.bf16.msra.mxu0 0
      %1096 = vmatprep.subr.bf16.mxu0 0
      %1097 = vmatpush1.bf16.msra.mxu0 0
      %1098 = vmatprep.subr.bf16.mxu0 0
      %1099 = vmatpush1.bf16.msra.mxu0 0
      %1100 = vmatprep.mubr.bf16.mxu0 0
      %1101 = vmatmul.mubr.bf16.gmra.mrb[0].mxu0 %v1053
      %v1102 = vpop.f32.mrb[0].mxu0
      %v1103 = vadd.f32 0.0, %v1102
      %v1104 = vpop.f32.mrb[0].mxu0
      %v1105 = vpop.f32.mrb[0].mxu0
      %v1106 = vadd.f32 0.0, %v1105
      %v1107 = vpop.f32.mrb[0].mxu0
      %1108 = vmatprep.mubr.bf16.mxu0 0
      %1109 = vmatmul.mubr.bf16.gmra.mrb[0].mxu0 %v1056
      %v1110 = vpop.f32.mrb[0].mxu0
      %v1111 = vadd.f32 0.0, %v1110
      %v1112 = vpop.f32.mrb[0].mxu0
      %v1113 = vpop.f32.mrb[0].mxu0
      %v1114 = vadd.f32 0.0, %v1113
      %v1115 = vpop.f32.mrb[0].mxu0
      %1116 = vmatprep.mubr.bf16.mxu0 0
      %1117 = vmatmul.mubr.bf16.gmra.mrb[0].mxu0 %v1059
      %v1118 = vpop.f32.mrb[0].mxu0
      %v1119 = vadd.f32 0.0, %v1118
      %v1120 = vpop.f32.mrb[0].mxu0
      %v1121 = vpop.f32.mrb[0].mxu0
      %v1122 = vadd.f32 0.0, %v1121
      %v1123 = vpop.f32.mrb[0].mxu0
      %1124 = vmatprep.mubr.bf16.mxu0 0
      %1125 = vmatmul.mubr.bf16.gmra.mrb[0].mxu0 %v1062
      %v1126 = vpop.f32.mrb[0].mxu0
      %v1127 = vadd.f32 0.0, %v1126
      %v1128 = vpop.f32.mrb[0].mxu0
      %v1129 = vpop.f32.mrb[0].mxu0
      %v1130 = vadd.f32 0.0, %v1129
      %v1131 = vpop.f32.mrb[0].mxu0
      %1132 = vdwg.mxu0
      %vm1133 = vcmask 64512
      %v1134 = vsel %vm1133, %v1103, 0.0
      %v1135 = vsel %vm1133, %v1106, 0.0
      %v1136 = vadd.f32 %v1134, %v1135
      %v1137 = vsel %vm1133, %v1111, 0.0
      %v1138 = vadd.f32 %v1136, %v1137
      %v1139 = vsel %vm1133, %v1114, 0.0
      %v1140 = vadd.f32 %v1138, %v1139
      %v1141 = vsel %vm1133, %v1119, 0.0
      %v1142 = vadd.f32 %v1140, %v1141
      %v1143 = vsel %vm1133, %v1122, 0.0
      %v1144 = vadd.f32 %v1142, %v1143
      %v1145 = vsel %vm1133, %v1127, 0.0
      %v1146 = vadd.f32 %v1144, %v1145
      %v1147 = vsel %vm1133, %v1130, 0.0
      %v1148 = vadd.f32 %v1146, %v1147
      %v1149 = vrot.slane %v1148, 4
      %v1150 = vadd.f32 %v1148, %v1149
      %v1151 = vrot.slane %v1150, 2
      %v1152 = vadd.f32 %v1150, %v1151
      %v1153 = vrot.slane %v1152, 1
      %v1154 = vadd.f32 %v1152, %v1153
      %v1155 = vadd.f32 %v1154, 0.0
      %v1156 = vmul.f32 %v1103, %v1103
      %v1157 = vmul.f32 %v1106, %v1106
      %v1158 = vmul.f32 %v1111, %v1111
      %v1159 = vmul.f32 %v1114, %v1114
      %v1160 = vmul.f32 %v1119, %v1119
      %v1161 = vmul.f32 %v1122, %v1122
      %v1162 = vmul.f32 %v1127, %v1127
      %v1163 = vmul.f32 %v1130, %v1130
      %v1164 = vsel %vm1133, %v1156, 0.0
      %v1165 = vsel %vm1133, %v1157, 0.0
      %v1166 = vadd.f32 %v1164, %v1165
      %v1167 = vsel %vm1133, %v1158, 0.0
      %v1168 = vadd.f32 %v1166, %v1167
      %v1169 = vsel %vm1133, %v1159, 0.0
      %v1170 = vadd.f32 %v1168, %v1169
      %v1171 = vsel %vm1133, %v1160, 0.0
      %v1172 = vadd.f32 %v1170, %v1171
      %v1173 = vsel %vm1133, %v1161, 0.0
      %v1174 = vadd.f32 %v1172, %v1173
      %v1175 = vsel %vm1133, %v1162, 0.0
      %v1176 = vadd.f32 %v1174, %v1175
      %v1177 = vsel %vm1133, %v1163, 0.0
      %v1178 = vadd.f32 %v1176, %v1177
      %v1179 = vrot.slane %v1178, 4
      %v1180 = vadd.f32 %v1178, %v1179
      %v1181 = vrot.slane %v1180, 2
      %v1182 = vadd.f32 %v1180, %v1181
      %v1183 = vrot.slane %v1182, 1
      %v1184 = vadd.f32 %v1182, %v1183
      %v1185 = vadd.f32 %v1184, 0.0
      %1186 = vxpose.xlu0.b32.start [1/16] %v1103, 128
      %1187 = vxpose.xlu0.b32.cont [2/16] %v1106, 128
      %1188 = vxpose.xlu0.b32.cont [3/16] %v1111, 128
      %1189 = vxpose.xlu0.b32.cont [4/16] %v1114, 128
      %1190 = vxpose.xlu0.b32.cont [5/16] %v1119, 128
      %1191 = vxpose.xlu0.b32.cont [6/16] %v1122, 128
      %1192 = vxpose.xlu0.b32.cont [7/16] %v1127, 128
      %1193 = vxpose.xlu0.b32.cont [8/16] %v1130, 128
      %1194 = vxpose.xlu0.b32.cont [9/16] 0.0, 128
      %1195 = vxpose.xlu0.b32.cont [10/16] 0.0, 128
      %1196 = vxpose.xlu0.b32.cont [11/16] 0.0, 128
      %1197 = vxpose.xlu0.b32.cont [12/16] 0.0, 128
      %1198 = vxpose.xlu0.b32.cont [13/16] 0.0, 128
      %1199 = vxpose.xlu0.b32.cont [14/16] 0.0, 128
      %1200 = vxpose.xlu0.b32.cont [15/16] 0.0, 128
      %1201 = vxpose.xlu0.b32.end [16/16] 0.0, 128
      %v1202 = vpop.trf.xlu0
      %v1203 = vpop.trf.xlu0
      %v1204 = vpop.trf.xlu0
      %v1205 = vpop.trf.xlu0
      %v1206 = vpop.trf.xlu0
      %v1207 = vpop.trf.xlu0
      %v1208 = vpop.trf.xlu0
      %v1209 = vpop.trf.xlu0
      %v1210 = vpop.trf.xlu0
      %v1211 = vpop.trf.xlu0
      %v1212 = vpop.trf.xlu0
      %v1213 = vpop.trf.xlu0
      %v1214 = vpop.trf.xlu0
      %v1215 = vpop.trf.xlu0
      %v1216 = vpop.trf.xlu0
      %v1217 = vpop.trf.xlu0
      %v1218 = vpack.c.bf16 %v1202, %v1202
      %vm1219 = vcmask 519168
      %1220 = vst.msk [vmem:[%s240] sm:$0xf] %vm1219, %v1218
      %v1221 = vld [vmem:[%s2] sm:$0x3]
      %1222 = vrot.lane.b32.xlu0 %v1032, 112
      %v1223 = vpop.permute.xlu0 %1222
      %1224 = vrot.lane.b32.xlu0 %v1033, 112
      %v1225 = vpop.permute.xlu0 %1224
      %1226 = vrot.lane.b32.xlu0 %v1034, 112
      %v1227 = vpop.permute.xlu0 %1226
      %1228 = vrot.lane.b32.xlu0 %v1035, 112
      %v1229 = vpop.permute.xlu0 %1228
      %vm1230 = vcmask 31744
      %v1232 = vsel %vm1230, %v1223, 0
      %v1235 = vsel %vm1230, %v1225, 0
      %v1238 = vsel %vm1230, %v1227, 0
      %v1241 = vsel %vm1230, %v1229, 0
      %v1244 = vsel %vm1064, %v1221, 0
      %1246 = vmatprep.subr.bf16.mxu0 0
      %1247 = vmatpush1.bf16.msra.mxu0 %v1244
      %1248 = vmatprep.subr.bf16.mxu0 0
      %1249 = vmatpush1.bf16.msra.mxu0 0
      %1250 = vmatprep.subr.bf16.mxu0 0
      %1251 = vmatpush1.bf16.msra.mxu0 0
      %1252 = vmatprep.subr.bf16.mxu0 0
      %1253 = vmatpush1.bf16.msra.mxu0 0
      %1254 = vmatprep.subr.bf16.mxu0 0
      %1255 = vmatpush1.bf16.msra.mxu0 0
      %1256 = vmatprep.subr.bf16.mxu0 0
      %1257 = vmatpush1.bf16.msra.mxu0 0
      %1258 = vmatprep.subr.bf16.mxu0 0
      %1259 = vmatpush1.bf16.msra.mxu0 0
      %1260 = vmatprep.subr.bf16.mxu0 0
      %1261 = vmatpush1.bf16.msra.mxu0 0
      %1262 = vmatprep.subr.bf16.mxu0 0
      %1263 = vmatpush1.bf16.msra.mxu0 0
      %1264 = vmatprep.subr.bf16.mxu0 0
      %1265 = vmatpush1.bf16.msra.mxu0 0
      %1266 = vmatprep.subr.bf16.mxu0 0
      %1267 = vmatpush1.bf16.msra.mxu0 0
      %1268 = vmatprep.subr.bf16.mxu0 0
      %1269 = vmatpush1.bf16.msra.mxu0 0
      %1270 = vmatprep.subr.bf16.mxu0 0
      %1271 = vmatpush1.bf16.msra.mxu0 0
      %1272 = vmatprep.subr.bf16.mxu0 0
      %1273 = vmatpush1.bf16.msra.mxu0 0
      %1274 = vmatprep.subr.bf16.mxu0 0
      %1275 = vmatpush1.bf16.msra.mxu0 0
      %1276 = vmatprep.subr.bf16.mxu0 0
      %1277 = vmatpush1.bf16.msra.mxu0 0
      %1278 = vmatprep.mubr.bf16.mxu0 0
      %1279 = vmatmul.mubr.bf16.gmra.mrb[0].mxu0 %v1232
      %v1280 = vpop.f32.mrb[0].mxu0
      %v1281 = vadd.f32 0.0, %v1280
      %v1282 = vpop.f32.mrb[0].mxu0
      %v1283 = vpop.f32.mrb[0].mxu0
      %v1284 = vadd.f32 0.0, %v1283
      %v1285 = vpop.f32.mrb[0].mxu0
      %1286 = vmatprep.mubr.bf16.mxu0 0
      %1287 = vmatmul.mubr.bf16.gmra.mrb[0].mxu0 %v1235
      %v1288 = vpop.f32.mrb[0].mxu0
      %v1289 = vadd.f32 0.0, %v1288
      %v1290 = vpop.f32.mrb[0].mxu0
      %v1291 = vpop.f32.mrb[0].mxu0
      %v1292 = vadd.f32 0.0, %v1291
      %v1293 = vpop.f32.mrb[0].mxu0
      %1294 = vmatprep.mubr.bf16.mxu0 0
      %1295 = vmatmul.mubr.bf16.gmra.mrb[0].mxu0 %v1238
      %v1296 = vpop.f32.mrb[0].mxu0
      %v1297 = vadd.f32 0.0, %v1296
      %v1298 = vpop.f32.mrb[0].mxu0
      %v1299 = vpop.f32.mrb[0].mxu0
      %v1300 = vadd.f32 0.0, %v1299
      %v1301 = vpop.f32.mrb[0].mxu0
      %1302 = vmatprep.mubr.bf16.mxu0 0
      %1303 = vmatmul.mubr.bf16.gmra.mrb[0].mxu0 %v1241
      %v1304 = vpop.f32.mrb[0].mxu0
      %v1305 = vadd.f32 0.0, %v1304
      %v1306 = vpop.f32.mrb[0].mxu0
      %v1307 = vpop.f32.mrb[0].mxu0
      %v1308 = vadd.f32 0.0, %v1307
      %v1309 = vpop.f32.mrb[0].mxu0
      %1310 = vdwg.mxu0
      %v1311 = vsel %vm1133, %v1281, 0.0
      %v1312 = vsel %vm1133, %v1284, 0.0
      %v1313 = vadd.f32 %v1311, %v1312
      %v1314 = vsel %vm1133, %v1289, 0.0
      %v1315 = vadd.f32 %v1313, %v1314
      %v1316 = vsel %vm1133, %v1292, 0.0
      %v1317 = vadd.f32 %v1315, %v1316
      %v1318 = vsel %vm1133, %v1297, 0.0
      %v1319 = vadd.f32 %v1317, %v1318
      %v1320 = vsel %vm1133, %v1300, 0.0
      %v1321 = vadd.f32 %v1319, %v1320
      %v1322 = vsel %vm1133, %v1305, 0.0
      %v1323 = vadd.f32 %v1321, %v1322
      %v1324 = vsel %vm1133, %v1308, 0.0
      %v1325 = vadd.f32 %v1323, %v1324
      %v1326 = vrot.slane %v1325, 4
      %v1327 = vadd.f32 %v1325, %v1326
      %v1328 = vrot.slane %v1327, 2
      %v1329 = vadd.f32 %v1327, %v1328
      %v1330 = vrot.slane %v1329, 1
      %v1331 = vadd.f32 %v1329, %v1330
      %v1332 = vadd.f32 %v1331, 0.0
      %v1333 = vmul.f32 %v1281, %v1281
      %v1334 = vmul.f32 %v1284, %v1284
      %v1335 = vmul.f32 %v1289, %v1289
      %v1336 = vmul.f32 %v1292, %v1292
      %v1337 = vmul.f32 %v1297, %v1297
      %v1338 = vmul.f32 %v1300, %v1300
      %v1339 = vmul.f32 %v1305, %v1305
      %v1340 = vmul.f32 %v1308, %v1308
      %v1341 = vsel %vm1133, %v1333, 0.0
      %v1342 = vsel %vm1133, %v1334, 0.0
      %v1343 = vadd.f32 %v1341, %v1342
      %v1344 = vsel %vm1133, %v1335, 0.0
      %v1345 = vadd.f32 %v1343, %v1344
      %v1346 = vsel %vm1133, %v1336, 0.0
      %v1347 = vadd.f32 %v1345, %v1346
      %v1348 = vsel %vm1133, %v1337, 0.0
      %v1349 = vadd.f32 %v1347, %v1348
      %v1350 = vsel %vm1133, %v1338, 0.0
      %v1351 = vadd.f32 %v1349, %v1350
      %v1352 = vsel %vm1133, %v1339, 0.0
      %v1353 = vadd.f32 %v1351, %v1352
      %v1354 = vsel %vm1133, %v1340, 0.0
      %v1355 = vadd.f32 %v1353, %v1354
      %v1356 = vrot.slane %v1355, 4
      %v1357 = vadd.f32 %v1355, %v1356
      %v1358 = vrot.slane %v1357, 2
      %v1359 = vadd.f32 %v1357, %v1358
      %v1360 = vrot.slane %v1359, 1
      %v1361 = vadd.f32 %v1359, %v1360
      %v1362 = vadd.f32 %v1361, 0.0
      %1363 = vxpose.xlu0.b32.start [1/16] %v1281, 128
      %1364 = vxpose.xlu0.b32.cont [2/16] %v1284, 128
      %1365 = vxpose.xlu0.b32.cont [3/16] %v1289, 128
      %1366 = vxpose.xlu0.b32.cont [4/16] %v1292, 128
      %1367 = vxpose.xlu0.b32.cont [5/16] %v1297, 128
      %1368 = vxpose.xlu0.b32.cont [6/16] %v1300, 128
      %1369 = vxpose.xlu0.b32.cont [7/16] %v1305, 128
      %1370 = vxpose.xlu0.b32.cont [8/16] %v1308, 128
      %1371 = vxpose.xlu0.b32.cont [9/16] 0.0, 128
      %1372 = vxpose.xlu0.b32.cont [10/16] 0.0, 128
      %1373 = vxpose.xlu0.b32.cont [11/16] 0.0, 128
      %1374 = vxpose.xlu0.b32.cont [12/16] 0.0, 128
      %1375 = vxpose.xlu0.b32.cont [13/16] 0.0, 128
      %1376 = vxpose.xlu0.b32.cont [14/16] 0.0, 128
      %1377 = vxpose.xlu0.b32.cont [15/16] 0.0, 128
      %1378 = vxpose.xlu0.b32.end [16/16] 0.0, 128
      %v1379 = vpop.trf.xlu0
      %v1380 = vpop.trf.xlu0
      %v1381 = vpop.trf.xlu0
      %v1382 = vpop.trf.xlu0
      %v1383 = vpop.trf.xlu0
      %v1384 = vpop.trf.xlu0
      %v1385 = vpop.trf.xlu0
      %v1386 = vpop.trf.xlu0
      %v1387 = vpop.trf.xlu0
      %v1388 = vpop.trf.xlu0
      %v1389 = vpop.trf.xlu0
      %v1390 = vpop.trf.xlu0
      %v1391 = vpop.trf.xlu0
      %v1392 = vpop.trf.xlu0
      %v1393 = vpop.trf.xlu0
      %v1394 = vpop.trf.xlu0
      %v1395 = vpack.c.bf16 %v1379, %v1379
      %1396 = vst.msk [vmem:[%s244] sm:$0xf] %vm1219, %v1395
      %vm1397 = vcmask 57344
      %1398 = vst.msk [vmem:[%s248] sm:$0x1] %vm1397, %v1155
      %1399 = vst.msk [vmem:[%s248 + $0x1] sm:$0x1] %vm1397, %v1185
      %1400 = vst.msk [vmem:[%s248 + $0x2] sm:$0x1] %vm1397, %v1332
      %1401 = vst.msk [vmem:[%s248 + $0x3] sm:$0x1] %vm1397, %v1362
      %p1402 = scmp.lt.s32.totalorder %s17, 1
      %s1403 = scalar_select %p1402, %s17, 1
      %s1404 = smul.addr %s1403, 4
      %s1405 = scalar_lea.vmem %s3, %s1404
      %p1406 = scmp.lt.s32.totalorder %s17, 1
      %s1407 = scalar_select %p1406, %s17, 1
      %s1408 = smul.addr %s1407, 4
      %s1409 = scalar_lea.vmem %s4, %s1408
      %p1410 = scmp.lt.s32.totalorder %s17, 1
      %s1411 = scalar_select %p1410, %s17, 1
      %s1412 = smul.addr %s1411, 4
      %s1413 = scalar_lea.vmem %s5, %s1412
      // Predicated region
      $region33: #{cifar_residual_block.3} parent=31 // pred_check
        %p1414 = pneg %p103
      $region34: #{cifar_residual_block.3} parent=31 // pred_check_branch
        %1416 = sbr.rel (%p1414) target = $region36
      $region35: #{cifar_residual_block.3} parent=31 // pred_region
        _
      $region36: #{cifar_residual_block.3} parent=31 // pred_fallthru
        _
      // Predicated region
      $region37: #{cifar_residual_block.3} parent=31 // pred_check
        %p1417 = pneg %p129
      $region38: #{cifar_residual_block.3} parent=31 // pred_check_branch
        %1419 = sbr.rel (%p1417) target = $region40
      $region39: #{cifar_residual_block.3} parent=31 // pred_region
        _
      $region40: #{cifar_residual_block.3} parent=31 // pred_fallthru
        _
      // Predicated region
      $region41: #{cifar_residual_block.3} parent=31 // pred_check
        %p1420 = pneg %p155
      $region42: #{cifar_residual_block.3} parent=31 // pred_check_branch
        %1422 = sbr.rel (%p1420) target = $region44
      $region43: #{cifar_residual_block.3} parent=31 // pred_region
        _
      $region44: #{cifar_residual_block.3} parent=31 // pred_fallthru
        _
    $region32: #{cifar_residual_block.3} parent=5 // pred_fallthru
      _
    %p1423 = scmp.le.s32.totalorder 2, %s12
    // Predicated region
    $region45: #{cifar_residual_block.3} parent=5 // pred_check
      %p1424 = pneg %p1423
    $region46: #{cifar_residual_block.3} parent=5 // pred_check_branch
      %1426 = sbr.rel (%p1424) target = $region48
    $region47: #{cifar_residual_block.3} parent=5 // pred_region
      %s1427 = ssub.s32 %s12, 2
      // Predicated region
      $region49: #{cifar_residual_block.3} parent=47 // pred_check
        %p1428 = pneg %p109
      $region50: #{cifar_residual_block.3} parent=47 // pred_check_branch
        %1430 = sbr.rel (%p1428) target = $region52
      $region51: #{cifar_residual_block.3} parent=47 // pred_region
        %p1431 = scmp.lt.s32.totalorder %s18, 1
        %s1432 = scalar_select %p1431, %s18, 1
        %s1433 = smul.addr %s1432, 4
        %s1434 = scalar_lea.vmem %s3, %s1433
      $region52: #{cifar_residual_block.3} parent=47 // pred_fallthru
        _
      // Predicated region
      $region53: #{cifar_residual_block.3} parent=47 // pred_check
        %p1435 = pneg %p135
      $region54: #{cifar_residual_block.3} parent=47 // pred_check_branch
        %1437 = sbr.rel (%p1435) target = $region56
      $region55: #{cifar_residual_block.3} parent=47 // pred_region
        %p1438 = scmp.lt.s32.totalorder %s18, 1
        %s1439 = scalar_select %p1438, %s18, 1
        %s1440 = smul.addr %s1439, 4
        %s1441 = scalar_lea.vmem %s4, %s1440
      $region56: #{cifar_residual_block.3} parent=47 // pred_fallthru
        _
      // Predicated region
      $region57: #{cifar_residual_block.3} parent=47 // pred_check
        %p1442 = pneg %p161
      $region58: #{cifar_residual_block.3} parent=47 // pred_check_branch
        %1444 = sbr.rel (%p1442) target = $region60
      $region59: #{cifar_residual_block.3} parent=47 // pred_region
        %p1445 = scmp.lt.s32.totalorder %s18, 1
        %s1446 = scalar_select %p1445, %s18, 1
        %s1447 = smul.addr %s1446, 4
        %s1448 = scalar_lea.vmem %s5, %s1447
      $region60: #{cifar_residual_block.3} parent=47 // pred_fallthru
        _
    $region48: #{cifar_residual_block.3} parent=5 // pred_fallthru
      _
  $region6: #{cifar_residual_block.3} parent=0 // loop_footer
    %s16 = sadd.s32 1, %s12
  $region7: #{cifar_residual_block.3} parent=0 // loop_footer_branch
    %11 = sbr.rel target = $region3
  $region8: #{cifar_residual_block.3} parent=0 // loop_exit
    _

// kernel: cifar_residual_block.4
$region0: #{cifar_residual_block.4}
  #allocation0 [shape = 'u32[]', space=smem, size = 0x4, offset = 0x4, fixed_abs, tag = 'smem constant byte address 0x4 - core index']
  #allocation1 [shape = 'u32[144,128]{1,0:T(1,128)}', space=vmem, size = 0x12000, scoped, tag = 'internal scratch']
  #allocation2 [shape = 'bf16[10,10,8]{2,1,0:T(8,128)(2,1)}', space=vmem, size = 0xa000, scoped, tag = 'scratch operand']
  #allocation3 [shape = 'bf16[8,8,72]{2,1,0:T(8,128)(2,1)}', space=vmem, size = 0x4000, scoped, tag = 'scratch operand']
  %s0 = inlined_call_operand.vmem [shape: bf16[2,8,64], index: 0, kind: input, shape index: {}]
  %s1 = inlined_call_operand.vmem [shape: bf16[72,8], index: 1, kind: input, shape index: {}]
  %s2 = inlined_call_operand.vmem [shape: f32[8,1], index: 2, kind: input, shape index: {}]
  %s3 = inlined_call_operand.vmem [shape: f32[8,1], index: 3, kind: input, shape index: {}]
  %s4 = inlined_call_operand.vmem [shape: bf16[2,8,64], index: 4, kind: output, shape index: {0}]
  %s5 = inlined_call_operand.vmem [shape: f32[2,2,8], index: 5, kind: output, shape index: {1}]
  %6 = xla_tuple %s4, %s5
  %s7 = sld [smem:[#allocation0]]
  $region57: #{cifar_residual_block.4} parent=0
    _
  %s9 = ssub.s32 1, %s7
  %s10 = scalar_select 0, %s9, %s7
  loop: start=0, step=1, limit=4
  $region2: #{cifar_residual_block.4} parent=0 // loop_pre_header
    _
  $region3: #{cifar_residual_block.4} parent=0 // loop_header
    %s12 = sphi 0, %s16
    %p13 = scmp.ge.s32.totalorder %s12, 4
    %s22 = sphi 0, %s24
    %s25 = sphi 0, %s22
    %s26 = sphi 0, %s25
    %s42 = sphi 0, %s26
    %s46 = sphi 0, %s46
    %s48 = sphi 0, %s46
    %s49 = sphi 0, %s48
    %s63 = sphi 0, %s49
    %s67 = sphi 0, %s67
    %s69 = sphi 0, %s67
    %s70 = sphi 0, %s69
    %s84 = sphi 0, %s70
    %s88 = sphi 0, %s88
    %s90 = sphi 0, %s88
    %s91 = sphi 0, %s90
    %s105 = sphi 0, %s91
    %s111 = sphi 0, %s113
    %s114 = sphi 0, %s111
    %s115 = sphi 0, %s114
    %s131 = sphi 0, %s115
    %s137 = sphi 0, %s139
    %s140 = sphi 0, %s137
    %s141 = sphi 0, %s140
    %s157 = sphi 0, %s141
  $region4: #{cifar_residual_block.4} parent=0 // loop_header_branch
    %15 = sbr.rel (%p13) target = $region8
  $region5: #{cifar_residual_block.4} parent=0 // loop_body
    %s17 = ssub.s32 %s12, 1
    %s18 = ssub.s32 %s12, 2
    %s19 = sadd.s32 %s12, 1
    %s20 = ssub.s32 %s12, %s19
    %p21 = scmp.eq.s32.totalorder %s20, 0
    %s23 = sadd.s32 %s22, 1
    %s24 = scalar_select %p21, %s22, %s23
    %p27 = pneg %p21
    %p28 = scmp.eq.s32.totalorder %s12, 1
    %p29 = por %p27, %p28
    %p30 = scmp.ne.s32.totalorder %s22, %s25
    %p31 = scmp.eq.s32.totalorder %s12, 0
    %p32 = por %p30, %p31
    %p33 = scmp.ne.s32.totalorder %s22, %s25
    %p34 = scmp.eq.s32.totalorder %s17, 1
    %p35 = por %p33, %p34
    %p36 = scmp.ne.s32.totalorder %s25, %s26
    %p37 = scmp.eq.s32.totalorder %s17, 0
    %p38 = por %p36, %p37
    %p39 = scmp.ne.s32.totalorder %s25, %s26
    %p40 = scmp.eq.s32.totalorder %s18, 1
    %p41 = por %p39, %p40
    %p43 = scmp.ne.s32.totalorder %s26, %s42
    %p44 = scmp.eq.s32.totalorder %s18, 0
    %p45 = por %p43, %p44
    %s47 = sadd.s32 %s46, 1
    %p50 = scmp.eq.s32.totalorder %s12, 1
    %p51 = scmp.ne.s32.totalorder %s46, %s48
    %p52 = scmp.eq.s32.totalorder %s12, 0
    %p53 = por %p51, %p52
    %p54 = scmp.ne.s32.totalorder %s46, %s48
    %p55 = scmp.eq.s32.totalorder %s17, 1
    %p56 = por %p54, %p55
    %p57 = scmp.ne.s32.totalorder %s48, %s49
    %p58 = scmp.eq.s32.totalorder %s17, 0
    %p59 = por %p57, %p58
    %p60 = scmp.ne.s32.totalorder %s48, %s49
    %p61 = scmp.eq.s32.totalorder %s18, 1
    %p62 = por %p60, %p61
    %p64 = scmp.ne.s32.totalorder %s49, %s63
    %p65 = scmp.eq.s32.totalorder %s18, 0
    %p66 = por %p64, %p65
    %s68 = sadd.s32 %s67, 1
    %p71 = scmp.eq.s32.totalorder %s12, 1
    %p72 = scmp.ne.s32.totalorder %s67, %s69
    %p73 = scmp.eq.s32.totalorder %s12, 0
    %p74 = por %p72, %p73
    %p75 = scmp.ne.s32.totalorder %s67, %s69
    %p76 = scmp.eq.s32.totalorder %s17, 1
    %p77 = por %p75, %p76
    %p78 = scmp.ne.s32.totalorder %s69, %s70
    %p79 = scmp.eq.s32.totalorder %s17, 0
    %p80 = por %p78, %p79
    %p81 = scmp.ne.s32.totalorder %s69, %s70
    %p82 = scmp.eq.s32.totalorder %s18, 1
    %p83 = por %p81, %p82
    %p85 = scmp.ne.s32.totalorder %s70, %s84
    %p86 = scmp.eq.s32.totalorder %s18, 0
    %p87 = por %p85, %p86
    %s89 = sadd.s32 %s88, 1
    %p92 = scmp.eq.s32.totalorder %s12, 1
    %p93 = scmp.ne.s32.totalorder %s88, %s90
    %p94 = scmp.eq.s32.totalorder %s12, 0
    %p95 = por %p93, %p94
    %p96 = scmp.ne.s32.totalorder %s88, %s90
    %p97 = scmp.eq.s32.totalorder %s17, 1
    %p98 = por %p96, %p97
    %p99 = scmp.ne.s32.totalorder %s90, %s91
    %p100 = scmp.eq.s32.totalorder %s17, 0
    %p101 = por %p99, %p100
    %p102 = scmp.ne.s32.totalorder %s90, %s91
    %p103 = scmp.eq.s32.totalorder %s18, 1
    %p104 = por %p102, %p103
    %p106 = scmp.ne.s32.totalorder %s91, %s105
    %p107 = scmp.eq.s32.totalorder %s18, 0
    %p108 = por %p106, %p107
    %s109 = ssub.s32 %s12, %s19
    %p110 = scmp.eq.s32.totalorder %s109, 0
    %s112 = sadd.s32 %s111, 1
    %s113 = scalar_select %p110, %s111, %s112
    %p116 = pneg %p110
    %p117 = scmp.eq.s32.totalorder %s12, 1
    %p118 = por %p116, %p117
    %p119 = scmp.ne.s32.totalorder %s111, %s114
    %p120 = scmp.eq.s32.totalorder %s12, 0
    %p121 = por %p119, %p120
    %p122 = scmp.ne.s32.totalorder %s111, %s114
    %p123 = scmp.eq.s32.totalorder %s17, 1
    %p124 = por %p122, %p123
    %p125 = scmp.ne.s32.totalorder %s114, %s115
    %p126 = scmp.eq.s32.totalorder %s17, 0
    %p127 = por %p125, %p126
    %p128 = scmp.ne.s32.totalorder %s114, %s115
    %p129 = scmp.eq.s32.totalorder %s18, 1
    %p130 = por %p128, %p129
    %p132 = scmp.ne.s32.totalorder %s115, %s131
    %p133 = scmp.eq.s32.totalorder %s18, 0
    %p134 = por %p132, %p133
    %s135 = ssub.s32 %s12, %s19
    %p136 = scmp.eq.s32.totalorder %s135, 0
    %s138 = sadd.s32 %s137, 1
    %s139 = scalar_select %p136, %s137, %s138
    %p142 = pneg %p136
    %p143 = scmp.eq.s32.totalorder %s12, 1
    %p144 = por %p142, %p143
    %p145 = scmp.ne.s32.totalorder %s137, %s140
    %p146 = scmp.eq.s32.totalorder %s12, 0
    %p147 = por %p145, %p146
    %p148 = scmp.ne.s32.totalorder %s137, %s140
    %p149 = scmp.eq.s32.totalorder %s17, 1
    %p150 = por %p148, %p149
    %p151 = scmp.ne.s32.totalorder %s140, %s141
    %p152 = scmp.eq.s32.totalorder %s17, 0
    %p153 = por %p151, %p152
    %p154 = scmp.ne.s32.totalorder %s140, %s141
    %p155 = scmp.eq.s32.totalorder %s18, 1
    %p156 = por %p154, %p155
    %p158 = scmp.ne.s32.totalorder %s141, %s157
    %p159 = scmp.eq.s32.totalorder %s18, 0
    %p160 = por %p158, %p159
    %p161 = scmp.le.s32.totalorder 1, %s12
    %p162 = scmp.lt.s32.totalorder %s12, 3
    %p163 = pnand %p161, %p162
    %p164 = pneg %p163
    // Predicated region
    $region9: #{cifar_residual_block.4} parent=5 // pred_check
      _
    $region10: #{cifar_residual_block.4} parent=5 // pred_check_branch
      %166 = sbr.rel (%p163) target = $region12
    $region11: #{cifar_residual_block.4} parent=5 // pred_region
      %s167 = ssub.s32 %s12, 1
      // Predicated region
      $region13: #{cifar_residual_block.4} parent=11 // pred_check
        %p168 = pneg %p59
      $region14: #{cifar_residual_block.4} parent=11 // pred_check_branch
        %170 = sbr.rel (%p168) target = $region16
      $region15: #{cifar_residual_block.4} parent=11 // pred_region
        _
      $region16: #{cifar_residual_block.4} parent=11 // pred_fallthru
        _
      // Predicated region
      $region17: #{cifar_residual_block.4} parent=11 // pred_check
        %p171 = pneg %p80
      $region18: #{cifar_residual_block.4} parent=11 // pred_check_branch
        %173 = sbr.rel (%p171) target = $region20
      $region19: #{cifar_residual_block.4} parent=11 // pred_region
        _
      $region20: #{cifar_residual_block.4} parent=11 // pred_fallthru
        _
      // Predicated region
      $region21: #{cifar_residual_block.4} parent=11 // pred_check
        %p174 = pneg %p101
      $region22: #{cifar_residual_block.4} parent=11 // pred_check_branch
        %176 = sbr.rel (%p174) target = $region24
      $region23: #{cifar_residual_block.4} parent=11 // pred_region
        _
      $region24: #{cifar_residual_block.4} parent=11 // pred_fallthru
        _
    $region12: #{cifar_residual_block.4} parent=5 // pred_fallthru
      _
    %p177 = scmp.lt.s32.totalorder %s12, 2
    // Predicated region
    $region25: #{cifar_residual_block.4} parent=5 // pred_check
      %p178 = pneg %p177
    $region26: #{cifar_residual_block.4} parent=5 // pred_check_branch
      %180 = sbr.rel (%p178) target = $region28
    $region27: #{cifar_residual_block.4} parent=5 // pred_region
      // Predicated region
      $region29: #{cifar_residual_block.4} parent=27 // pred_check
        %p181 = pneg %p32
      $region30: #{cifar_residual_block.4} parent=27 // pred_check_branch
        %183 = sbr.rel (%p181) target = $region32
      $region31: #{cifar_residual_block.4} parent=27 // pred_region
        %p184 = scmp.lt.s32.totalorder %s12, 1
        %s185 = scalar_select %p184, %s12, 1
        %s186 = smul.addr %s185, 4
        %s187 = scalar_lea.vmem %s0, %s186
      $region32: #{cifar_residual_block.4} parent=27 // pred_fallthru
        _
    $region28: #{cifar_residual_block.4} parent=5 // pred_fallthru
      _
    %p188 = scmp.le.s32.totalorder 1, %s12
    %p189 = scmp.lt.s32.totalorder %s12, 3
    %p190 = pnand %p188, %p189
    %p191 = pneg %p190
    // Predicated region
    $region33: #{cifar_residual_block.4} parent=5 // pred_check
      _
    $region34: #{cifar_residual_block.4} parent=5 // pred_check_branch
      %193 = sbr.rel (%p190) target = $region36
    $region35: #{cifar_residual_block.4} parent=5 // pred_region
      %s194 = ssub.s32 %s12, 1
      %p195 = scmp.lt.s32.totalorder %s17, 1
      %s196 = scalar_select %p195, %s17, 1
      %s197 = smul.addr %s196, 4
      %s198 = scalar_lea.vmem %s0, %s197
      %p199 = pneg %p38
      %p200 = pneg %p35
      %p201 = pneg %p59
      %p202 = pneg %p56
      %p203 = pneg %p80
      %p204 = pneg %p77
      %p205 = pneg %p101
      %p206 = pneg %p98
      %p207 = pneg %p127
      %p208 = pneg %p124
      %p209 = scmp.lt.s32.totalorder %s17, 1
      %s210 = scalar_select %p209, %s17, 1
      %s211 = smul.addr %s210, 4
      %s212 = scalar_lea.vmem %s4, %s211
      %p213 = pneg %p153
      %p214 = pneg %p150
      %p215 = scmp.lt.s32.totalorder %s17, 1
      %s216 = scalar_select %p215, %s17, 1
      %s217 = smul.addr %s216, 2
      %s218 = scalar_lea.vmem %s5, %s217
      %p219 = scmp.lt.s32.totalorder %s17, 1
      %s220 = scalar_select %p219, %s17, 1
      %s221 = smul.addr %s220, 4
      %s222 = scalar_lea.vmem %s0, %s221
      %p223 = scmp.lt.s32.totalorder %s17, 1
      %s224 = scalar_select %p223, %s17, 1
      %s225 = smul.addr %s224, 4
      %s226 = scalar_lea.vmem %s4, %s225
      %p227 = scmp.lt.s32.totalorder %s17, 1
      %s228 = scalar_select %p227, %s17, 1
      %s229 = smul.addr %s228, 2
      %s230 = scalar_lea.vmem %s5, %s229
      %v232 = vld [vmem:[%s2] sm:$0xff]
      %v233 = vld [vmem:[%s3] sm:$0xff]
      %vm234 = vcmask 60416
      %235 = vst.msk [vmem:[#allocation2] sm:$0xf] %vm234, 0
      %vm236 = vcmask 57344
      %237 = vst.msk [vmem:[#allocation2 + $0x4] sm:$0x1] %vm236, 0
      %s238 = scalar_lea.vmem [#allocation2], 72
      %239 = vst.msk [vmem:[%s238] sm:$0xf] %vm234, 0
      %240 = vst.msk [vmem:[%s238 + $0x4] sm:$0x1] %vm236, 0
      %vm241 = vcmask 57344
      %vm242 = vsmask.f32 256
      %vm243 = vmand %vm241, %vm242
      %v244 = vld [vmem:[#allocation2] sm:$0x1]
      %v245 = vsel %vm243, 0, %v244
      %246 = vst [vmem:[#allocation2] sm:$0x1] %v245
      %v247 = vld [vmem:[#allocation2 + $0x8] sm:$0x1]
      %v248 = vsel %vm243, 0, %v247
      %249 = vst [vmem:[#allocation2 + $0x8] sm:$0x1] %v248
      %v250 = vld [vmem:[#allocation2 + $0x10] sm:$0x1]
      %v251 = vsel %vm243, 0, %v250
      %252 = vst [vmem:[#allocation2 + $0x10] sm:$0x1] %v251
      %v253 = vld [vmem:[#allocation2 + $0x18] sm:$0x1]
      %v254 = vsel %vm243, 0, %v253
      %255 = vst [vmem:[#allocation2 + $0x18] sm:$0x1] %v254
      %v256 = vld [vmem:[#allocation2 + $0x20] sm:$0x1]
      %v257 = vsel %vm243, 0, %v256
      %258 = vst [vmem:[#allocation2 + $0x20] sm:$0x1] %v257
      %v259 = vld [vmem:[#allocation2 + $0x28] sm:$0x1]
      %v260 = vsel %vm243, 0, %v259
      %261 = vst [vmem:[#allocation2 + $0x28] sm:$0x1] %v260
      %v262 = vld [vmem:[#allocation2 + $0x30] sm:$0x1]
      %v263 = vsel %vm243, 0, %v262
      %264 = vst [vmem:[#allocation2 + $0x30] sm:$0x1] %v263
      %v265 = vld [vmem:[#allocation2 + $0x38] sm:$0x1]
      %v266 = vsel %vm243, 0, %v265
      %267 = vst [vmem:[#allocation2 + $0x38] sm:$0x1] %v266
      %v268 = vld [vmem:[#allocation2 + $0x40] sm:$0x1]
      %v269 = vsel %vm243, 0, %v268
      %270 = vst [vmem:[#allocation2 + $0x40] sm:$0x1] %v269
      %v271 = vld [vmem:[#allocation2 + $0x48] sm:$0x1]
      %v272 = vsel %vm243, 0, %v271
      %273 = vst [vmem:[#allocation2 + $0x48] sm:$0x1] %v272
      %vm274 = vsmask.f32 7938
      %vm275 = vmand %vm241, %vm274
      %v276 = vld [vmem:[#allocation2 + $0x4] sm:$0x1]
      %v277 = vsel %vm275, 0, %v276
      %278 = vst [vmem:[#allocation2 + $0x4] sm:$0x1] %v277
      %v279 = vld [vmem:[#allocation2 + $0xc] sm:$0x1]
      %v280 = vsel %vm275, 0, %v279
      %281 = vst [vmem:[#allocation2 + $0xc] sm:$0x1] %v280
      %v282 = vld [vmem:[#allocation2 + $0x14] sm:$0x1]
      %v283 = vsel %vm275, 0, %v282
      %284 = vst [vmem:[#allocation2 + $0x14] sm:$0x1] %v283
      %v285 = vld [vmem:[#allocation2 + $0x1c] sm:$0x1]
      %v286 = vsel %vm275, 0, %v285
      %287 = vst [vmem:[#allocation2 + $0x1c] sm:$0x1] %v286
      %v288 = vld [vmem:[#allocation2 + $0x24] sm:$0x1]
      %v289 = vsel %vm275, 0, %v288
      %290 = vst [vmem:[#allocation2 + $0x24] sm:$0x1] %v289
      %v291 = vld [vmem:[#allocation2 + $0x2c] sm:$0x1]
      %v292 = vsel %vm275, 0, %v291
      %293 = vst [vmem:[#allocation2 + $0x2c] sm:$0x1] %v292
      %v294 = vld [vmem:[#allocation2 + $0x34] sm:$0x1]
      %v295 = vsel %vm275, 0, %v294
      %296 = vst [vmem:[#allocation2 + $0x34] sm:$0x1] %v295
      %v297 = vld [vmem:[#allocation2 + $0x3c] sm:$0x1]
      %v298 = vsel %vm275, 0, %v297
      %299 = vst [vmem:[#allocation2 + $0x3c] sm:$0x1] %v298
      %v300 = vld [vmem:[#allocation2 + $0x44] sm:$0x1]
      %v301 = vsel %vm275, 0, %v300
      %302 = vst [vmem:[#allocation2 + $0x44] sm:$0x1] %v301
      %v303 = vld [vmem:[#allocation2 + $0x4c] sm:$0x1]
      %v304 = vsel %vm275, 0, %v303
      %305 = vst [vmem:[#allocation2 + $0x4c] sm:$0x1] %v304
      %v306 = vld [vmem:[%s222] sm:$0xf]
      %v307 = vunpack.c.l.bf16 %v306
      %309 = vset.pattern.permute.xlu0 0
      %310 = vperm.xlu0 %309, %v232
      %v311 = vpop.permute.xlu0 %310
      %v313 = vmul.f32 %v307, %v311
      %315 = vset.pattern.permute.xlu0 0
      %316 = vperm.xlu0 %315, %v233
      %v317 = vpop.permute.xlu0 %316
      %v319 = vadd.f32 %v313, %v317
      %v320 = vmax.f32 %v319, 0.0
      %321 = vxpose.xlu0.b32.start [1/16] %v320, 128
      %322 = vxpose.xlu0.b32.cont [2/16] 0.0, 128
      %323 = vxpose.xlu0.b32.cont [3/16] 0.0, 128
      %324 = vxpose.xlu0.b32.cont [4/16] 0.0, 128
      %325 = vxpose.xlu0.b32.cont [5/16] 0.0, 128
      %326 = vxpose.xlu0.b32.cont [6/16] 0.0, 128
      %327 = vxpose.xlu0.b32.cont [7/16] 0.0, 128
      %328 = vxpose.xlu0.b32.cont [8/16] 0.0, 128
      %329 = vxpose.xlu0.b32.cont [9/16] 0.0, 128
      %330 = vxpose.xlu0.b32.cont [10/16] 0.0, 128
      %331 = vxpose.xlu0.b32.cont [11/16] 0.0, 128
      %332 = vxpose.xlu0.b32.cont [12/16] 0.0, 128
      %333 = vxpose.xlu0.b32.cont [13/16] 0.0, 128
      %334 = vxpose.xlu0.b32.cont [14/16] 0.0, 128
      %335 = vxpose.xlu0.b32.cont [15/16] 0.0, 128
      %336 = vxpose.xlu0.b32.end [16/16] 0.0, 128
      %v337 = vpop.trf.xlu0
      %v338 = vpop.trf.xlu0
      %v339 = vpop.trf.xlu0
      %v340 = vpop.trf.xlu0
      %v341 = vpop.trf.xlu0
      %v342 = vpop.trf.xlu0
      %v343 = vpop.trf.xlu0
      %v344 = vpop.trf.xlu0
      %v345 = vpop.trf.xlu0
      %v346 = vpop.trf.xlu0
      %v347 = vpop.trf.xlu0
      %v348 = vpop.trf.xlu0
      %v349 = vpop.trf.xlu0
      %v350 = vpop.trf.xlu0
      %v351 = vpop.trf.xlu0
      %v352 = vpop.trf.xlu0
      %v353 = vpack.c.bf16 %v337, %v337
      %v354 = vpack.c.bf16 %v338, %v338
      %v355 = vpack.c.bf16 %v339, %v339
      %v356 = vpack.c.bf16 %v340, %v340
      %v357 = vpack.c.bf16 %v341, %v341
      %v358 = vpack.c.bf16 %v342, %v342
      %v359 = vpack.c.bf16 %v343, %v343
      %v360 = vpack.c.bf16 %v344, %v344
      %v369 = vunpack.c.l.b16 %v353
      %v370 = vunpack.c.l.b16 %v354
      %v371 = vunpack.c.l.b16 %v355
      %v372 = vunpack.c.l.b16 %v356
      %v373 = vunpack.c.l.b16 %v357
      %v374 = vunpack.c.l.b16 %v358
      %v375 = vunpack.c.l.b16 %v359
      %v376 = vunpack.c.l.b16 %v360
      %v377 = vpack.c.b16 %v369, %v369
      %v378 = vpack.c.b16 %v370, %v370
      %v379 = vpack.c.b16 %v371, %v371
      %v380 = vpack.c.b16 %v372, %v372
      %v381 = vpack.c.b16 %v373, %v373
      %v382 = vpack.c.b16 %v374, %v374
      %v383 = vpack.c.b16 %v375, %v375
      %v384 = vpack.c.b16 %v376, %v376
      %v386 = vshrl.u32 %v377, 16
      %v388 = vrot.slane %v386, 7
      %v389 = vshll.u32 %v377, 16
      %v391 = vor.u32 %v388, %v389
      %v392 = vrot.slane %v388, 4
      %v394 = vshrl.u32 %v378, 16
      %v396 = vrot.slane %v394, 7
      %v397 = vshll.u32 %v378, 16
      %v399 = vor.u32 %v396, %v397
      %v400 = vrot.slane %v396, 4
      %v402 = vshrl.u32 %v379, 16
      %v404 = vrot.slane %v402, 7
      %v405 = vshll.u32 %v379, 16
      %v407 = vor.u32 %v404, %v405
      %v408 = vrot.slane %v404, 4
      %v410 = vshrl.u32 %v380, 16
      %v412 = vrot.slane %v410, 7
      %v413 = vshll.u32 %v380, 16
      %v415 = vor.u32 %v412, %v413
      %v416 = vrot.slane %v412, 4
      %v418 = vshrl.u32 %v381, 16
      %v420 = vrot.slane %v418, 7
      %v421 = vshll.u32 %v381, 16
      %v423 = vor.u32 %v420, %v421
      %v424 = vrot.slane %v420, 4
      %v426 = vshrl.u32 %v382, 16
      %v428 = vrot.slane %v426, 7
      %v429 = vshll.u32 %v382, 16
      %v431 = vor.u32 %v428, %v429
      %v432 = vrot.slane %v428, 4
      %v434 = vshrl.u32 %v383, 16
      %v436 = vrot.slane %v434, 7
      %v437 = vshll.u32 %v383, 16
      %v439 = vor.u32 %v436, %v437
      %v440 = vrot.slane %v436, 4
      %v442 = vshrl.u32 %v384, 16
      %v444 = vrot.slane %v442, 7
      %v445 = vshll.u32 %v384, 16
      %v447 = vor.u32 %v444, %v445
      %v448 = vrot.slane %v444, 4
      %s465 = scalar_lea.vmem [#allocation2], 8
      %vm466 = vcmask 60416
      %vm467 = vmand %vm466, %vm274
      %v468 = vld [vmem:[%s465] sm:$0xf]
      %v469 = vsel %vm467, %v391, %v468
      %470 = vst [vmem:[%s465] sm:$0xf] %v469
      %v471 = vld [vmem:[%s465 + $0x4] sm:$0x1]
      %v472 = vsel %vm243, %v392, %v471
      %473 = vst [vmem:[%s465 + $0x4] sm:$0x1] %v472
      %v474 = vld [vmem:[%s465 + $0x8] sm:$0xf]
      %v475 = vsel %vm467, %v399, %v474
      %476 = vst [vmem:[%s465 + $0x8] sm:$0xf] %v475
      %v477 = vld [vmem:[%s465 + $0xc] sm:$0x1]
      %v478 = vsel %vm243, %v400, %v477
      %479 = vst [vmem:[%s465 + $0xc] sm:$0x1] %v478
      %v480 = vld [vmem:[%s465 + $0x10] sm:$0xf]
      %v481 = vsel %vm467, %v407, %v480
      %482 = vst [vmem:[%s465 + $0x10] sm:$0xf] %v481
      %v483 = vld [vmem:[%s465 + $0x14] sm:$0x1]
      %v484 = vsel %vm243, %v408, %v483
      %485 = vst [vmem:[%s465 + $0x14] sm:$0x1] %v484
      %v486 = vld [vmem:[%s465 + $0x18] sm:$0xf]
      %v487 = vsel %vm467, %v415, %v486
      %488 = vst [vmem:[%s465 + $0x18] sm:$0xf] %v487
      %v489 = vld [vmem:[%s465 + $0x1c] sm:$0x1]
      %v490 = vsel %vm243, %v416, %v489
      %491 = vst [vmem:[%s465 + $0x1c] sm:$0x1] %v490
      %v492 = vld [vmem:[%s465 + $0x20] sm:$0xf]
      %v493 = vsel %vm467, %v423, %v492
      %494 = vst [vmem:[%s465 + $0x20] sm:$0xf] %v493
      %v495 = vld [vmem:[%s465 + $0x24] sm:$0x1]
      %v496 = vsel %vm243, %v424, %v495
      %497 = vst [vmem:[%s465 + $0x24] sm:$0x1] %v496
      %v498 = vld [vmem:[%s465 + $0x28] sm:$0xf]
      %v499 = vsel %vm467, %v431, %v498
      %500 = vst [vmem:[%s465 + $0x28] sm:$0xf] %v499
      %v501 = vld [vmem:[%s465 + $0x2c] sm:$0x1]
      %v502 = vsel %vm243, %v432, %v501
      %503 = vst [vmem:[%s465 + $0x2c] sm:$0x1] %v502
      %v504 = vld [vmem:[%s465 + $0x30] sm:$0xf]
      %v505 = vsel %vm467, %v439, %v504
      %506 = vst [vmem:[%s465 + $0x30] sm:$0xf] %v505
      %v507 = vld [vmem:[%s465 + $0x34] sm:$0x1]
      %v508 = vsel %vm243, %v440, %v507
      %509 = vst [vmem:[%s465 + $0x34] sm:$0x1] %v508
      %v510 = vld [vmem:[%s465 + $0x38] sm:$0xf]
      %v511 = vsel %vm467, %v447, %v510
      %512 = vst [vmem:[%s465 + $0x38] sm:$0xf] %v511
      %v513 = vld [vmem:[%s465 + $0x3c] sm:$0x1]
      %v514 = vsel %vm243, %v448, %v513
      %515 = vst [vmem:[%s465 + $0x3c] sm:$0x1] %v514
      %v516 = vld [vmem:[#allocation2] sm:$0xf]
      %v517 = vld [vmem:[#allocation2 + $0x8] sm:$0xf]
      %v518 = vld [vmem:[#allocation2 + $0x10] sm:$0xf]
      %v519 = vld [vmem:[#allocation2 + $0x18] sm:$0xf]
      %v520 = vld [vmem:[#allocation2 + $0x20] sm:$0xf]
      %v521 = vld [vmem:[#allocation2 + $0x28] sm:$0xf]
      %v522 = vld [vmem:[#allocation2 + $0x30] sm:$0xf]
      %v523 = vld [vmem:[#allocation2 + $0x38] sm:$0xf]
      %524 = vst.msk [vmem:[#allocation3] sm:$0xf] %vm234, %v516
      %525 = vst.msk [vmem:[#allocation3 + $0x4] sm:$0xf] %vm234, %v517
      %526 = vst.msk [vmem:[#allocation3 + $0x8] sm:$0xf] %vm234, %v518
      %527 = vst.msk [vmem:[#allocation3 + $0xc] sm:$0xf] %vm234, %v519
      %528 = vst.msk [vmem:[#allocation3 + $0x10] sm:$0xf] %vm234, %v520
      %529 = vst.msk [vmem:[#allocation3 + $0x14] sm:$0xf] %vm234, %v521
      %530 = vst.msk [vmem:[#allocation3 + $0x18] sm:$0xf] %vm234, %v522
      %531 = vst.msk [vmem:[#allocation3 + $0x1c] sm:$0xf] %vm234, %v523
      %v532 = vld [vmem:[#allocation2] sm:$0xf]
      %v533 = vld [vmem:[#allocation2 + $0x4] sm:$0x1]
      %v534 = vld [vmem:[#allocation2 + $0x8] sm:$0xf]
      %v535 = vld [vmem:[#allocation2 + $0xc] sm:$0x1]
      %v536 = vld [vmem:[#allocation2 + $0x10] sm:$0xf]
      %v537 = vld [vmem:[#allocation2 + $0x14] sm:$0x1]
      %v538 = vld [vmem:[#allocation2 + $0x18] sm:$0xf]
      %v539 = vld [vmem:[#allocation2 + $0x1c] sm:$0x1]
      %v540 = vld [vmem:[#allocation2 + $0x20] sm:$0xf]
      %v541 = vld [vmem:[#allocation2 + $0x24] sm:$0x1]
      %v542 = vld [vmem:[#allocation2 + $0x28] sm:$0xf]
      %v543 = vld [vmem:[#allocation2 + $0x2c] sm:$0x1]
      %v544 = vld [vmem:[#allocation2 + $0x30] sm:$0xf]
      %v545 = vld [vmem:[#allocation2 + $0x34] sm:$0x1]
      %v546 = vld [vmem:[#allocation2 + $0x38] sm:$0xf]
      %v547 = vld [vmem:[#allocation2 + $0x3c] sm:$0x1]
      %vm548 = vsmask.f32 3328
      %vm549 = vsmask.f32 7440
      %vm550 = vmor %vm548, %vm549
      %v552 = vshrl.u32 %v532, 16
      %v554 = vrot.slane %v552, 4
      %v555 = vshll.u32 %v532, 16
      %v557 = vrot.slane %v555, 5
      %v558 = vor.u32 %v554, %v557
      %v559 = vrot.slane %v558, 4
      %v561 = vshll.u32 %v533, 16
      %v563 = vrot.slane %v561, 5
      %v564 = vsel %vm550, %v559, %v563
      %v566 = vshrl.u32 %v534, 16
      %v568 = vrot.slane %v566, 4
      %v569 = vshll.u32 %v534, 16
      %v571 = vrot.slane %v569, 5
      %v572 = vor.u32 %v568, %v571
      %v573 = vrot.slane %v572, 4
      %v575 = vshll.u32 %v535, 16
      %v577 = vrot.slane %v575, 5
      %v578 = vsel %vm550, %v573, %v577
      %v580 = vshrl.u32 %v536, 16
      %v582 = vrot.slane %v580, 4
      %v583 = vshll.u32 %v536, 16
      %v585 = vrot.slane %v583, 5
      %v586 = vor.u32 %v582, %v585
      %v587 = vrot.slane %v586, 4
      %v589 = vshll.u32 %v537, 16
      %v591 = vrot.slane %v589, 5
      %v592 = vsel %vm550, %v587, %v591
      %v594 = vshrl.u32 %v538, 16
      %v596 = vrot.slane %v594, 4
      %v597 = vshll.u32 %v538, 16
      %v599 = vrot.slane %v597, 5
      %v600 = vor.u32 %v596, %v599
      %v601 = vrot.slane %v600, 4
      %v603 = vshll.u32 %v539, 16
      %v605 = vrot.slane %v603, 5
      %v606 = vsel %vm550, %v601, %v605
      %v608 = vshrl.u32 %v540, 16
      %v610 = vrot.slane %v608, 4
      %v611 = vshll.u32 %v540, 16
      %v613 = vrot.slane %v611, 5
      %v614 = vor.u32 %v610, %v613
      %v615 = vrot.slane %v614, 4
      %v617 = vshll.u32 %v541, 16
      %v619 = vrot.slane %v617, 5
      %v620 = vsel %vm550, %v615, %v619
      %v622 = vshrl.u32 %v542, 16
      %v624 = vrot.slane %v622, 4
      %v625 = vshll.u32 %v542, 16
      %v627 = vrot.slane %v625, 5
      %v628 = vor.u32 %v624, %v627
      %v629 = vrot.slane %v628, 4
      %v631 = vshll.u32 %v543, 16
      %v633 = vrot.slane %v631, 5
      %v634 = vsel %vm550, %v629, %v633
      %v636 = vshrl.u32 %v544, 16
      %v638 = vrot.slane %v636, 4
      %v639 = vshll.u32 %v544, 16
      %v641 = vrot.slane %v639, 5
      %v642 = vor.u32 %v638, %v641
      %v643 = vrot.slane %v642, 4
      %v645 = vshll.u32 %v545, 16
      %v647 = vrot.slane %v645, 5
      %v648 = vsel %vm550, %v643, %v647
      %v650 = vshrl.u32 %v546, 16
      %v652 = vrot.slane %v650, 4
      %v653 = vshll.u32 %v546, 16
      %v655 = vrot.slane %v653, 5
      %v656 = vor.u32 %v652, %v655
      %v657 = vrot.slane %v656, 4
      %v659 = vshll.u32 %v547, 16
      %v661 = vrot.slane %v659, 5
      %v662 = vsel %vm550, %v657, %v661
      %663 = vrot.lane.b32.xlu0 %v564, 8
      %v664 = vpop.permute.xlu0 %663
      %665 = vrot.lane.b32.xlu0 %v578, 8
      %v666 = vpop.permute.xlu0 %665
      %667 = vrot.lane.b32.xlu0 %v592, 8
      %v668 = vpop.permute.xlu0 %667
      %669 = vrot.lane.b32.xlu0 %v606, 8
      %v670 = vpop.permute.xlu0 %669
      %671 = vrot.lane.b32.xlu0 %v620, 8
      %v672 = vpop.permute.xlu0 %671
      %673 = vrot.lane.b32.xlu0 %v634, 8
      %v674 = vpop.permute.xlu0 %673
      %675 = vrot.lane.b32.xlu0 %v648, 8
      %v676 = vpop.permute.xlu0 %675
      %677 = vrot.lane.b32.xlu0 %v662, 8
      %v678 = vpop.permute.xlu0 %677
      %vm687 = vcmask 126016
      %688 = vst.msk [vmem:[#allocation3] sm:$0xf] %vm687, %v664
      %689 = vst.msk [vmem:[#allocation3 + $0x4] sm:$0xf] %vm687, %v666
      %690 = vst.msk [vmem:[#allocation3 + $0x8] sm:$0xf] %vm687, %v668
      %691 = vst.msk [vmem:[#allocation3 + $0xc] sm:$0xf] %vm687, %v670
      %692 = vst.msk [vmem:[#allocation3 + $0x10] sm:$0xf] %vm687, %v672
      %693 = vst.msk [vmem:[#allocation3 + $0x14] sm:$0xf] %vm687, %v674
      %694 = vst.msk [vmem:[#allocation3 + $0x18] sm:$0xf] %vm687, %v676
      %695 = vst.msk [vmem:[#allocation3 + $0x1c] sm:$0xf] %vm687, %v678
      %v696 = vld [vmem:[#allocation2] sm:$0xe]
      %v697 = vld [vmem:[#allocation2 + $0x4] sm:$0x1]
      %v698 = vld [vmem:[#allocation2 + $0x8] sm:$0xe]
      %v699 = vld [vmem:[#allocation2 + $0xc] sm:$0x1]
      %v700 = vld [vmem:[#allocation2 + $0x10] sm:$0xe]
      %v701 = vld [vmem:[#allocation2 + $0x14] sm:$0x1]
      %v702 = vld [vmem:[#allocation2 + $0x18] sm:$0xe]
      %v703 = vld [vmem:[#allocation2 + $0x1c] sm:$0x1]
      %v704 = vld [vmem:[#allocation2 + $0x20] sm:$0xe]
      %v705 = vld [vmem:[#allocation2 + $0x24] sm:$0x1]
      %v706 = vld [vmem:[#allocation2 + $0x28] sm:$0xe]
      %v707 = vld [vmem:[#allocation2 + $0x2c] sm:$0x1]
      %v708 = vld [vmem:[#allocation2 + $0x30] sm:$0xe]
      %v709 = vld [vmem:[#allocation2 + $0x34] sm:$0x1]
      %v710 = vld [vmem:[#allocation2 + $0x38] sm:$0xe]
      %v711 = vld [vmem:[#allocation2 + $0x3c] sm:$0x1]
      %vm728 = vcmask 1042432
      %vm729 = vcmask 1046532
      %vm730 = vmor %vm728, %vm729
      %v731 = vrot.slane %v696, 5
      %v732 = vrot.slane %v731, 4
      %v733 = vrot.slane %v697, 5
      %v734 = vsel %vm730, %v732, %v733
      %v735 = vrot.slane %v698, 5
      %v736 = vrot.slane %v735, 4
      %v737 = vrot.slane %v699, 5
      %v738 = vsel %vm730, %v736, %v737
      %v739 = vrot.slane %v700, 5
      %v740 = vrot.slane %v739, 4
      %v741 = vrot.slane %v701, 5
      %v742 = vsel %vm730, %v740, %v741
      %v743 = vrot.slane %v702, 5
      %v744 = vrot.slane %v743, 4
      %v745 = vrot.slane %v703, 5
      %v746 = vsel %vm730, %v744, %v745
      %v747 = vrot.slane %v704, 5
      %v748 = vrot.slane %v747, 4
      %v749 = vrot.slane %v705, 5
      %v750 = vsel %vm730, %v748, %v749
      %v751 = vrot.slane %v706, 5
      %v752 = vrot.slane %v751, 4
      %v753 = vrot.slane %v707, 5
      %v754 = vsel %vm730, %v752, %v753
      %v755 = vrot.slane %v708, 5
      %v756 = vrot.slane %v755, 4
      %v757 = vrot.slane %v709, 5
      %v758 = vsel %vm730, %v756, %v757
      %v759 = vrot.slane %v710, 5
      %v760 = vrot.slane %v759, 4
      %v761 = vrot.slane %v711, 5
      %v762 = vsel %vm730, %v760, %v761
      %763 = vrot.lane.b32.xlu0 %v734, 16
      %v764 = vpop.permute.xlu0 %763
      %765 = vrot.lane.b32.xlu0 %v738, 16
      %v766 = vpop.permute.xlu0 %765
      %767 = vrot.lane.b32.xlu0 %v742, 16
      %v768 = vpop.permute.xlu0 %767
      %769 = vrot.lane.b32.xlu0 %v746, 16
      %v770 = vpop.permute.xlu0 %769
      %771 = vrot.lane.b32.xlu0 %v750, 16
      %v772 = vpop.permute.xlu0 %771
      %773 = vrot.lane.b32.xlu0 %v754, 16
      %v774 = vpop.permute.xlu0 %773
      %775 = vrot.lane.b32.xlu0 %v758, 16
      %v776 = vpop.permute.xlu0 %775
      %777 = vrot.lane.b32.xlu0 %v762, 16
      %v778 = vpop.permute.xlu0 %777
      %vm787 = vcmask 191616
      %788 = vst.msk [vmem:[#allocation3] sm:$0xf] %vm787, %v764
      %789 = vst.msk [vmem:[#allocation3 + $0x4] sm:$0xf] %vm787, %v766
      %790 = vst.msk [vmem:[#allocation3 + $0x8] sm:$0xf] %vm787, %v768
      %791 = vst.msk [vmem:[#allocation3 + $0xc] sm:$0xf] %vm787, %v770
      %792 = vst.msk [vmem:[#allocation3 + $0x10] sm:$0xf] %vm787, %v772
      %793 = vst.msk [vmem:[#allocation3 + $0x14] sm:$0xf] %vm787, %v774
      %794 = vst.msk [vmem:[#allocation3 + $0x18] sm:$0xf] %vm787, %v776
      %795 = vst.msk [vmem:[#allocation3 + $0x1c] sm:$0xf] %vm787, %v778
      %v796 = vld [vmem:[%s465] sm:$0xf]
      %v797 = vld [vmem:[%s465 + $0x8] sm:$0xf]
      %v798 = vld [vmem:[%s465 + $0x10] sm:$0xf]
      %v799 = vld [vmem:[%s465 + $0x18] sm:$0xf]
      %v800 = vld [vmem:[%s465 + $0x20] sm:$0xf]
      %v801 = vld [vmem:[%s465 + $0x28] sm:$0xf]
      %v802 = vld [vmem:[%s465 + $0x30] sm:$0xf]
      %v803 = vld [vmem:[%s465 + $0x38] sm:$0xf]
      %812 = vrot.lane.b32.xlu0 %v796, 24
      %v813 = vpop.permute.xlu0 %812
      %814 = vrot.lane.b32.xlu0 %v797, 24
      %v815 = vpop.permute.xlu0 %814
      %816 = vrot.lane.b32.xlu0 %v798, 24
      %v817 = vpop.permute.xlu0 %816
      %818 = vrot.lane.b32.xlu0 %v799, 24
      %v819 = vpop.permute.xlu0 %818
      %820 = vrot.lane.b32.xlu0 %v800, 24
      %v821 = vpop.permute.xlu0 %820
      %822 = vrot.lane.b32.xlu0 %v801, 24
      %v823 = vpop.permute.xlu0 %822
      %824 = vrot.lane.b32.xlu0 %v802, 24
      %v825 = vpop.permute.xlu0 %824
      %826 = vrot.lane.b32.xlu0 %v803, 24
      %v827 = vpop.permute.xlu0 %826
      %vm836 = vcmask 257216
      %837 = vst.msk [vmem:[#allocation3] sm:$0xf] %vm836, %v813
      %838 = vst.msk [vmem:[#allocation3 + $0x4] sm:$0xf] %vm836, %v815
      %839 = vst.msk [vmem:[#allocation3 + $0x8] sm:$0xf] %vm836, %v817
      %840 = vst.msk [vmem:[#allocation3 + $0xc] sm:$0xf] %vm836, %v819
      %841 = vst.msk [vmem:[#allocation3 + $0x10] sm:$0xf] %vm836, %v821
      %842 = vst.msk [vmem:[#allocation3 + $0x14] sm:$0xf] %vm836, %v823
      %843 = vst.msk [vmem:[#allocation3 + $0x18] sm:$0xf] %vm836, %v825
      %844 = vst.msk [vmem:[#allocation3 + $0x1c] sm:$0xf] %vm836, %v827
      %v845 = vld [vmem:[%s465] sm:$0xf]
      %v846 = vld [vmem:[%s465 + $0x4] sm:$0x1]
      %v847 = vld [vmem:[%s465 + $0x8] sm:$0xf]
      %v848 = vld [vmem:[%s465 + $0xc] sm:$0x1]
      %v849 = vld [vmem:[%s465 + $0x10] sm:$0xf]
      %v850 = vld [vmem:[%s465 + $0x14] sm:$0x1]
      %v851 = vld [vmem:[%s465 + $0x18] sm:$0xf]
      %v852 = vld [vmem:[%s465 + $0x1c] sm:$0x1]
      %v853 = vld [vmem:[%s465 + $0x20] sm:$0xf]
      %v854 = vld [vmem:[%s465 + $0x24] sm:$0x1]
      %v855 = vld [vmem:[%s465 + $0x28] sm:$0xf]
      %v856 = vld [vmem:[%s465 + $0x2c] sm:$0x1]
      %v857 = vld [vmem:[%s465 + $0x30] sm:$0xf]
      %v858 = vld [vmem:[%s465 + $0x34] sm:$0x1]
      %v859 = vld [vmem:[%s465 + $0x38] sm:$0xf]
      %v860 = vld [vmem:[%s465 + $0x3c] sm:$0x1]
      %v862 = vshrl.u32 %v845, 16
      %v864 = vrot.slane %v862, 4
      %v865 = vshll.u32 %v845, 16
      %v867 = vrot.slane %v865, 5
      %v868 = vor.u32 %v864, %v867
      %v869 = vrot.slane %v868, 4
      %v871 = vshll.u32 %v846, 16
      %v873 = vrot.slane %v871, 5
      %v874 = vsel %vm550, %v869, %v873
      %v876 = vshrl.u32 %v847, 16
      %v878 = vrot.slane %v876, 4
      %v879 = vshll.u32 %v847, 16
      %v881 = vrot.slane %v879, 5
      %v882 = vor.u32 %v878, %v881
      %v883 = vrot.slane %v882, 4
      %v885 = vshll.u32 %v848, 16
      %v887 = vrot.slane %v885, 5
      %v888 = vsel %vm550, %v883, %v887
      %v890 = vshrl.u32 %v849, 16
      %v892 = vrot.slane %v890, 4
      %v893 = vshll.u32 %v849, 16
      %v895 = vrot.slane %v893, 5
      %v896 = vor.u32 %v892, %v895
      %v897 = vrot.slane %v896, 4
      %v899 = vshll.u32 %v850, 16
      %v901 = vrot.slane %v899, 5
      %v902 = vsel %vm550, %v897, %v901
      %v904 = vshrl.u32 %v851, 16
      %v906 = vrot.slane %v904, 4
      %v907 = vshll.u32 %v851, 16
      %v909 = vrot.slane %v907, 5
      %v910 = vor.u32 %v906, %v909
      %v911 = vrot.slane %v910, 4
      %v913 = vshll.u32 %v852, 16
      %v915 = vrot.slane %v913, 5
      %v916 = vsel %vm550, %v911, %v915
      %v918 = vshrl.u32 %v853, 16
      %v920 = vrot.slane %v918, 4
      %v921 = vshll.u32 %v853, 16
      %v923 = vrot.slane %v921, 5
      %v924 = vor.u32 %v920, %v923
      %v925 = vrot.slane %v924, 4
      %v927 = vshll.u32 %v854, 16
      %v929 = vrot.slane %v927, 5
      %v930 = vsel %vm550, %v925, %v929
      %v932 = vshrl.u32 %v855, 16
      %v934 = vrot.slane %v932, 4
      %v935 = vshll.u32 %v855, 16
      %v937 = vrot.slane %v935, 5
      %v938 = vor.u32 %v934, %v937
      %v939 = vrot.slane %v938, 4
      %v941 = vshll.u32 %v856, 16
      %v943 = vrot.slane %v941, 5
      %v944 = vsel %vm550, %v939, %v943
      %v946 = vshrl.u32 %v857, 16
      %v948 = vrot.slane %v946, 4
      %v949 = vshll.u32 %v857, 16
      %v951 = vrot.slane %v949, 5
      %v952 = vor.u32 %v948, %v951
      %v953 = vrot.slane %v952, 4
      %v955 = vshll.u32 %v858, 16
      %v957 = vrot.slane %v955, 5
      %v958 = vsel %vm550, %v953, %v957
      %v960 = vshrl.u32 %v859, 16
      %v962 = vrot.slane %v960, 4
      %v963 = vshll.u32 %v859, 16
      %v965 = vrot.slane %v963, 5
      %v966 = vor.u32 %v962, %v965
      %v967 = vrot.slane %v966, 4
      %v969 = vshll.u32 %v860, 16
      %v971 = vrot.slane %v969, 5
      %v972 = vsel %vm550, %v967, %v971
      %973 = vrot.lane.b32.xlu0 %v874, 32
      %v974 = vpop.permute.xlu0 %973
      %975 = vrot.lane.b32.xlu0 %v888, 32
      %v976 = vpop.permute.xlu0 %975
      %977 = vrot.lane.b32.xlu0 %v902, 32
      %v978 = vpop.permute.xlu0 %977
      %979 = vrot.lane.b32.xlu0 %v916, 32
      %v980 = vpop.permute.xlu0 %979
      %981 = vrot.lane.b32.xlu0 %v930, 32
      %v982 = vpop.permute.xlu0 %981
      %983 = vrot.lane.b32.xlu0 %v944, 32
      %v984 = vpop.permute.xlu0 %983
      %985 = vrot.lane.b32.xlu0 %v958, 32
      %v986 = vpop.permute.xlu0 %985
      %987 = vrot.lane.b32.xlu0 %v972, 32
      %v988 = vpop.permute.xlu0 %987
      %vm997 = vcmask 322816
      %998 = vst.msk [vmem:[#allocation3] sm:$0xf] %vm997, %v974
      %999 = vst.msk [vmem:[#allocation3 + $0x4] sm:$0xf] %vm997, %v976
      %1000 = vst.msk [vmem:[#allocation3 + $0x8] sm:$0xf] %vm997, %v978
      %1001 = vst.msk [vmem:[#allocation3 + $0xc] sm:$0xf] %vm997, %v980
      %1002 = vst.msk [vmem:[#allocation3 + $0x10] sm:$0xf] %vm997, %v982
      %1003 = vst.msk [vmem:[#allocation3 + $0x14] sm:$0xf] %vm997, %v984
      %1004 = vst.msk [vmem:[#allocation3 + $0x18] sm:$0xf] %vm997, %v986
      %1005 = vst.msk [vmem:[#allocation3 + $0x1c] sm:$0xf] %vm997, %v988
      %v1006 = vld [vmem:[%s465] sm:$0xe]
      %v1007 = vld [vmem:[%s465 + $0x4] sm:$0x1]
      %v1008 = vld [vmem:[%s465 + $0x8] sm:$0xe]
      %v1009 = vld [vmem:[%s465 + $0xc] sm:$0x1]
      %v1010 = vld [vmem:[%s465 + $0x10] sm:$0xe]
      %v1011 = vld [vmem:[%s465 + $0x14] sm:$0x1]
      %v1012 = vld [vmem:[%s465 + $0x18] sm:$0xe]
      %v1013 = vld [vmem:[%s465 + $0x1c] sm:$0x1]
      %v1014 = vld [vmem:[%s465 + $0x20] sm:$0xe]
      %v1015 = vld [vmem:[%s465 + $0x24] sm:$0x1]
      %v1016 = vld [vmem:[%s465 + $0x28] sm:$0xe]
      %v1017 = vld [vmem:[%s465 + $0x2c] sm:$0x1]
      %v1018 = vld [vmem:[%s465 + $0x30] sm:$0xe]
      %v1019 = vld [vmem:[%s465 + $0x34] sm:$0x1]
      %v1020 = vld [vmem:[%s465 + $0x38] sm:$0xe]
      %v1021 = vld [vmem:[%s465 + $0x3c] sm:$0x1]
      %v1038 = vrot.slane %v1006, 5
      %v1039 = vrot.slane %v1038, 4
      %v1040 = vrot.slane %v1007, 5
      %v1041 = vsel %vm730, %v1039, %v1040
      %v1042 = vrot.slane %v1008, 5
      %v1043 = vrot.slane %v1042, 4
      %v1044 = vrot.slane %v1009, 5
      %v1045 = vsel %vm730, %v1043, %v1044
      %v1046 = vrot.slane %v1010, 5
      %v1047 = vrot.slane %v1046, 4
      %v1048 = vrot.slane %v1011, 5
      %v1049 = vsel %vm730, %v1047, %v1048
      %v1050 = vrot.slane %v1012, 5
      %v1051 = vrot.slane %v1050, 4
      %v1052 = vrot.slane %v1013, 5
      %v1053 = vsel %vm730, %v1051, %v1052
      %v1054 = vrot.slane %v1014, 5
      %v1055 = vrot.slane %v1054, 4
      %v1056 = vrot.slane %v1015, 5
      %v1057 = vsel %vm730, %v1055, %v1056
      %v1058 = vrot.slane %v1016, 5
      %v1059 = vrot.slane %v1058, 4
      %v1060 = vrot.slane %v1017, 5
      %v1061 = vsel %vm730, %v1059, %v1060
      %v1062 = vrot.slane %v1018, 5
      %v1063 = vrot.slane %v1062, 4
      %v1064 = vrot.slane %v1019, 5
      %v1065 = vsel %vm730, %v1063, %v1064
      %v1066 = vrot.slane %v1020, 5
      %v1067 = vrot.slane %v1066, 4
      %v1068 = vrot.slane %v1021, 5
      %v1069 = vsel %vm730, %v1067, %v1068
      %1070 = vrot.lane.b32.xlu0 %v1041, 40
      %v1071 = vpop.permute.xlu0 %1070
      %1072 = vrot.lane.b32.xlu0 %v1045, 40
      %v1073 = vpop.permute.xlu0 %1072
      %1074 = vrot.lane.b32.xlu0 %v1049, 40
      %v1075 = vpop.permute.xlu0 %1074
      %1076 = vrot.lane.b32.xlu0 %v1053, 40
      %v1077 = vpop.permute.xlu0 %1076
      %1078 = vrot.lane.b32.xlu0 %v1057, 40
      %v1079 = vpop.permute.xlu0 %1078
      %1080 = vrot.lane.b32.xlu0 %v1061, 40
      %v1081 = vpop.permute.xlu0 %1080
      %1082 = vrot.lane.b32.xlu0 %v1065, 40
      %v1083 = vpop.permute.xlu0 %1082
      %1084 = vrot.lane.b32.xlu0 %v1069, 40
      %v1085 = vpop.permute.xlu0 %1084
      %vm1094 = vcmask 388416
      %1095 = vst.msk [vmem:[#allocation3] sm:$0xf] %vm1094, %v1071
      %1096 = vst.msk [vmem:[#allocation3 + $0x4] sm:$0xf] %vm1094, %v1073
      %1097 = vst.msk [vmem:[#allocation3 + $0x8] sm:$0xf] %vm1094, %v1075
      %1098 = vst.msk [vmem:[#allocation3 + $0xc] sm:$0xf] %vm1094, %v1077
      %1099 = vst.msk [vmem:[#allocation3 + $0x10] sm:$0xf] %vm1094, %v1079
      %1100 = vst.msk [vmem:[#allocation3 + $0x14] sm:$0xf] %vm1094, %v1081
      %1101 = vst.msk [vmem:[#allocation3 + $0x18] sm:$0xf] %vm1094, %v1083
      %1102 = vst.msk [vmem:[#allocation3 + $0x1c] sm:$0xf] %vm1094, %v1085
      %s1103 = scalar_lea.vmem [#allocation2], 16
      %v1104 = vld [vmem:[%s1103] sm:$0xf]
      %v1105 = vld [vmem:[%s1103 + $0x8] sm:$0xf]
      %v1106 = vld [vmem:[%s1103 + $0x10] sm:$0xf]
      %v1107 = vld [vmem:[%s1103 + $0x18] sm:$0xf]
      %v1108 = vld [vmem:[%s1103 + $0x20] sm:$0xf]
      %v1109 = vld [vmem:[%s1103 + $0x28] sm:$0xf]
      %v1110 = vld [vmem:[%s1103 + $0x30] sm:$0xf]
      %v1111 = vld [vmem:[%s1103 + $0x38] sm:$0xf]
      %1120 = vrot.lane.b32.xlu0 %v1104, 48
      %v1121 = vpop.permute.xlu0 %1120
      %1122 = vrot.lane.b32.xlu0 %v1105, 48
      %v1123 = vpop.permute.xlu0 %1122
      %1124 = vrot.lane.b32.xlu0 %v1106, 48
      %v1125 = vpop.permute.xlu0 %1124
      %1126 = vrot.lane.b32.xlu0 %v1107, 48
      %v1127 = vpop.permute.xlu0 %1126
      %1128 = vrot.lane.b32.xlu0 %v1108, 48
      %v1129 = vpop.permute.xlu0 %1128
      %1130 = vrot.lane.b32.xlu0 %v1109, 48
      %v1131 = vpop.permute.xlu0 %1130
      %1132 = vrot.lane.b32.xlu0 %v1110, 48
      %v1133 = vpop.permute.xlu0 %1132
      %1134 = vrot.lane.b32.xlu0 %v1111, 48
      %v1135 = vpop.permute.xlu0 %1134
      %vm1144 = vcmask 454016
      %1145 = vst.msk [vmem:[#allocation3] sm:$0xf] %vm1144, %v1121
      %1146 = vst.msk [vmem:[#allocation3 + $0x4] sm:$0xf] %vm1144, %v1123
      %1147 = vst.msk [vmem:[#allocation3 + $0x8] sm:$0xf] %vm1144, %v1125
      %1148 = vst.msk [vmem:[#allocation3 + $0xc] sm:$0xf] %vm1144, %v1127
      %1149 = vst.msk [vmem:[#allocation3 + $0x10] sm:$0xf] %vm1144, %v1129
      %1150 = vst.msk [vmem:[#allocation3 + $0x14] sm:$0xf] %vm1144, %v1131
      %1151 = vst.msk [vmem:[#allocation3 + $0x18] sm:$0xf] %vm1144, %v1133
      %1152 = vst.msk [vmem:[#allocation3 + $0x1c] sm:$0xf] %vm1144, %v1135
      %v1153 = vld [vmem:[%s1103] sm:$0xf]
      %v1154 = vld [vmem:[%s1103 + $0x4] sm:$0x1]
      %v1155 = vld [vmem:[%s1103 + $0x8] sm:$0xf]
      %v1156 = vld [vmem:[%s1103 + $0xc] sm:$0x1]
      %v1157 = vld [vmem:[%s1103 + $0x10] sm:$0xf]
      %v1158 = vld [vmem:[%s1103 + $0x14] sm:$0x1]
      %v1159 = vld [vmem:[%s1103 + $0x18] sm:$0xf]
      %v1160 = vld [vmem:[%s1103 + $0x1c] sm:$0x1]
      %v1161 = vld [vmem:[%s1103 + $0x20] sm:$0xf]
      %v1162 = vld [vmem:[%s1103 + $0x24] sm:$0x1]
      %v1163 = vld [vmem:[%s1103 + $0x28] sm:$0xf]
      %v1164 = vld [vmem:[%s1103 + $0x2c] sm:$0x1]
      %v1165 = vld [vmem:[%s1103 + $0x30] sm:$0xf]
      %v1166 = vld [vmem:[%s1103 + $0x34] sm:$0x1]
      %v1167 = vld [vmem:[%s1103 + $0x38] sm:$0xf]
      %v1168 = vld [vmem:[%s1103 + $0x3c] sm:$0x1]
      %v1170 = vshrl.u32 %v1153, 16
      %v1172 = vrot.slane %v1170, 4
      %v1173 = vshll.u32 %v1153, 16
      %v1175 = vrot.slane %v1173, 5
      %v1176 = vor.u32 %v1172, %v1175
      %v1177 = vrot.slane %v1176, 4
      %v1179 = vshll.u32 %v1154, 16
      %v1181 = vrot.slane %v1179, 5
      %v1182 = vsel %vm550, %v1177, %v1181
      %v1184 = vshrl.u32 %v1155, 16
      %v1186 = vrot.slane %v1184, 4
      %v1187 = vshll.u32 %v1155, 16
      %v1189 = vrot.slane %v1187, 5
      %v1190 = vor.u32 %v1186, %v1189
      %v1191 = vrot.slane %v1190, 4
      %v1193 = vshll.u32 %v1156, 16
      %v1195 = vrot.slane %v1193, 5
      %v1196 = vsel %vm550, %v1191, %v1195
      %v1198 = vshrl.u32 %v1157, 16
      %v1200 = vrot.slane %v1198, 4
      %v1201 = vshll.u32 %v1157, 16
      %v1203 = vrot.slane %v1201, 5
      %v1204 = vor.u32 %v1200, %v1203
      %v1205 = vrot.slane %v1204, 4
      %v1207 = vshll.u32 %v1158, 16
      %v1209 = vrot.slane %v1207, 5
      %v1210 = vsel %vm550, %v1205, %v1209
      %v1212 = vshrl.u32 %v1159, 16
      %v1214 = vrot.slane %v1212, 4
      %v1215 = vshll.u32 %v1159, 16
      %v1217 = vrot.slane %v1215, 5
      %v1218 = vor.u32 %v1214, %v1217
      %v1219 = vrot.slane %v1218, 4
      %v1221 = vshll.u32 %v1160, 16
      %v1223 = vrot.slane %v1221, 5
      %v1224 = vsel %vm550, %v1219, %v1223
      %v1226 = vshrl.u32 %v1161, 16
      %v1228 = vrot.slane %v1226, 4
      %v1229 = vshll.u32 %v1161, 16
      %v1231 = vrot.slane %v1229, 5
      %v1232 = vor.u32 %v1228, %v1231
      %v1233 = vrot.slane %v1232, 4
      %v1235 = vshll.u32 %v1162, 16
      %v1237 = vrot.slane %v1235, 5
      %v1238 = vsel %vm550, %v1233, %v1237
      %v1240 = vshrl.u32 %v1163, 16
      %v1242 = vrot.slane %v1240, 4
      %v1243 = vshll.u32 %v1163, 16
      %v1245 = vrot.slane %v1243, 5
      %v1246 = vor.u32 %v1242, %v1245
      %v1247 = vrot.slane %v1246, 4
      %v1249 = vshll.u32 %v1164, 16
      %v1251 = vrot.slane %v1249, 5
      %v1252 = vsel %vm550, %v1247, %v1251
      %v1254 = vshrl.u32 %v1165, 16
      %v1256 = vrot.slane %v1254, 4
      %v1257 = vshll.u32 %v1165, 16
      %v1259 = vrot.slane %v1257, 5
      %v1260 = vor.u32 %v1256, %v1259
      %v1261 = vrot.slane %v1260, 4
      %v1263 = vshll.u32 %v1166, 16
      %v1265 = vrot.slane %v1263, 5
      %v1266 = vsel %vm550, %v1261, %v1265
      %v1268 = vshrl.u32 %v1167, 16
      %v1270 = vrot.slane %v1268, 4
      %v1271 = vshll.u32 %v1167, 16
      %v1273 = vrot.slane %v1271, 5
      %v1274 = vor.u32 %v1270, %v1273
      %v1275 = vrot.slane %v1274, 4
      %v1277 = vshll.u32 %v1168, 16
      %v1279 = vrot.slane %v1277, 5
      %v1280 = vsel %vm550, %v1275, %v1279
      %1281 = vrot.lane.b32.xlu0 %v1182, 56
      %v1282 = vpop.permute.xlu0 %1281
      %1283 = vrot.lane.b32.xlu0 %v1196, 56
      %v1284 = vpop.permute.xlu0 %1283
      %1285 = vrot.lane.b32.xlu0 %v1210, 56
      %v1286 = vpop.permute.xlu0 %1285
      %1287 = vrot.lane.b32.xlu0 %v1224, 56
      %v1288 = vpop.permute.xlu0 %1287
      %1289 = vrot.lane.b32.xlu0 %v1238, 56
      %v1290 = vpop.permute.xlu0 %1289
      %1291 = vrot.lane.b32.xlu0 %v1252, 56
      %v1292 = vpop.permute.xlu0 %1291
      %1293 = vrot.lane.b32.xlu0 %v1266, 56
      %v1294 = vpop.permute.xlu0 %1293
      %1295 = vrot.lane.b32.xlu0 %v1280, 56
      %v1296 = vpop.permute.xlu0 %1295
      %vm1305 = vcmask 519616
      %1306 = vst.msk [vmem:[#allocation3] sm:$0xf] %vm1305, %v1282
      %1307 = vst.msk [vmem:[#allocation3 + $0x4] sm:$0xf] %vm1305, %v1284
      %1308 = vst.msk [vmem:[#allocation3 + $0x8] sm:$0xf] %vm1305, %v1286
      %1309 = vst.msk [vmem:[#allocation3 + $0xc] sm:$0xf] %vm1305, %v1288
      %1310 = vst.msk [vmem:[#allocation3 + $0x10] sm:$0xf] %vm1305, %v1290
      %1311 = vst.msk [vmem:[#allocation3 + $0x14] sm:$0xf] %vm1305, %v1292
      %1312 = vst.msk [vmem:[#allocation3 + $0x18] sm:$0xf] %vm1305, %v1294
      %1313 = vst.msk [vmem:[#allocation3 + $0x1c] sm:$0xf] %vm1305, %v1296
      %v1314 = vld [vmem:[%s1103] sm:$0xe]
      %v1315 = vld [vmem:[%s1103 + $0x4] sm:$0x1]
      %v1316 = vld [vmem:[%s1103 + $0x8] sm:$0xe]
      %v1317 = vld [vmem:[%s1103 + $0xc] sm:$0x1]
      %v1318 = vld [vmem:[%s1103 + $0x10] sm:$0xe]
      %v1319 = vld [vmem:[%s1103 + $0x14] sm:$0x1]
      %v1320 = vld [vmem:[%s1103 + $0x18] sm:$0xe]
      %v1321 = vld [vmem:[%s1103 + $0x1c] sm:$0x1]
      %v1322 = vld [vmem:[%s1103 + $0x20] sm:$0xe]
      %v1323 = vld [vmem:[%s1103 + $0x24] sm:$0x1]
      %v1324 = vld [vmem:[%s1103 + $0x28] sm:$0xe]
      %v1325 = vld [vmem:[%s1103 + $0x2c] sm:$0x1]
      %v1326 = vld [vmem:[%s1103 + $0x30] sm:$0xe]
      %v1327 = vld [vmem:[%s1103 + $0x34] sm:$0x1]
      %v1328 = vld [vmem:[%s1103 + $0x38] sm:$0xe]
      %v1329 = vld [vmem:[%s1103 + $0x3c] sm:$0x1]
      %v1346 = vrot.slane %v1314, 5
      %v1347 = vrot.slane %v1346, 4
      %v1348 = vrot.slane %v1315, 5
      %v1349 = vsel %vm730, %v1347, %v1348
      %v1350 = vrot.slane %v1316, 5
      %v1351 = vrot.slane %v1350, 4
      %v1352 = vrot.slane %v1317, 5
      %v1353 = vsel %vm730, %v1351, %v1352
      %v1354 = vrot.slane %v1318, 5
      %v1355 = vrot.slane %v1354, 4
      %v1356 = vrot.slane %v1319, 5
      %v1357 = vsel %vm730, %v1355, %v1356
      %v1358 = vrot.slane %v1320, 5
      %v1359 = vrot.slane %v1358, 4
      %v1360 = vrot.slane %v1321, 5
      %v1361 = vsel %vm730, %v1359, %v1360
      %v1362 = vrot.slane %v1322, 5
      %v1363 = vrot.slane %v1362, 4
      %v1364 = vrot.slane %v1323, 5
      %v1365 = vsel %vm730, %v1363, %v1364
      %v1366 = vrot.slane %v1324, 5
      %v1367 = vrot.slane %v1366, 4
      %v1368 = vrot.slane %v1325, 5
      %v1369 = vsel %vm730, %v1367, %v1368
      %v1370 = vrot.slane %v1326, 5
      %v1371 = vrot.slane %v1370, 4
      %v1372 = vrot.slane %v1327, 5
      %v1373 = vsel %vm730, %v1371, %v1372
      %v1374 = vrot.slane %v1328, 5
      %v1375 = vrot.slane %v1374, 4
      %v1376 = vrot.slane %v1329, 5
      %v1377 = vsel %vm730, %v1375, %v1376
      %1378 = vrot.lane.b32.xlu0 %v1349, 64
      %v1379 = vpop.permute.xlu0 %1378
      %1380 = vrot.lane.b32.xlu0 %v1353, 64
      %v1381 = vpop.permute.xlu0 %1380
      %1382 = vrot.lane.b32.xlu0 %v1357, 64
      %v1383 = vpop.permute.xlu0 %1382
      %1384 = vrot.lane.b32.xlu0 %v1361, 64
      %v1385 = vpop.permute.xlu0 %1384
      %1386 = vrot.lane.b32.xlu0 %v1365, 64
      %v1387 = vpop.permute.xlu0 %1386
      %1388 = vrot.lane.b32.xlu0 %v1369, 64
      %v1389 = vpop.permute.xlu0 %1388
      %1390 = vrot.lane.b32.xlu0 %v1373, 64
      %v1391 = vpop.permute.xlu0 %1390
      %1392 = vrot.lane.b32.xlu0 %v1377, 64
      %v1393 = vpop.permute.xlu0 %1392
      %vm1402 = vcmask 585216
      %1403 = vst.msk [vmem:[#allocation3] sm:$0xf] %vm1402, %v1379
      %1404 = vst.msk [vmem:[#allocation3 + $0x4] sm:$0xf] %vm1402, %v1381
      %1405 = vst.msk [vmem:[#allocation3 + $0x8] sm:$0xf] %vm1402, %v1383
      %1406 = vst.msk [vmem:[#allocation3 + $0xc] sm:$0xf] %vm1402, %v1385
      %1407 = vst.msk [vmem:[#allocation3 + $0x10] sm:$0xf] %vm1402, %v1387
      %1408 = vst.msk [vmem:[#allocation3 + $0x14] sm:$0xf] %vm1402, %v1389
      %1409 = vst.msk [vmem:[#allocation3 + $0x18] sm:$0xf] %vm1402, %v1391
      %1410 = vst.msk [vmem:[#allocation3 + $0x1c] sm:$0xf] %vm1402, %v1393
      %v1411 = vld [vmem:[#allocation3] sm:$0xf]
      %v1412 = vld [vmem:[#allocation3 + $0x4] sm:$0xf]
      %v1413 = vld [vmem:[#allocation3 + $0x8] sm:$0xf]
      %v1414 = vld [vmem:[#allocation3 + $0xc] sm:$0xf]
      %v1415 = vld [vmem:[#allocation3 + $0x10] sm:$0xf]
      %v1416 = vld [vmem:[#allocation3 + $0x14] sm:$0xf]
      %v1417 = vld [vmem:[#allocation3 + $0x18] sm:$0xf]
      %v1418 = vld [vmem:[#allocation3 + $0x1c] sm:$0xf]
      %v1419 = vld [vmem:[%s1] sm:$0xf]
      %v1420 = vld [vmem:[%s1 + $0x4] sm:$0xf]
      %v1421 = vld [vmem:[%s1 + $0x8] sm:$0xf]
      %v1422 = vld [vmem:[%s1 + $0xc] sm:$0xf]
      %v1423 = vld [vmem:[%s1 + $0x10] sm:$0xf]
      %v1424 = vld [vmem:[%s1 + $0x14] sm:$0xf]
      %v1425 = vld [vmem:[%s1 + $0x18] sm:$0xf]
      %v1426 = vld [vmem:[%s1 + $0x1c] sm:$0xf]
      %v1427 = vld [vmem:[%s1 + $0x20] sm:$0xf]
      %v1436 = vunpack.c.l.b16 %v1411
      %v1437 = vunpack.c.l.b16 %v1412
      %v1438 = vunpack.c.l.b16 %v1413
      %v1439 = vunpack.c.l.b16 %v1414
      %v1440 = vunpack.c.l.b16 %v1415
      %v1441 = vunpack.c.l.b16 %v1416
      %v1442 = vunpack.c.l.b16 %v1417
      %v1443 = vunpack.c.l.b16 %v1418
      %v1444 = vpack.c.b16 %v1437, %v1436
      %v1445 = vpack.c.b16 %v1439, %v1438
      %v1446 = vpack.c.b16 %v1441, %v1440
      %v1447 = vpack.c.b16 %v1443, %v1442
      %v1457 = vunpack.c.l.b16 %v1419
      %v1458 = vunpack.c.l.b16 %v1420
      %v1459 = vunpack.c.l.b16 %v1421
      %v1460 = vunpack.c.l.b16 %v1422
      %v1461 = vunpack.c.l.b16 %v1423
      %v1462 = vunpack.c.l.b16 %v1424
      %v1463 = vunpack.c.l.b16 %v1425
      %v1464 = vunpack.c.l.b16 %v1426
      %v1465 = vunpack.c.l.b16 %v1427
      %v1466 = vpack.c.b16 %v1458, %v1457
      %v1467 = vpack.c.b16 %v1460, %v1459
      %v1468 = vpack.c.b16 %v1462, %v1461
      %v1469 = vpack.c.b16 %v1464, %v1463
      %v1470 = vpack.c.b16 %v1465, %v1465
      %vm1475 = vcmask 588800
      %v1477 = vsel %vm1475, %v1444, 0
      %v1480 = vsel %vm1475, %v1445, 0
      %v1483 = vsel %vm1475, %v1446, 0
      %v1486 = vsel %vm1475, %v1447, 0
      %vm1488 = vcmask 1043456
      %v1490 = vsel %vm1488, %v1470, 0
      %1492 = vmatprep.subr.bf16.mxu0 0
      %1493 = vmatpush1.bf16.msra.mxu0 %v1466
      %1494 = vmatprep.subr.bf16.mxu0 0
      %1495 = vmatpush1.bf16.msra.mxu0 %v1467
      %1496 = vmatprep.subr.bf16.mxu0 0
      %1497 = vmatpush1.bf16.msra.mxu0 %v1468
      %1498 = vmatprep.subr.bf16.mxu0 0
      %1499 = vmatpush1.bf16.msra.mxu0 %v1469
      %1500 = vmatprep.subr.bf16.mxu0 0
      %1501 = vmatpush1.bf16.msra.mxu0 %v1490
      %1502 = vmatprep.subr.bf16.mxu0 0
      %1503 = vmatpush1.bf16.msra.mxu0 0
      %1504 = vmatprep.subr.bf16.mxu0 0
      %1505 = vmatpush1.bf16.msra.mxu0 0
      %1506 = vmatprep.subr.bf16.mxu0 0
      %1507 = vmatpush1.bf16.msra.mxu0 0
      %1508 = vmatprep.subr.bf16.mxu0 0
      %1509 = vmatpush1.bf16.msra.mxu0 0
      %1510 = vmatprep.subr.bf16.mxu0 0
      %1511 = vmatpush1.bf16.msra.mxu0 0
      %1512 = vmatprep.subr.bf16.mxu0 0
      %1513 = vmatpush1.bf16.msra.mxu0 0
      %1514 = vmatprep.subr.bf16.mxu0 0
      %1515 = vmatpush1.bf16.msra.mxu0 0
      %1516 = vmatprep.subr.bf16.mxu0 0
      %1517 = vmatpush1.bf16.msra.mxu0 0
      %1518 = vmatprep.subr.bf16.mxu0 0
      %1519 = vmatpush1.bf16.msra.mxu0 0
      %1520 = vmatprep.subr.bf16.mxu0 0
      %1521 = vmatpush1.bf16.msra.mxu0 0
      %1522 = vmatprep.subr.bf16.mxu0 0
      %1523 = vmatpush1.bf16.msra.mxu0 0
      %1524 = vmatprep.mubr.bf16.mxu0 0
      %1525 = vmatmul.mubr.bf16.gmra.mrb[0].mxu0 %v1477
      %v1526 = vpop.f32.mrb[0].mxu0
      %v1527 = vadd.f32 0.0, %v1526
      %v1528 = vpop.f32.mrb[0].mxu0
      %v1529 = vpop.f32.mrb[0].mxu0
      %v1530 = vadd.f32 0.0, %v1529
      %v1531 = vpop.f32.mrb[0].mxu0
      %1532 = vmatprep.mubr.bf16.mxu0 0
      %1533 = vmatmul.mubr.bf16.gmra.mrb[0].mxu0 %v1480
      %v1534 = vpop.f32.mrb[0].mxu0
      %v1535 = vadd.f32 0.0, %v1534
      %v1536 = vpop.f32.mrb[0].mxu0
      %v1537 = vpop.f32.mrb[0].mxu0
      %v1538 = vadd.f32 0.0, %v1537
      %v1539 = vpop.f32.mrb[0].mxu0
      %1540 = vmatprep.mubr.bf16.mxu0 0
      %1541 = vmatmul.mubr.bf16.gmra.mrb[0].mxu0 %v1483
      %v1542 = vpop.f32.mrb[0].mxu0
      %v1543 = vadd.f32 0.0, %v1542
      %v1544 = vpop.f32.mrb[0].mxu0
      %v1545 = vpop.f32.mrb[0].mxu0
      %v1546 = vadd.f32 0.0, %v1545
      %v1547 = vpop.f32.mrb[0].mxu0
      %1548 = vmatprep.mubr.bf16.mxu0 0
      %1549 = vmatmul.mubr.bf16.gmra.mrb[0].mxu0 %v1486
      %v1550 = vpop.f32.mrb[0].mxu0
      %v1551 = vadd.f32 0.0, %v1550
      %v1552 = vpop.f32.mrb[0].mxu0
      %v1553 = vpop.f32.mrb[0].mxu0
      %v1554 = vadd.f32 0.0, %v1553
      %v1555 = vpop.f32.mrb[0].mxu0
      %1556 = vdwg.mxu0
      %vm1557 = vcmask 64512
      %v1558 = vsel %vm1557, %v1527, 0.0
      %v1559 = vsel %vm1557, %v1530, 0.0
      %v1560 = vadd.f32 %v1558, %v1559
      %v1561 = vsel %vm1557, %v1535, 0.0
      %v1562 = vadd.f32 %v1560, %v1561
      %v1563 = vsel %vm1557, %v1538, 0.0
      %v1564 = vadd.f32 %v1562, %v1563
      %v1565 = vsel %vm1557, %v1543, 0.0
      %v1566 = vadd.f32 %v1564, %v1565
      %v1567 = vsel %vm1557, %v1546, 0.0
      %v1568 = vadd.f32 %v1566, %v1567
      %v1569 = vsel %vm1557, %v1551, 0.0
      %v1570 = vadd.f32 %v1568, %v1569
      %v1571 = vsel %vm1557, %v1554, 0.0
      %v1572 = vadd.f32 %v1570, %v1571
      %v1573 = vrot.slane %v1572, 4
      %v1574 = vadd.f32 %v1572, %v1573
      %v1575 = vrot.slane %v1574, 2
      %v1576 = vadd.f32 %v1574, %v1575
      %v1577 = vrot.slane %v1576, 1
      %v1578 = vadd.f32 %v1576, %v1577
      %v1579 = vadd.f32 %v1578, 0.0
      %v1580 = vmul.f32 %v1527, %v1527
      %v1581 = vmul.f32 %v1530, %v1530
      %v1582 = vmul.f32 %v1535, %v1535
      %v1583 = vmul.f32 %v1538, %v1538
      %v1584 = vmul.f32 %v1543, %v1543
      %v1585 = vmul.f32 %v1546, %v1546
      %v1586 = vmul.f32 %v1551, %v1551
      %v1587 = vmul.f32 %v1554, %v1554
      %v1588 = vsel %vm1557, %v1580, 0.0
      %v1589 = vsel %vm1557, %v1581, 0.0
      %v1590 = vadd.f32 %v1588, %v1589
      %v1591 = vsel %vm1557, %v1582, 0.0
      %v1592 = vadd.f32 %v1590, %v1591
      %v1593 = vsel %vm1557, %v1583, 0.0
      %v1594 = vadd.f32 %v1592, %v1593
      %v1595 = vsel %vm1557, %v1584, 0.0
      %v1596 = vadd.f32 %v1594, %v1595
      %v1597 = vsel %vm1557, %v1585, 0.0
      %v1598 = vadd.f32 %v1596, %v1597
      %v1599 = vsel %vm1557, %v1586, 0.0
      %v1600 = vadd.f32 %v1598, %v1599
      %v1601 = vsel %vm1557, %v1587, 0.0
      %v1602 = vadd.f32 %v1600, %v1601
      %v1603 = vrot.slane %v1602, 4
      %v1604 = vadd.f32 %v1602, %v1603
      %v1605 = vrot.slane %v1604, 2
      %v1606 = vadd.f32 %v1604, %v1605
      %v1607 = vrot.slane %v1606, 1
      %v1608 = vadd.f32 %v1606, %v1607
      %v1609 = vadd.f32 %v1608, 0.0
      %1610 = vxpose.xlu0.b32.start [1/16] %v1527, 128
      %1611 = vxpose.xlu0.b32.cont [2/16] %v1530, 128
      %1612 = vxpose.xlu0.b32.cont [3/16] %v1535, 128
      %1613 = vxpose.xlu0.b32.cont [4/16] %v1538, 128
      %1614 = vxpose.xlu0.b32.cont [5/16] %v1543, 128
      %1615 = vxpose.xlu0.b32.cont [6/16] %v1546, 128
      %1616 = vxpose.xlu0.b32.cont [7/16] %v1551, 128
      %1617 = vxpose.xlu0.b32.cont [8/16] %v1554, 128
      %1618 = vxpose.xlu0.b32.cont [9/16] 0.0, 128
      %1619 = vxpose.xlu0.b32.cont [10/16] 0.0, 128
      %1620 = vxpose.xlu0.b32.cont [11/16] 0.0, 128
      %1621 = vxpose.xlu0.b32.cont [12/16] 0.0, 128
      %1622 = vxpose.xlu0.b32.cont [13/16] 0.0, 128
      %1623 = vxpose.xlu0.b32.cont [14/16] 0.0, 128
      %1624 = vxpose.xlu0.b32.cont [15/16] 0.0, 128
      %1625 = vxpose.xlu0.b32.end [16/16] 0.0, 128
      %v1626 = vpop.trf.xlu0
      %v1627 = vpop.trf.xlu0
      %v1628 = vpop.trf.xlu0
      %v1629 = vpop.trf.xlu0
      %v1630 = vpop.trf.xlu0
      %v1631 = vpop.trf.xlu0
      %v1632 = vpop.trf.xlu0
      %v1633 = vpop.trf.xlu0
      %v1634 = vpop.trf.xlu0
      %v1635 = vpop.trf.xlu0
      %v1636 = vpop.trf.xlu0
      %v1637 = vpop.trf.xlu0
      %v1638 = vpop.trf.xlu0
      %v1639 = vpop.trf.xlu0
      %v1640 = vpop.trf.xlu0
      %v1641 = vpop.trf.xlu0
      %v1642 = vpack.c.bf16 %v1626, %v1626
      %vm1643 = vcmask 519168
      %1644 = vst.msk [vmem:[%s226] sm:$0xf] %vm1643, %v1642
      %1645 = vst.msk [vmem:[%s230] sm:$0x1] %vm236, %v1579
      %1646 = vst.msk [vmem:[%s230 + $0x1] sm:$0x1] %vm236, %v1609
      %p1647 = scmp.lt.s32.totalorder %s17, 1
      %s1648 = scalar_select %p1647, %s17, 1
      %s1649 = smul.addr %s1648, 4
      %s1650 = scalar_lea.vmem %s4, %s1649
      %p1651 = scmp.lt.s32.totalorder %s17, 1
      %s1652 = scalar_select %p1651, %s17, 1
      %s1653 = smul.addr %s1652, 2
      %s1654 = scalar_lea.vmem %s5, %s1653
      // Predicated region
      $region37: #{cifar_residual_block.4} parent=35 // pred_check
        %p1655 = pneg %p124
      $region38: #{cifar_residual_block.4} parent=35 // pred_check_branch
        %1657 = sbr.rel (%p1655) target = $region40
      $region39: #{cifar_residual_block.4} parent=35 // pred_region
        _
      $region40: #{cifar_residual_block.4} parent=35 // pred_fallthru
        _
      // Predicated region
      $region41: #{cifar_residual_block.4} parent=35 // pred_check
        %p1658 = pneg %p150
      $region42: #{cifar_residual_block.4} parent=35 // pred_check_branch
        %1660 = sbr.rel (%p1658) target = $region44
      $region43: #{cifar_residual_block.4} parent=35 // pred_region
        _
      $region44: #{cifar_residual_block.4} parent=35 // pred_fallthru
        _
    $region36: #{cifar_residual_block.4} parent=5 // pred_fallthru
      _
    %p1661 = scmp.le.s32.totalorder 2, %s12
    // Predicated region
    $region45: #{cifar_residual_block.4} parent=5 // pred_check
      %p1662 = pneg %p1661
    $region46: #{cifar_residual_block.4} parent=5 // pred_check_branch
      %1664 = sbr.rel (%p1662) target = $region48
    $region47: #{cifar_residual_block.4} parent=5 // pred_region
      %s1665 = ssub.s32 %s12, 2
      // Predicated region
      $region49: #{cifar_residual_block.4} parent=47 // pred_check
        %p1666 = pneg %p130
      $region50: #{cifar_residual_block.4} parent=47 // pred_check_branch
        %1668 = sbr.rel (%p1666) target = $region52
      $region51: #{cifar_residual_block.4} parent=47 // pred_region
        %p1669 = scmp.lt.s32.totalorder %s18, 1
        %s1670 = scalar_select %p1669, %s18, 1
        %s1671 = smul.addr %s1670, 4
        %s1672 = scalar_lea.vmem %s4, %s1671
      $region52: #{cifar_residual_block.4} parent=47 // pred_fallthru
        _
      // Predicated region
      $region53: #{cifar_residual_block.4} parent=47 // pred_check
        %p1673 = pneg %p156
      $region54: #{cifar_residual_block.4} parent=47 // pred_check_branch
        %1675 = sbr.rel (%p1673) target = $region56
      $region55: #{cifar_residual_block.4} parent=47 // pred_region
        %p1676 = scmp.lt.s32.totalorder %s18, 1
        %s1677 = scalar_select %p1676, %s18, 1
        %s1678 = smul.addr %s1677, 2
        %s1679 = scalar_lea.vmem %s5, %s1678
      $region56: #{cifar_residual_block.4} parent=47 // pred_fallthru
        _
    $region48: #{cifar_residual_block.4} parent=5 // pred_fallthru
      _
  $region6: #{cifar_residual_block.4} parent=0 // loop_footer
    %s16 = sadd.s32 1, %s12
  $region7: #{cifar_residual_block.4} parent=0 // loop_footer_branch
    %11 = sbr.rel target = $region3
  $region8: #{cifar_residual_block.4} parent=0 // loop_exit
    _

</llo_original>
